<compile_context>
chip_gen: v7x
topology: tpu7x:2x2x1
jax: 0.10.0
libtpu: 0.0.40
codegen_flags: <defaults>
</compile_context>

<pallas_src>
import functools

import numpy as np
import jax
import jax.numpy as jnp
from jax.experimental import pallas as pl
from jax.experimental.pallas import tpu as pltpu

HIDDEN = 36                       # conv output channels
KSIZE = 3                         # conv kernel size
POOL = 3                          # maxpool window
STRIDE = 2                        # maxpool stride
IMG = 32                          # spatial size implied by the torch fc2 dims
C1 = IMG - KSIZE + 1              # 30   conv output spatial
C2 = (C1 - POOL) // STRIDE + 1    # 14   pooled spatial
LC = C1 * HIDDEN                  # 1080 conv-row width   (col = w*36 + oc)
NW = C1 - POOL + 1                # 28   W running-max positions
WIN = NW * HIDDEN                 # 1008 pooled-row width (col = w'*36 + oc)
FC_IN = C2 * C2 * HIDDEN          # 7056


def fused_kernel(x_ref, wb_ref, bc_ref, w2_ref, b2_ref, o_ref, y_ref, *, bt):
    """conv3x3 -> (+bias, ReLU) -> maxpool3x3/s2 -> flatten -> fc2 for `bt` images.

    x_ref : (30*bt, 3*128)  H-im2col LHS, rows h-major/b-minor (row = h*bt + b),
                            cols = kh*128 + w*cin_p + c            (bf16)
    wb_ref: (3*128, 1080)   merged banded conv weight               (bf16)
    bc_ref: (1, 1008)       conv bias tiled over w'                 (f32)
    w2_ref: (14, nc, 1008)  fc2 weight per pooled row hp, K on the lane axis;
                            odd-w' columns are zero                 (bf16)
    b2_ref: (1, nc)         fc2 bias                                (f32)
    o_ref : (bt, nc)        logits                                  (f32)
    y_ref : VMEM scratch (30*bt, 1080) f32: raw conv accumulation (no bias/ReLU)
    """
    nc = o_ref.shape[1]

    # ---- convolution: ONE bf16 MXU matmul, M = 30*bt, K = 384, N = 1080 ----
    y_ref[...] = jnp.dot(x_ref[...], wb_ref[...],
                         preferred_element_type=jnp.float32)

    bias = bc_ref[...]                                            # (1, 1008) f32

    # ---- maxpool + bias + ReLU + fc2, fused over the 14 pooled rows ----
    def body(hp, acc):
        # H pool: three contiguous, sublane-aligned (bt, 1080) slabs
        r0 = pl.multiple_of(STRIDE * bt * hp, 8)
        r1 = pl.multiple_of(r0 + bt, 8)
        r2 = pl.multiple_of(r1 + bt, 8)
        th = jnp.maximum(jnp.maximum(y_ref[pl.ds(r0, bt), :],
                                     y_ref[pl.ds(r1, bt), :]),
                         y_ref[pl.ds(r2, bt), :])                 # (bt, 1080)
        # W running max via two lane-shifted maxima (the stride-2 subsample is
        # folded into zero columns of w2), then bias + ReLU on the pooled row
        # (exact: bias is per-oc, constant over the window; ReLU is monotonic).
        pw = jnp.maximum(jnp.maximum(th[:, 0:WIN],
                                     th[:, HIDDEN:HIDDEN + WIN]),
                         th[:, 2 * HIDDEN:2 * HIDDEN + WIN])      # (bt, 1008)
        pw = jnp.maximum(pw + bias, 0.0).astype(jnp.bfloat16)
        # fc2 contribution: contract pw's last dim with w2[hp]'s last dim
        contrib = jax.lax.dot_general(pw, w2_ref[hp],
                                      (((1,), (1,)), ((), ())),
                                      preferred_element_type=jnp.float32)
        return acc + contrib                                      # (bt, nc) f32

    acc = jax.lax.fori_loop(0, C2, body, jnp.zeros((bt, nc), jnp.float32))
    o_ref[...] = acc + b2_ref[...]


def prepare_params(w_conv, b_conv, w_fc2, b_fc2):
    """One-time (outside jit) repacking of the torch-layout parameters."""
    wcv = np.asarray(w_conv, np.float32)                  # (36, Cin, 3, 3) OIHW
    cin = wcv.shape[1]
    cin_p = -(-cin // 4) * 4                              # pad so IMG*cin_p % 128 == 0
    cols = IMG * cin_p
    nc = np.asarray(w_fc2).shape[0]

    # Merged banded conv weight for a single matmul:
    #   wb[kh*cols + (w+kw)*cin_p + c, w*36 + oc] = w_conv[oc, c, kh, kw]
    wb = np.zeros((KSIZE * cols, LC), np.float32)
    for kh in range(KSIZE):
        for kw in range(KSIZE):
            blk = wcv[:, :, kh, kw].T                     # (Cin, 36)
            for w in range(C1):
                r0 = kh * cols + (w + kw) * cin_p
                wb[r0:r0 + cin, w * HIDDEN:(w + 1) * HIDDEN] = blk

    # conv bias tiled over the 28 W running-max positions
    bc = np.tile(np.asarray(b_conv, np.float32), NW)[None, :]          # (1, 1008)

    # fc2 weight per pooled row hp, K lane-dense: (hp, k, w'*36+oc); the torch
    # flatten order is (oc, hp, wp) and only even w' (= 2*wp) columns are nonzero
    # (this folds the stride-2 W subsample into the matmul, exactly).
    fcw = np.asarray(w_fc2, np.float32).reshape(nc, HIDDEN, C2, C2)    # (k, oc, hp, wp)
    w2p = np.zeros((C2, nc, NW, HIDDEN), np.float32)                   # (hp, k, w', oc)
    w2p[:, :, 0::2, :] = fcw.transpose(2, 0, 3, 1)                     # w' = 2*wp
    w2p = w2p.reshape(C2, nc, WIN)                                     # (14, nc, 1008)

    b2 = np.asarray(b_fc2, np.float32)[None, :]                        # (1, nc)
    return (jnp.asarray(wb, jnp.bfloat16), jnp.asarray(bc, jnp.float32),
            jnp.asarray(w2p, jnp.bfloat16), jnp.asarray(b2, jnp.float32))


def _pick_bt(bp8):
    """Images per grid step: multiple of 8; keep >=2 grid steps when possible so
    both v7x TensorCores get work; grow the tile for bigger batches so single-TC
    v5e/v6e amortize the per-step overhead with large MXU M passes."""
    if bp8 <= 16:
        return 8
    bt = (bp8 // 2) // 8 * 8
    return int(max(8, min(32, bt)))


@jax.jit
def model_forward(x_nchw, wb, bc, w2p, b2):
    B, cin, H, W = x_nchw.shape
    assert (H, W) == (IMG, IMG), "fc2 dims in the torch module assume 32x32 input"
    cin_p = wb.shape[0] // (KSIZE * IMG)
    k3 = KSIZE * IMG * cin_p
    nc = w2p.shape[1]

    # layout plumbing: NCHW -> NHWC, zero-pad channels to a 128-lane row block, bf16
    x = jnp.transpose(x_nchw, (0, 2, 3, 1))
    if cin_p != cin:
        x = jnp.pad(x, ((0, 0), (0, 0), (0, 0), (0, cin_p - cin)))
    x = x.astype(jnp.bfloat16).reshape(B, IMG, IMG * cin_p)

    # batch tiling: always pad to a multiple of 8 so every tile is sublane-aligned
    bp8 = ((B + 7) // 8) * 8
    bt = _pick_bt(bp8)
    bp = ((bp8 + bt - 1) // bt) * bt
    if bp != B:
        x = jnp.pad(x, ((0, bp - B), (0, 0), (0, 0)))

    # H-only im2col (3 shifted row slabs concatenated on lanes), then reorder each
    # bt-image tile to h-major / b-minor rows (row within tile = h*bt + b).
    x3 = jnp.concatenate([x[:, kh:kh + C1, :] for kh in range(KSIZE)], axis=-1)
    x3 = x3.reshape(bp // bt, bt, C1, k3)
    x3 = jnp.transpose(x3, (0, 2, 1, 3)).reshape(bp * C1, k3)

    out = pl.pallas_call(
        functools.partial(fused_kernel, bt=bt),
        out_shape=jax.ShapeDtypeStruct((bp, nc), jnp.float32),
        grid=(bp // bt,),
        in_specs=[
            pl.BlockSpec((C1 * bt, k3), lambda i: (i, 0)),
            pl.BlockSpec((k3, LC), lambda i: (0, 0)),
            pl.BlockSpec((1, WIN), lambda i: (0, 0)),
            pl.BlockSpec((C2, nc, WIN), lambda i: (0, 0, 0)),
            pl.BlockSpec((1, nc), lambda i: (0, 0)),
        ],
        out_specs=pl.BlockSpec((bt, nc), lambda i: (i, 0)),
        scratch_shapes=[pltpu.VMEM((C1 * bt, LC), jnp.float32)],
        compiler_params=pltpu.CompilerParams(
            dimension_semantics=("parallel",),
            vmem_limit_bytes=32 * 1024 * 1024),
    )(x3, wb, bc, w2p, b2)
    return out[:B]


def reference_forward(x_nchw, w_conv, b_conv, w_fc2, b_fc2):
    """Pure-JAX reference matching the torch forward (NCHW, torch-layout params)."""
    y = jax.lax.conv_general_dilated(
        x_nchw, w_conv, window_strides=(1, 1), padding="VALID",
        dimension_numbers=("NCHW", "OIHW", "NCHW"))
    y = y + b_conv.reshape(1, -1, 1, 1)
    y = jnp.maximum(y, 0.0)
    y = jax.lax.reduce_window(y, -jnp.inf, jax.lax.max,
                              window_dimensions=(1, 1, POOL, POOL),
                              window_strides=(1, 1, STRIDE, STRIDE),
                              padding="VALID")
    y = jnp.maximum(y, 0.0)
    yf = y.reshape(y.shape[0], -1)
    return yf @ w_fc2.T + b_fc2


if __name__ == "__main__":
    B, CIN, NC = 16, 3, 10      # batch, num_channels, num_classes (spatial must be 32)
    key = jax.random.PRNGKey(0)
    kx, kw1, kb1, kw2, kb2 = jax.random.split(key, 5)

    x = jax.random.normal(kx, (B, CIN, IMG, IMG), jnp.float32)

    # conv1: xavier-uniform weight (torch OIHW layout), torch-default uniform bias
    fan_in1 = CIN * KSIZE * KSIZE
    fan_out1 = HIDDEN * KSIZE * KSIZE
    lim1 = (6.0 / (fan_in1 + fan_out1)) ** 0.5
    w_conv = jax.random.uniform(kw1, (HIDDEN, CIN, KSIZE, KSIZE), jnp.float32, -lim1, lim1)
    b_conv = jax.random.uniform(kb1, (HIDDEN,), jnp.float32,
                                -1.0 / fan_in1 ** 0.5, 1.0 / fan_in1 ** 0.5)

    # fc2: xavier-uniform weight (torch (K, 14*14*36) layout), torch-default bias
    lim2 = (6.0 / (FC_IN + NC)) ** 0.5
    w_fc2 = jax.random.uniform(kw2, (NC, FC_IN), jnp.float32, -lim2, lim2)
    b_fc2 = jax.random.uniform(kb2, (NC,), jnp.float32,
                               -1.0 / FC_IN ** 0.5, 1.0 / FC_IN ** 0.5)

    params = prepare_params(w_conv, b_conv, w_fc2, b_fc2)   # one-time repack, outside jit
    out = jax.block_until_ready(model_forward(x, *params))
    assert out.shape == (B, NC)

    ref = reference_forward(x, w_conv, b_conv, w_fc2, b_fc2)
    # bf16 matmul operands with f32 accumulation: validate at a bf16-appropriate tolerance
    if not jnp.allclose(out, ref, atol=2e-2, rtol=2e-2):
        raise AssertionError("Pallas output does not match JAX reference")

    print("KERNEL_OK")
</pallas_src>

<mosaic_0001>
module attributes {stable_mosaic.version = 11 : i64} {
  func.func @fused_kernel(%arg0: i32, %arg1: memref<240x384xbf16, #tpu.memory_space<vmem>>, %arg2: memref<384x1080xbf16, #tpu.memory_space<vmem>>, %arg3: memref<1x1008xf32, #tpu.memory_space<vmem>>, %arg4: memref<14x10x1008xbf16, #tpu.memory_space<vmem>>, %arg5: memref<1x10xf32, #tpu.memory_space<vmem>>, %arg6: memref<8x10xf32, #tpu.memory_space<vmem>>, %arg7: memref<240x1080xf32, #tpu.memory_space<vmem>>) attributes {dimension_semantics = [#tpu.dimension_semantics<parallel>], iteration_bounds = array<i64: 2>, scalar_prefetch = 0 : i64, scratch_operands = 1 : i64, tpu.core_type = #tpu.core_type<tc>, window_params = [{transform_indices = @transform_0, window_bounds = array<i64: 240, 384>}, {pipeline_mode = #tpu.pipeline_mode<synchronous>, transform_indices = @transform_1, window_bounds = array<i64: 384, 1080>}, {pipeline_mode = #tpu.pipeline_mode<synchronous>, transform_indices = @transform_2, window_bounds = array<i64: 1, 1008>}, {pipeline_mode = #tpu.pipeline_mode<synchronous>, transform_indices = @transform_3, window_bounds = array<i64: 14, 10, 1008>}, {pipeline_mode = #tpu.pipeline_mode<synchronous>, transform_indices = @transform_4, window_bounds = array<i64: 1, 10>}, {transform_indices = @transform_5, window_bounds = array<i64: 8, 10>}]} {
    %c0 = arith.constant 0 : index
    %c0_0 = arith.constant 0 : index
    %0 = vector.load %arg1[%c0, %c0_0] : memref<240x384xbf16, #tpu.memory_space<vmem>>, vector<240x384xbf16>
    %c0_1 = arith.constant 0 : index
    %c0_2 = arith.constant 0 : index
    %1 = vector.load %arg2[%c0_1, %c0_2] : memref<384x1080xbf16, #tpu.memory_space<vmem>>, vector<384x1080xbf16>
    %cst = arith.constant dense<0.000000e+00> : vector<240x1080xf32>
    %2 = tpu.matmul %0, %1, %cst {dimension_numbers = #tpu.dot_dimension_numbers<[1], [0], [0], [1], [0, 0, 1, 1], [], []>} : vector<240x384xbf16>, vector<384x1080xbf16>, vector<240x1080xf32> -> vector<240x1080xf32>
    %c0_3 = arith.constant 0 : index
    %c0_4 = arith.constant 0 : index
    %3 = vector.load %arg7[%c0_3, %c0_4] : memref<240x1080xf32, #tpu.memory_space<vmem>>, vector<240x1080xf32>
    tpu.vector_store %arg7[%c0_3, %c0_4], %2 {strides = array<i32>} : memref<240x1080xf32, #tpu.memory_space<vmem>>, vector<240x1080xf32>,
    %c0_5 = arith.constant 0 : index
    %c0_6 = arith.constant 0 : index
    %4 = vector.load %arg3[%c0_5, %c0_6] : memref<1x1008xf32, #tpu.memory_space<vmem>>, vector<1x1008xf32>
    %cst_7 = arith.constant 0.000000e+00 : f32
    %5 = vector.broadcast %cst_7 : f32 to vector<8x10xf32>
    %c0_i32 = arith.constant 0 : i32
    %c14_i32 = arith.constant 14 : i32
    %6 = arith.addi %c0_i32, %c14_i32 : i32
    %c1_i32 = arith.constant 1 : i32
    %7 = scf.for %arg8 = %c0_i32 to %6 step %c1_i32 iter_args(%arg9 = %5) -> (vector<8x10xf32>)  : i32 {
      %c16_i32 = arith.constant 16 : i32
      %12 = arith.muli %c16_i32, %arg8 : i32
      %13 = tpu.assume_multiple %12, 8 : i32
      %c8_i32 = arith.constant 8 : i32
      %14 = arith.addi %13, %c8_i32 : i32
      %15 = tpu.assume_multiple %14, 8 : i32
      %c8_i32_13 = arith.constant 8 : i32
      %16 = arith.addi %15, %c8_i32_13 : i32
      %17 = tpu.assume_multiple %16, 8 : i32
      %18 = arith.index_cast %13 : i32 to index
      %c0_14 = arith.constant 0 : index
      %19 = vector.load %arg7[%18, %c0_14] : memref<240x1080xf32, #tpu.memory_space<vmem>>, vector<8x1080xf32>
      %20 = arith.index_cast %15 : i32 to index
      %c0_15 = arith.constant 0 : index
      %21 = vector.load %arg7[%20, %c0_15] : memref<240x1080xf32, #tpu.memory_space<vmem>>, vector<8x1080xf32>
      %22 = arith.maximumf %19, %21 : vector<8x1080xf32>
      %23 = arith.index_cast %17 : i32 to index
      %c0_16 = arith.constant 0 : index
      %24 = vector.load %arg7[%23, %c0_16] : memref<240x1080xf32, #tpu.memory_space<vmem>>, vector<8x1080xf32>
      %25 = arith.maximumf %22, %24 : vector<8x1080xf32>
      %26 = vector.extract_strided_slice %25 {offsets = [0, 0], sizes = [8, 1008], strides = [1, 1]} : vector<8x1080xf32> to vector<8x1008xf32>
      %27 = vector.extract_strided_slice %25 {offsets = [0, 36], sizes = [8, 1008], strides = [1, 1]} : vector<8x1080xf32> to vector<8x1008xf32>
      %28 = arith.maximumf %26, %27 : vector<8x1008xf32>
      %29 = vector.extract_strided_slice %25 {offsets = [0, 72], sizes = [8, 1008], strides = [1, 1]} : vector<8x1080xf32> to vector<8x1008xf32>
      %30 = arith.maximumf %28, %29 : vector<8x1008xf32>
      %31 = vector.broadcast %4 : vector<1x1008xf32> to vector<8x1008xf32>
      %32 = arith.addf %30, %31 : vector<8x1008xf32>
      %cst_17 = arith.constant 0.000000e+00 : f32
      %33 = vector.broadcast %cst_17 : f32 to vector<8x1008xf32>
      %34 = arith.maximumf %32, %33 : vector<8x1008xf32>
      %35 = arith.truncf %34 : vector<8x1008xf32> to vector<8x1008xbf16>
      %36 = arith.index_cast %arg8 : i32 to index
      %c0_18 = arith.constant 0 : index
      %c0_19 = arith.constant 0 : index
      %37 = vector.load %arg4[%36, %c0_18, %c0_19] : memref<14x10x1008xbf16, #tpu.memory_space<vmem>>, vector<1x10x1008xbf16>
      %38 = vector.shape_cast %37 : vector<1x10x1008xbf16> to vector<10x1008xbf16>
      %cst_20 = arith.constant dense<0.000000e+00> : vector<8x10xf32>
      %39 = tpu.matmul %35, %38, %cst_20 {dimension_numbers = #tpu.dot_dimension_numbers<[1], [1], [0], [0], [0, 0, 1, 0], [], []>} : vector<8x1008xbf16>, vector<10x1008xbf16>, vector<8x10xf32> -> vector<8x10xf32>
      %40 = arith.addf %arg9, %39 : vector<8x10xf32>
      scf.yield %40 : vector<8x10xf32>
    }
    %c14_i32_8 = arith.constant 14 : i32
    %c0_9 = arith.constant 0 : index
    %c0_10 = arith.constant 0 : index
    %8 = vector.load %arg5[%c0_9, %c0_10] : memref<1x10xf32, #tpu.memory_space<vmem>>, vector<1x10xf32>
    %9 = vector.broadcast %8 : vector<1x10xf32> to vector<8x10xf32>
    %10 = arith.addf %7, %9 : vector<8x10xf32>
    %c0_11 = arith.constant 0 : index
    %c0_12 = arith.constant 0 : index
    %11 = vector.load %arg6[%c0_11, %c0_12] : memref<8x10xf32, #tpu.memory_space<vmem>>, vector<8x10xf32>
    tpu.vector_store %arg6[%c0_11, %c0_12], %10 {strides = array<i32>} : memref<8x10xf32, #tpu.memory_space<vmem>>, vector<8x10xf32>,
    return
  }
  func.func @transform_0(%arg0: i32) -> (i32, i32) {
    %c0_i32 = arith.constant 0 : i32
    %c0_i32_0 = arith.constant 0 : i32
    return %arg0, %c0_i32 : i32, i32
  }
  func.func @transform_1(%arg0: i32) -> (i32, i32) {
    %c0_i32 = arith.constant 0 : i32
    %c0_i32_0 = arith.constant 0 : i32
    %c0_i32_1 = arith.constant 0 : i32
    return %c0_i32, %c0_i32_0 : i32, i32
  }
  func.func @transform_2(%arg0: i32) -> (i32, i32) {
    %c0_i32 = arith.constant 0 : i32
    %c0_i32_0 = arith.constant 0 : i32
    %c0_i32_1 = arith.constant 0 : i32
    return %c0_i32, %c0_i32_0 : i32, i32
  }
  func.func @transform_3(%arg0: i32) -> (i32, i32, i32) {
    %c0_i32 = arith.constant 0 : i32
    %c0_i32_0 = arith.constant 0 : i32
    %c0_i32_1 = arith.constant 0 : i32
    %c0_i32_2 = arith.constant 0 : i32
    return %c0_i32, %c0_i32_0, %c0_i32_1 : i32, i32, i32
  }
  func.func @transform_4(%arg0: i32) -> (i32, i32) {
    %c0_i32 = arith.constant 0 : i32
    %c0_i32_0 = arith.constant 0 : i32
    %c0_i32_1 = arith.constant 0 : i32
    return %c0_i32, %c0_i32_0 : i32, i32
  }
  func.func @transform_5(%arg0: i32) -> (i32, i32) {
    %c0_i32 = arith.constant 0 : i32
    %c0_i32_0 = arith.constant 0 : i32
    return %arg0, %c0_i32 : i32, i32
  }
}

</mosaic_0001>

<llo_original>
// kernel: model_forward.1
$region0: #{model_forward.1}
  #allocation0 [shape = 'u32[]', space=smem, size = 0x4, offset = 0x4, fixed_abs, tag = 'smem constant byte address 0x4 - core index']
  #allocation1 [shape = 'u32[144,128]{1,0:T(1,128)}', space=vmem, size = 0x12000, scoped, tag = 'internal scratch']
  #allocation2 [shape = 'f32[240,1080]{1,0:T(8,128)}', space=vmem, size = 0x10e000, scoped, tag = 'scratch operand']
  %s0 = inlined_call_operand.vmem [shape: bf16[480,384], index: 0, kind: input, shape index: {}]
  %s1 = inlined_call_operand.vmem [shape: bf16[384,1080], index: 1, kind: input, shape index: {}]
  %s2 = inlined_call_operand.vmem [shape: f32[1,1008], index: 2, kind: input, shape index: {}]
  %s3 = inlined_call_operand.vmem [shape: bf16[14,10,1008], index: 3, kind: input, shape index: {}]
  %s4 = inlined_call_operand.vmem [shape: f32[1,10], index: 4, kind: input, shape index: {}]
  %s5 = inlined_call_operand.hbm [shape: f32[16,10], index: 5, kind: output, shape index: {}]
  %s6 = sld [smem:[#allocation0]]
  $region60: #{model_forward.1} parent=0
    _
  %s8 = ssub.s32 1, %s6
  %s9 = scalar_select 0, %s8, %s6
  $region1: #{model_forward.1} parent=0
    #allocation3 [shape = 'u8[8192]{0}', space=vmem, size = 0x2000, scoped, tag = 'output window, operand 0']
    #allocation4 [shape = 's32[2]{0}', space=sflag, size = 0x8, scoped, tag = 'scoped memory for model_forward.1']
    %10 = vsyncpa [#allocation4], 0
    %s11 = scalar_lea.sflag [#allocation4], 1
    %12 = vsyncpa %s11, 0
    loop: start=0, step=1, limit=4
    $region2: #{model_forward.1} parent=1 // loop_pre_header
      _
    $region3: #{model_forward.1} parent=1 // loop_header
      %s14 = sphi 0, %s18
      %p15 = scmp.ge.s32.totalorder %s14, 4
      %s24 = sphi 0, %s26
      %s27 = sphi 0, %s24
      %s28 = sphi 0, %s27
      %s44 = sphi 0, %s28
      %s48 = sphi 0, %s48
      %s50 = sphi 0, %s48
      %s51 = sphi 0, %s50
      %s65 = sphi 0, %s51
      %s69 = sphi 0, %s69
      %s71 = sphi 0, %s69
      %s72 = sphi 0, %s71
      %s86 = sphi 0, %s72
      %s90 = sphi 0, %s90
      %s92 = sphi 0, %s90
      %s93 = sphi 0, %s92
      %s107 = sphi 0, %s93
      %s111 = sphi 0, %s111
      %s113 = sphi 0, %s111
      %s114 = sphi 0, %s113
      %s128 = sphi 0, %s114
      %s134 = sphi 0, %s136
      %s137 = sphi 0, %s134
      %s138 = sphi 0, %s137
      %s154 = sphi 0, %s138
    $region4: #{model_forward.1} parent=1 // loop_header_branch
      %17 = sbr.rel (%p15) target = $region8
    $region5: #{model_forward.1} parent=1 // loop_body
      %s19 = ssub.s32 %s14, 1
      %s20 = ssub.s32 %s14, 2
      %s21 = sadd.s32 %s14, 1
      %s22 = ssub.s32 %s14, %s21
      %p23 = scmp.eq.s32.totalorder %s22, 0
      %s25 = sadd.s32 %s24, 1
      %s26 = scalar_select %p23, %s24, %s25
      %p29 = pneg %p23
      %p30 = scmp.eq.s32.totalorder %s14, 1
      %p31 = por %p29, %p30
      %p32 = scmp.ne.s32.totalorder %s24, %s27
      %p33 = scmp.eq.s32.totalorder %s14, 0
      %p34 = por %p32, %p33
      %p35 = scmp.ne.s32.totalorder %s24, %s27
      %p36 = scmp.eq.s32.totalorder %s19, 1
      %p37 = por %p35, %p36
      %p38 = scmp.ne.s32.totalorder %s27, %s28
      %p39 = scmp.eq.s32.totalorder %s19, 0
      %p40 = por %p38, %p39
      %p41 = scmp.ne.s32.totalorder %s27, %s28
      %p42 = scmp.eq.s32.totalorder %s20, 1
      %p43 = por %p41, %p42
      %p45 = scmp.ne.s32.totalorder %s28, %s44
      %p46 = scmp.eq.s32.totalorder %s20, 0
      %p47 = por %p45, %p46
      %s49 = sadd.s32 %s48, 1
      %p52 = scmp.eq.s32.totalorder %s14, 1
      %p53 = scmp.ne.s32.totalorder %s48, %s50
      %p54 = scmp.eq.s32.totalorder %s14, 0
      %p55 = por %p53, %p54
      %p56 = scmp.ne.s32.totalorder %s48, %s50
      %p57 = scmp.eq.s32.totalorder %s19, 1
      %p58 = por %p56, %p57
      %p59 = scmp.ne.s32.totalorder %s50, %s51
      %p60 = scmp.eq.s32.totalorder %s19, 0
      %p61 = por %p59, %p60
      %p62 = scmp.ne.s32.totalorder %s50, %s51
      %p63 = scmp.eq.s32.totalorder %s20, 1
      %p64 = por %p62, %p63
      %p66 = scmp.ne.s32.totalorder %s51, %s65
      %p67 = scmp.eq.s32.totalorder %s20, 0
      %p68 = por %p66, %p67
      %s70 = sadd.s32 %s69, 1
      %p73 = scmp.eq.s32.totalorder %s14, 1
      %p74 = scmp.ne.s32.totalorder %s69, %s71
      %p75 = scmp.eq.s32.totalorder %s14, 0
      %p76 = por %p74, %p75
      %p77 = scmp.ne.s32.totalorder %s69, %s71
      %p78 = scmp.eq.s32.totalorder %s19, 1
      %p79 = por %p77, %p78
      %p80 = scmp.ne.s32.totalorder %s71, %s72
      %p81 = scmp.eq.s32.totalorder %s19, 0
      %p82 = por %p80, %p81
      %p83 = scmp.ne.s32.totalorder %s71, %s72
      %p84 = scmp.eq.s32.totalorder %s20, 1
      %p85 = por %p83, %p84
      %p87 = scmp.ne.s32.totalorder %s72, %s86
      %p88 = scmp.eq.s32.totalorder %s20, 0
      %p89 = por %p87, %p88
      %s91 = sadd.s32 %s90, 1
      %p94 = scmp.eq.s32.totalorder %s14, 1
      %p95 = scmp.ne.s32.totalorder %s90, %s92
      %p96 = scmp.eq.s32.totalorder %s14, 0
      %p97 = por %p95, %p96
      %p98 = scmp.ne.s32.totalorder %s90, %s92
      %p99 = scmp.eq.s32.totalorder %s19, 1
      %p100 = por %p98, %p99
      %p101 = scmp.ne.s32.totalorder %s92, %s93
      %p102 = scmp.eq.s32.totalorder %s19, 0
      %p103 = por %p101, %p102
      %p104 = scmp.ne.s32.totalorder %s92, %s93
      %p105 = scmp.eq.s32.totalorder %s20, 1
      %p106 = por %p104, %p105
      %p108 = scmp.ne.s32.totalorder %s93, %s107
      %p109 = scmp.eq.s32.totalorder %s20, 0
      %p110 = por %p108, %p109
      %s112 = sadd.s32 %s111, 1
      %p115 = scmp.eq.s32.totalorder %s14, 1
      %p116 = scmp.ne.s32.totalorder %s111, %s113
      %p117 = scmp.eq.s32.totalorder %s14, 0
      %p118 = por %p116, %p117
      %p119 = scmp.ne.s32.totalorder %s111, %s113
      %p120 = scmp.eq.s32.totalorder %s19, 1
      %p121 = por %p119, %p120
      %p122 = scmp.ne.s32.totalorder %s113, %s114
      %p123 = scmp.eq.s32.totalorder %s19, 0
      %p124 = por %p122, %p123
      %p125 = scmp.ne.s32.totalorder %s113, %s114
      %p126 = scmp.eq.s32.totalorder %s20, 1
      %p127 = por %p125, %p126
      %p129 = scmp.ne.s32.totalorder %s114, %s128
      %p130 = scmp.eq.s32.totalorder %s20, 0
      %p131 = por %p129, %p130
      %s132 = ssub.s32 %s14, %s21
      %p133 = scmp.eq.s32.totalorder %s132, 0
      %s135 = sadd.s32 %s134, 1
      %s136 = scalar_select %p133, %s134, %s135
      %p139 = pneg %p133
      %p140 = scmp.eq.s32.totalorder %s14, 1
      %p141 = por %p139, %p140
      %p142 = scmp.ne.s32.totalorder %s134, %s137
      %p143 = scmp.eq.s32.totalorder %s14, 0
      %p144 = por %p142, %p143
      %p145 = scmp.ne.s32.totalorder %s134, %s137
      %p146 = scmp.eq.s32.totalorder %s19, 1
      %p147 = por %p145, %p146
      %p148 = scmp.ne.s32.totalorder %s137, %s138
      %p149 = scmp.eq.s32.totalorder %s19, 0
      %p150 = por %p148, %p149
      %p151 = scmp.ne.s32.totalorder %s137, %s138
      %p152 = scmp.eq.s32.totalorder %s20, 1
      %p153 = por %p151, %p152
      %p155 = scmp.ne.s32.totalorder %s138, %s154
      %p156 = scmp.eq.s32.totalorder %s20, 0
      %p157 = por %p155, %p156
      %p158 = scmp.le.s32.totalorder 1, %s14
      %p159 = scmp.lt.s32.totalorder %s14, 3
      %p160 = pnand %p158, %p159
      %p161 = pneg %p160
      // Predicated region
      $region9: #{model_forward.1} parent=5 // pred_check
        _
      $region10: #{model_forward.1} parent=5 // pred_check_branch
        %163 = sbr.rel (%p160) target = $region12
      $region11: #{model_forward.1} parent=5 // pred_region
        %s164 = ssub.s32 %s14, 1
        // Predicated region
        $region13: #{model_forward.1} parent=11 // pred_check
          %p165 = pneg %p61
        $region14: #{model_forward.1} parent=11 // pred_check_branch
          %167 = sbr.rel (%p165) target = $region16
        $region15: #{model_forward.1} parent=11 // pred_region
          _
        $region16: #{model_forward.1} parent=11 // pred_fallthru
          _
        // Predicated region
        $region17: #{model_forward.1} parent=11 // pred_check
          %p168 = pneg %p82
        $region18: #{model_forward.1} parent=11 // pred_check_branch
          %170 = sbr.rel (%p168) target = $region20
        $region19: #{model_forward.1} parent=11 // pred_region
          _
        $region20: #{model_forward.1} parent=11 // pred_fallthru
          _
        // Predicated region
        $region21: #{model_forward.1} parent=11 // pred_check
          %p171 = pneg %p103
        $region22: #{model_forward.1} parent=11 // pred_check_branch
          %173 = sbr.rel (%p171) target = $region24
        $region23: #{model_forward.1} parent=11 // pred_region
          _
        $region24: #{model_forward.1} parent=11 // pred_fallthru
          _
        // Predicated region
        $region25: #{model_forward.1} parent=11 // pred_check
          %p174 = pneg %p124
        $region26: #{model_forward.1} parent=11 // pred_check_branch
          %176 = sbr.rel (%p174) target = $region28
        $region27: #{model_forward.1} parent=11 // pred_region
          _
        $region28: #{model_forward.1} parent=11 // pred_fallthru
          _
      $region12: #{model_forward.1} parent=5 // pred_fallthru
        _
      %p177 = scmp.lt.s32.totalorder %s14, 2
      // Predicated region
      $region29: #{model_forward.1} parent=5 // pred_check
        %p178 = pneg %p177
      $region30: #{model_forward.1} parent=5 // pred_check_branch
        %180 = sbr.rel (%p178) target = $region32
      $region31: #{model_forward.1} parent=5 // pred_region
        // Predicated region
        $region33: #{model_forward.1} parent=31 // pred_check
          %p181 = pneg %p34
        $region34: #{model_forward.1} parent=31 // pred_check_branch
          %183 = sbr.rel (%p181) target = $region36
        $region35: #{model_forward.1} parent=31 // pred_region
          %s184 = smul.u32 30, %s14
          %p185 = scmp.lt.s32.totalorder %s184, 59
          %s186 = scalar_select %p185, %s184, 59
          %s187 = smul.addr %s186, 3
          %s188 = smul.addr %s187, 4
          %s189 = scalar_lea.vmem %s0, %s188
          %s190 = smul.u32 30, %s14
        $region36: #{model_forward.1} parent=31 // pred_fallthru
          _
      $region32: #{model_forward.1} parent=5 // pred_fallthru
        _
      %p191 = scmp.le.s32.totalorder 1, %s14
      %p192 = scmp.lt.s32.totalorder %s14, 3
      %p193 = pnand %p191, %p192
      %p194 = pneg %p193
      // Predicated region
      $region37: #{model_forward.1} parent=5 // pred_check
        _
      $region38: #{model_forward.1} parent=5 // pred_check_branch
        %196 = sbr.rel (%p193) target = $region40
      $region39: #{model_forward.1} parent=5 // pred_region
        %s197 = ssub.s32 %s14, 1
        %s198 = smul.u32 30, %s19
        %p199 = scmp.lt.s32.totalorder %s198, 59
        %s200 = scalar_select %p199, %s198, 59
        %s201 = smul.addr %s200, 3
        %s202 = smul.addr %s201, 4
        %s203 = scalar_lea.vmem %s0, %s202
        %p204 = pneg %p40
        %p205 = pneg %p37
        %p206 = pneg %p61
        %p207 = pneg %p58
        %p208 = pneg %p82
        %p209 = pneg %p79
        %p210 = pneg %p103
        %p211 = pneg %p100
        %p212 = pneg %p124
        %p213 = pneg %p121
        %p214 = pneg %p150
        %p215 = pneg %p147
        %s216 = sand.u32 %s137, 1
        %s217 = scalar_lea.sflag [#allocation4], %s216
        %s218 = sand.u32 %s137, 1
        %s219 = smul.addr %s218, 8
        %s220 = scalar_lea.vmem [#allocation3], %s219
        %s221 = smul.u32 30, %s19
        %p222 = scmp.lt.s32.totalorder %s221, 59
        %s223 = scalar_select %p222, %s221, 59
        %s224 = smul.addr %s223, 3
        %s225 = smul.addr %s224, 4
        %s226 = scalar_lea.vmem %s0, %s225
        %s227 = smul.u32 30, %s19
        %v229 = vld [vmem:[%s226] sm:$0xff]
        %v230 = vld [vmem:[%s226 + $0x8] sm:$0xf]
        %v231 = vld [vmem:[%s226 + $0xc] sm:$0xff]
        %v232 = vld [vmem:[%s226 + $0x14] sm:$0xf]
        %v233 = vld [vmem:[%s226 + $0x18] sm:$0xff]
        %v234 = vld [vmem:[%s226 + $0x20] sm:$0xf]
        %v235 = vld [vmem:[%s226 + $0x24] sm:$0xff]
        %v236 = vld [vmem:[%s226 + $0x2c] sm:$0xf]
        %v237 = vld [vmem:[%s226 + $0x30] sm:$0xff]
        %v238 = vld [vmem:[%s226 + $0x38] sm:$0xf]
        %v239 = vld [vmem:[%s226 + $0x3c] sm:$0xff]
        %v240 = vld [vmem:[%s226 + $0x44] sm:$0xf]
        %v241 = vld [vmem:[%s226 + $0x48] sm:$0xff]
        %v242 = vld [vmem:[%s226 + $0x50] sm:$0xf]
        %v243 = vld [vmem:[%s226 + $0x54] sm:$0xff]
        %v244 = vld [vmem:[%s226 + $0x5c] sm:$0xf]
        %v245 = vld [vmem:[%s226 + $0x60] sm:$0xff]
        %v246 = vld [vmem:[%s226 + $0x68] sm:$0xf]
        %v247 = vld [vmem:[%s226 + $0x6c] sm:$0xff]
        %v248 = vld [vmem:[%s226 + $0x74] sm:$0xf]
        %v249 = vld [vmem:[%s226 + $0x78] sm:$0xff]
        %v250 = vld [vmem:[%s226 + $0x80] sm:$0xf]
        %v251 = vld [vmem:[%s226 + $0x84] sm:$0xff]
        %v252 = vld [vmem:[%s226 + $0x8c] sm:$0xf]
        %v253 = vld [vmem:[%s226 + $0x90] sm:$0xff]
        %v254 = vld [vmem:[%s226 + $0x98] sm:$0xf]
        %v255 = vld [vmem:[%s226 + $0x9c] sm:$0xff]
        %v256 = vld [vmem:[%s226 + $0xa4] sm:$0xf]
        %v257 = vld [vmem:[%s226 + $0xa8] sm:$0xff]
        %v258 = vld [vmem:[%s226 + $0xb0] sm:$0xf]
        %v259 = vld [vmem:[%s226 + $0xb4] sm:$0xff]
        %v260 = vld [vmem:[%s226 + $0xbc] sm:$0xf]
        %v261 = vld [vmem:[%s226 + $0xc0] sm:$0xff]
        %v262 = vld [vmem:[%s226 + $0xc8] sm:$0xf]
        %v263 = vld [vmem:[%s226 + $0xcc] sm:$0xff]
        %v264 = vld [vmem:[%s226 + $0xd4] sm:$0xf]
        %v265 = vld [vmem:[%s226 + $0xd8] sm:$0xff]
        %v266 = vld [vmem:[%s226 + $0xe0] sm:$0xf]
        %v267 = vld [vmem:[%s226 + $0xe4] sm:$0xff]
        %v268 = vld [vmem:[%s226 + $0xec] sm:$0xf]
        %v269 = vld [vmem:[%s226 + $0xf0] sm:$0xff]
        %v270 = vld [vmem:[%s226 + $0xf8] sm:$0xf]
        %v271 = vld [vmem:[%s226 + $0xfc] sm:$0xff]
        %v272 = vld [vmem:[%s226 + $0x104] sm:$0xf]
        %v273 = vld [vmem:[%s226 + $0x108] sm:$0xff]
        %v274 = vld [vmem:[%s226 + $0x110] sm:$0xf]
        %v275 = vld [vmem:[%s226 + $0x114] sm:$0xff]
        %v276 = vld [vmem:[%s226 + $0x11c] sm:$0xf]
        %v277 = vld [vmem:[%s226 + $0x120] sm:$0xff]
        %v278 = vld [vmem:[%s226 + $0x128] sm:$0xf]
        %v279 = vld [vmem:[%s226 + $0x12c] sm:$0xff]
        %v280 = vld [vmem:[%s226 + $0x134] sm:$0xf]
        %v281 = vld [vmem:[%s226 + $0x138] sm:$0xff]
        %v282 = vld [vmem:[%s226 + $0x140] sm:$0xf]
        %v283 = vld [vmem:[%s226 + $0x144] sm:$0xff]
        %v284 = vld [vmem:[%s226 + $0x14c] sm:$0xf]
        %v285 = vld [vmem:[%s226 + $0x150] sm:$0xff]
        %v286 = vld [vmem:[%s226 + $0x158] sm:$0xf]
        %v287 = vld [vmem:[%s226 + $0x15c] sm:$0xff]
        %v288 = vld [vmem:[%s226 + $0x164] sm:$0xf]
        %v289 = vld [vmem:[%s1] sm:$0xff]
        %v290 = vld [vmem:[%s1 + $0x8] sm:$0xff]
        %v291 = vld [vmem:[%s1 + $0x10] sm:$0xff]
        %v292 = vld [vmem:[%s1 + $0x18] sm:$0xff]
        %v293 = vld [vmem:[%s1 + $0x20] sm:$0xf]
        %v294 = vld [vmem:[%s1 + $0x24] sm:$0xff]
        %v295 = vld [vmem:[%s1 + $0x2c] sm:$0xff]
        %v296 = vld [vmem:[%s1 + $0x34] sm:$0xff]
        %v297 = vld [vmem:[%s1 + $0x3c] sm:$0xff]
        %v298 = vld [vmem:[%s1 + $0x44] sm:$0xf]
        %v299 = vld [vmem:[%s1 + $0x48] sm:$0xff]
        %v300 = vld [vmem:[%s1 + $0x50] sm:$0xff]
        %v301 = vld [vmem:[%s1 + $0x58] sm:$0xff]
        %v302 = vld [vmem:[%s1 + $0x60] sm:$0xff]
        %v303 = vld [vmem:[%s1 + $0x68] sm:$0xf]
        %v304 = vld [vmem:[%s1 + $0x6c] sm:$0xff]
        %v305 = vld [vmem:[%s1 + $0x74] sm:$0xff]
        %v306 = vld [vmem:[%s1 + $0x7c] sm:$0xff]
        %v307 = vld [vmem:[%s1 + $0x84] sm:$0xff]
        %v308 = vld [vmem:[%s1 + $0x8c] sm:$0xf]
        %v309 = vld [vmem:[%s1 + $0x90] sm:$0xff]
        %v310 = vld [vmem:[%s1 + $0x98] sm:$0xff]
        %v311 = vld [vmem:[%s1 + $0xa0] sm:$0xff]
        %v312 = vld [vmem:[%s1 + $0xa8] sm:$0xff]
        %v313 = vld [vmem:[%s1 + $0xb0] sm:$0xf]
        %v314 = vld [vmem:[%s1 + $0xb4] sm:$0xff]
        %v315 = vld [vmem:[%s1 + $0xbc] sm:$0xff]
        %v316 = vld [vmem:[%s1 + $0xc4] sm:$0xff]
        %v317 = vld [vmem:[%s1 + $0xcc] sm:$0xff]
        %v318 = vld [vmem:[%s1 + $0xd4] sm:$0xf]
        %v319 = vld [vmem:[%s1 + $0xd8] sm:$0xff]
        %v320 = vld [vmem:[%s1 + $0xe0] sm:$0xff]
        %v321 = vld [vmem:[%s1 + $0xe8] sm:$0xff]
        %v322 = vld [vmem:[%s1 + $0xf0] sm:$0xff]
        %v323 = vld [vmem:[%s1 + $0xf8] sm:$0xf]
        %v324 = vld [vmem:[%s1 + $0xfc] sm:$0xff]
        %v325 = vld [vmem:[%s1 + $0x104] sm:$0xff]
        %v326 = vld [vmem:[%s1 + $0x10c] sm:$0xff]
        %v327 = vld [vmem:[%s1 + $0x114] sm:$0xff]
        %v328 = vld [vmem:[%s1 + $0x11c] sm:$0xf]
        %v329 = vld [vmem:[%s1 + $0x120] sm:$0xff]
        %v330 = vld [vmem:[%s1 + $0x128] sm:$0xff]
        %v331 = vld [vmem:[%s1 + $0x130] sm:$0xff]
        %v332 = vld [vmem:[%s1 + $0x138] sm:$0xff]
        %v333 = vld [vmem:[%s1 + $0x140] sm:$0xf]
        %v334 = vld [vmem:[%s1 + $0x144] sm:$0xff]
        %v335 = vld [vmem:[%s1 + $0x14c] sm:$0xff]
        %v336 = vld [vmem:[%s1 + $0x154] sm:$0xff]
        %v337 = vld [vmem:[%s1 + $0x15c] sm:$0xff]
        %v338 = vld [vmem:[%s1 + $0x164] sm:$0xf]
        %v339 = vld [vmem:[%s1 + $0x168] sm:$0xff]
        %v340 = vld [vmem:[%s1 + $0x170] sm:$0xff]
        %v341 = vld [vmem:[%s1 + $0x178] sm:$0xff]
        %v342 = vld [vmem:[%s1 + $0x180] sm:$0xff]
        %v343 = vld [vmem:[%s1 + $0x188] sm:$0xf]
        %v344 = vld [vmem:[%s1 + $0x18c] sm:$0xff]
        %v345 = vld [vmem:[%s1 + $0x194] sm:$0xff]
        %v346 = vld [vmem:[%s1 + $0x19c] sm:$0xff]
        %v347 = vld [vmem:[%s1 + $0x1a4] sm:$0xff]
        %v348 = vld [vmem:[%s1 + $0x1ac] sm:$0xf]
        %v349 = vld [vmem:[%s1 + $0x1b0] sm:$0xff]
        %v350 = vld [vmem:[%s1 + $0x1b8] sm:$0xff]
        %v351 = vld [vmem:[%s1 + $0x1c0] sm:$0xff]
        %v352 = vld [vmem:[%s1 + $0x1c8] sm:$0xff]
        %v353 = vld [vmem:[%s1 + $0x1d0] sm:$0xf]
        %v354 = vld [vmem:[%s1 + $0x1d4] sm:$0xff]
        %v355 = vld [vmem:[%s1 + $0x1dc] sm:$0xff]
        %v356 = vld [vmem:[%s1 + $0x1e4] sm:$0xff]
        %v357 = vld [vmem:[%s1 + $0x1ec] sm:$0xff]
        %v358 = vld [vmem:[%s1 + $0x1f4] sm:$0xf]
        %v359 = vld [vmem:[%s1 + $0x1f8] sm:$0xff]
        %v360 = vld [vmem:[%s1 + $0x200] sm:$0xff]
        %v361 = vld [vmem:[%s1 + $0x208] sm:$0xff]
        %v362 = vld [vmem:[%s1 + $0x210] sm:$0xff]
        %v363 = vld [vmem:[%s1 + $0x218] sm:$0xf]
        %v364 = vld [vmem:[%s1 + $0x21c] sm:$0xff]
        %v365 = vld [vmem:[%s1 + $0x224] sm:$0xff]
        %v366 = vld [vmem:[%s1 + $0x22c] sm:$0xff]
        %v367 = vld [vmem:[%s1 + $0x234] sm:$0xff]
        %v368 = vld [vmem:[%s1 + $0x23c] sm:$0xf]
        %v369 = vld [vmem:[%s1 + $0x240] sm:$0xff]
        %v370 = vld [vmem:[%s1 + $0x248] sm:$0xff]
        %v371 = vld [vmem:[%s1 + $0x250] sm:$0xff]
        %v372 = vld [vmem:[%s1 + $0x258] sm:$0xff]
        %v373 = vld [vmem:[%s1 + $0x260] sm:$0xf]
        %v374 = vld [vmem:[%s1 + $0x264] sm:$0xff]
        %v375 = vld [vmem:[%s1 + $0x26c] sm:$0xff]
        %v376 = vld [vmem:[%s1 + $0x274] sm:$0xff]
        %v377 = vld [vmem:[%s1 + $0x27c] sm:$0xff]
        %v378 = vld [vmem:[%s1 + $0x284] sm:$0xf]
        %v379 = vld [vmem:[%s1 + $0x288] sm:$0xff]
        %v380 = vld [vmem:[%s1 + $0x290] sm:$0xff]
        %v381 = vld [vmem:[%s1 + $0x298] sm:$0xff]
        %v382 = vld [vmem:[%s1 + $0x2a0] sm:$0xff]
        %v383 = vld [vmem:[%s1 + $0x2a8] sm:$0xf]
        %v384 = vld [vmem:[%s1 + $0x2ac] sm:$0xff]
        %v385 = vld [vmem:[%s1 + $0x2b4] sm:$0xff]
        %v386 = vld [vmem:[%s1 + $0x2bc] sm:$0xff]
        %v387 = vld [vmem:[%s1 + $0x2c4] sm:$0xff]
        %v388 = vld [vmem:[%s1 + $0x2cc] sm:$0xf]
        %v389 = vld [vmem:[%s1 + $0x2d0] sm:$0xff]
        %v390 = vld [vmem:[%s1 + $0x2d8] sm:$0xff]
        %v391 = vld [vmem:[%s1 + $0x2e0] sm:$0xff]
        %v392 = vld [vmem:[%s1 + $0x2e8] sm:$0xff]
        %v393 = vld [vmem:[%s1 + $0x2f0] sm:$0xf]
        %v394 = vld [vmem:[%s1 + $0x2f4] sm:$0xff]
        %v395 = vld [vmem:[%s1 + $0x2fc] sm:$0xff]
        %v396 = vld [vmem:[%s1 + $0x304] sm:$0xff]
        %v397 = vld [vmem:[%s1 + $0x30c] sm:$0xff]
        %v398 = vld [vmem:[%s1 + $0x314] sm:$0xf]
        %v399 = vld [vmem:[%s1 + $0x318] sm:$0xff]
        %v400 = vld [vmem:[%s1 + $0x320] sm:$0xff]
        %v401 = vld [vmem:[%s1 + $0x328] sm:$0xff]
        %v402 = vld [vmem:[%s1 + $0x330] sm:$0xff]
        %v403 = vld [vmem:[%s1 + $0x338] sm:$0xf]
        %v404 = vld [vmem:[%s1 + $0x33c] sm:$0xff]
        %v405 = vld [vmem:[%s1 + $0x344] sm:$0xff]
        %v406 = vld [vmem:[%s1 + $0x34c] sm:$0xff]
        %v407 = vld [vmem:[%s1 + $0x354] sm:$0xff]
        %v408 = vld [vmem:[%s1 + $0x35c] sm:$0xf]
        %v409 = vld [vmem:[%s1 + $0x360] sm:$0xff]
        %v410 = vld [vmem:[%s1 + $0x368] sm:$0xff]
        %v411 = vld [vmem:[%s1 + $0x370] sm:$0xff]
        %v412 = vld [vmem:[%s1 + $0x378] sm:$0xff]
        %v413 = vld [vmem:[%s1 + $0x380] sm:$0xf]
        %v414 = vld [vmem:[%s1 + $0x384] sm:$0xff]
        %v415 = vld [vmem:[%s1 + $0x38c] sm:$0xff]
        %v416 = vld [vmem:[%s1 + $0x394] sm:$0xff]
        %v417 = vld [vmem:[%s1 + $0x39c] sm:$0xff]
        %v418 = vld [vmem:[%s1 + $0x3a4] sm:$0xf]
        %v419 = vld [vmem:[%s1 + $0x3a8] sm:$0xff]
        %v420 = vld [vmem:[%s1 + $0x3b0] sm:$0xff]
        %v421 = vld [vmem:[%s1 + $0x3b8] sm:$0xff]
        %v422 = vld [vmem:[%s1 + $0x3c0] sm:$0xff]
        %v423 = vld [vmem:[%s1 + $0x3c8] sm:$0xf]
        %v424 = vld [vmem:[%s1 + $0x3cc] sm:$0xff]
        %v425 = vld [vmem:[%s1 + $0x3d4] sm:$0xff]
        %v426 = vld [vmem:[%s1 + $0x3dc] sm:$0xff]
        %v427 = vld [vmem:[%s1 + $0x3e4] sm:$0xff]
        %v428 = vld [vmem:[%s1 + $0x3ec] sm:$0xf]
        %v429 = vld [vmem:[%s1 + $0x3f0] sm:$0xff]
        %v430 = vld [vmem:[%s1 + $0x3f8] sm:$0xff]
        %v431 = vld [vmem:[%s1 + $0x400] sm:$0xff]
        %v432 = vld [vmem:[%s1 + $0x408] sm:$0xff]
        %v433 = vld [vmem:[%s1 + $0x410] sm:$0xf]
        %v434 = vld [vmem:[%s1 + $0x414] sm:$0xff]
        %v435 = vld [vmem:[%s1 + $0x41c] sm:$0xff]
        %v436 = vld [vmem:[%s1 + $0x424] sm:$0xff]
        %v437 = vld [vmem:[%s1 + $0x42c] sm:$0xff]
        %v438 = vld [vmem:[%s1 + $0x434] sm:$0xf]
        %v439 = vld [vmem:[%s1 + $0x438] sm:$0xff]
        %v440 = vld [vmem:[%s1 + $0x440] sm:$0xff]
        %v441 = vld [vmem:[%s1 + $0x448] sm:$0xff]
        %v442 = vld [vmem:[%s1 + $0x450] sm:$0xff]
        %v443 = vld [vmem:[%s1 + $0x458] sm:$0xf]
        %v444 = vld [vmem:[%s1 + $0x45c] sm:$0xff]
        %v445 = vld [vmem:[%s1 + $0x464] sm:$0xff]
        %v446 = vld [vmem:[%s1 + $0x46c] sm:$0xff]
        %v447 = vld [vmem:[%s1 + $0x474] sm:$0xff]
        %v448 = vld [vmem:[%s1 + $0x47c] sm:$0xf]
        %v449 = vld [vmem:[%s1 + $0x480] sm:$0xff]
        %v450 = vld [vmem:[%s1 + $0x488] sm:$0xff]
        %v451 = vld [vmem:[%s1 + $0x490] sm:$0xff]
        %v452 = vld [vmem:[%s1 + $0x498] sm:$0xff]
        %v453 = vld [vmem:[%s1 + $0x4a0] sm:$0xf]
        %v454 = vld [vmem:[%s1 + $0x4a4] sm:$0xff]
        %v455 = vld [vmem:[%s1 + $0x4ac] sm:$0xff]
        %v456 = vld [vmem:[%s1 + $0x4b4] sm:$0xff]
        %v457 = vld [vmem:[%s1 + $0x4bc] sm:$0xff]
        %v458 = vld [vmem:[%s1 + $0x4c4] sm:$0xf]
        %v459 = vld [vmem:[%s1 + $0x4c8] sm:$0xff]
        %v460 = vld [vmem:[%s1 + $0x4d0] sm:$0xff]
        %v461 = vld [vmem:[%s1 + $0x4d8] sm:$0xff]
        %v462 = vld [vmem:[%s1 + $0x4e0] sm:$0xff]
        %v463 = vld [vmem:[%s1 + $0x4e8] sm:$0xf]
        %v464 = vld [vmem:[%s1 + $0x4ec] sm:$0xff]
        %v465 = vld [vmem:[%s1 + $0x4f4] sm:$0xff]
        %v466 = vld [vmem:[%s1 + $0x4fc] sm:$0xff]
        %v467 = vld [vmem:[%s1 + $0x504] sm:$0xff]
        %v468 = vld [vmem:[%s1 + $0x50c] sm:$0xf]
        %v469 = vld [vmem:[%s1 + $0x510] sm:$0xff]
        %v470 = vld [vmem:[%s1 + $0x518] sm:$0xff]
        %v471 = vld [vmem:[%s1 + $0x520] sm:$0xff]
        %v472 = vld [vmem:[%s1 + $0x528] sm:$0xff]
        %v473 = vld [vmem:[%s1 + $0x530] sm:$0xf]
        %v474 = vld [vmem:[%s1 + $0x534] sm:$0xff]
        %v475 = vld [vmem:[%s1 + $0x53c] sm:$0xff]
        %v476 = vld [vmem:[%s1 + $0x544] sm:$0xff]
        %v477 = vld [vmem:[%s1 + $0x54c] sm:$0xff]
        %v478 = vld [vmem:[%s1 + $0x554] sm:$0xf]
        %v479 = vld [vmem:[%s1 + $0x558] sm:$0xff]
        %v480 = vld [vmem:[%s1 + $0x560] sm:$0xff]
        %v481 = vld [vmem:[%s1 + $0x568] sm:$0xff]
        %v482 = vld [vmem:[%s1 + $0x570] sm:$0xff]
        %v483 = vld [vmem:[%s1 + $0x578] sm:$0xf]
        %v484 = vld [vmem:[%s1 + $0x57c] sm:$0xff]
        %v485 = vld [vmem:[%s1 + $0x584] sm:$0xff]
        %v486 = vld [vmem:[%s1 + $0x58c] sm:$0xff]
        %v487 = vld [vmem:[%s1 + $0x594] sm:$0xff]
        %v488 = vld [vmem:[%s1 + $0x59c] sm:$0xf]
        %v489 = vld [vmem:[%s1 + $0x5a0] sm:$0xff]
        %v490 = vld [vmem:[%s1 + $0x5a8] sm:$0xff]
        %v491 = vld [vmem:[%s1 + $0x5b0] sm:$0xff]
        %v492 = vld [vmem:[%s1 + $0x5b8] sm:$0xff]
        %v493 = vld [vmem:[%s1 + $0x5c0] sm:$0xf]
        %v494 = vld [vmem:[%s1 + $0x5c4] sm:$0xff]
        %v495 = vld [vmem:[%s1 + $0x5cc] sm:$0xff]
        %v496 = vld [vmem:[%s1 + $0x5d4] sm:$0xff]
        %v497 = vld [vmem:[%s1 + $0x5dc] sm:$0xff]
        %v498 = vld [vmem:[%s1 + $0x5e4] sm:$0xf]
        %v499 = vld [vmem:[%s1 + $0x5e8] sm:$0xff]
        %v500 = vld [vmem:[%s1 + $0x5f0] sm:$0xff]
        %v501 = vld [vmem:[%s1 + $0x5f8] sm:$0xff]
        %v502 = vld [vmem:[%s1 + $0x600] sm:$0xff]
        %v503 = vld [vmem:[%s1 + $0x608] sm:$0xf]
        %v504 = vld [vmem:[%s1 + $0x60c] sm:$0xff]
        %v505 = vld [vmem:[%s1 + $0x614] sm:$0xff]
        %v506 = vld [vmem:[%s1 + $0x61c] sm:$0xff]
        %v507 = vld [vmem:[%s1 + $0x624] sm:$0xff]
        %v508 = vld [vmem:[%s1 + $0x62c] sm:$0xf]
        %v509 = vld [vmem:[%s1 + $0x630] sm:$0xff]
        %v510 = vld [vmem:[%s1 + $0x638] sm:$0xff]
        %v511 = vld [vmem:[%s1 + $0x640] sm:$0xff]
        %v512 = vld [vmem:[%s1 + $0x648] sm:$0xff]
        %v513 = vld [vmem:[%s1 + $0x650] sm:$0xf]
        %v514 = vld [vmem:[%s1 + $0x654] sm:$0xff]
        %v515 = vld [vmem:[%s1 + $0x65c] sm:$0xff]
        %v516 = vld [vmem:[%s1 + $0x664] sm:$0xff]
        %v517 = vld [vmem:[%s1 + $0x66c] sm:$0xff]
        %v518 = vld [vmem:[%s1 + $0x674] sm:$0xf]
        %v519 = vld [vmem:[%s1 + $0x678] sm:$0xff]
        %v520 = vld [vmem:[%s1 + $0x680] sm:$0xff]
        %v521 = vld [vmem:[%s1 + $0x688] sm:$0xff]
        %v522 = vld [vmem:[%s1 + $0x690] sm:$0xff]
        %v523 = vld [vmem:[%s1 + $0x698] sm:$0xf]
        %v524 = vld [vmem:[%s1 + $0x69c] sm:$0xff]
        %v525 = vld [vmem:[%s1 + $0x6a4] sm:$0xff]
        %v526 = vld [vmem:[%s1 + $0x6ac] sm:$0xff]
        %v527 = vld [vmem:[%s1 + $0x6b4] sm:$0xff]
        %v528 = vld [vmem:[%s1 + $0x6bc] sm:$0xf]
        %v589 = vunpack.c.l.b16 %v229
        %v590 = vunpack.c.h.b16 %v229
        %v591 = vunpack.c.l.b16 %v230
        %v592 = vunpack.c.l.b16 %v231
        %v593 = vunpack.c.h.b16 %v231
        %v594 = vunpack.c.l.b16 %v232
        %v595 = vunpack.c.l.b16 %v233
        %v596 = vunpack.c.h.b16 %v233
        %v597 = vunpack.c.l.b16 %v234
        %v598 = vunpack.c.l.b16 %v235
        %v599 = vunpack.c.h.b16 %v235
        %v600 = vunpack.c.l.b16 %v236
        %v601 = vunpack.c.l.b16 %v237
        %v602 = vunpack.c.h.b16 %v237
        %v603 = vunpack.c.l.b16 %v238
        %v604 = vunpack.c.l.b16 %v239
        %v605 = vunpack.c.h.b16 %v239
        %v606 = vunpack.c.l.b16 %v240
        %v607 = vunpack.c.l.b16 %v241
        %v608 = vunpack.c.h.b16 %v241
        %v609 = vunpack.c.l.b16 %v242
        %v610 = vunpack.c.l.b16 %v243
        %v611 = vunpack.c.h.b16 %v243
        %v612 = vunpack.c.l.b16 %v244
        %v613 = vunpack.c.l.b16 %v245
        %v614 = vunpack.c.h.b16 %v245
        %v615 = vunpack.c.l.b16 %v246
        %v616 = vunpack.c.l.b16 %v247
        %v617 = vunpack.c.h.b16 %v247
        %v618 = vunpack.c.l.b16 %v248
        %v619 = vunpack.c.l.b16 %v249
        %v620 = vunpack.c.h.b16 %v249
        %v621 = vunpack.c.l.b16 %v250
        %v622 = vunpack.c.l.b16 %v251
        %v623 = vunpack.c.h.b16 %v251
        %v624 = vunpack.c.l.b16 %v252
        %v625 = vunpack.c.l.b16 %v253
        %v626 = vunpack.c.h.b16 %v253
        %v627 = vunpack.c.l.b16 %v254
        %v628 = vunpack.c.l.b16 %v255
        %v629 = vunpack.c.h.b16 %v255
        %v630 = vunpack.c.l.b16 %v256
        %v631 = vunpack.c.l.b16 %v257
        %v632 = vunpack.c.h.b16 %v257
        %v633 = vunpack.c.l.b16 %v258
        %v634 = vunpack.c.l.b16 %v259
        %v635 = vunpack.c.h.b16 %v259
        %v636 = vunpack.c.l.b16 %v260
        %v637 = vunpack.c.l.b16 %v261
        %v638 = vunpack.c.h.b16 %v261
        %v639 = vunpack.c.l.b16 %v262
        %v640 = vunpack.c.l.b16 %v263
        %v641 = vunpack.c.h.b16 %v263
        %v642 = vunpack.c.l.b16 %v264
        %v643 = vunpack.c.l.b16 %v265
        %v644 = vunpack.c.h.b16 %v265
        %v645 = vunpack.c.l.b16 %v266
        %v646 = vunpack.c.l.b16 %v267
        %v647 = vunpack.c.h.b16 %v267
        %v648 = vunpack.c.l.b16 %v268
        %v649 = vunpack.c.l.b16 %v269
        %v650 = vunpack.c.h.b16 %v269
        %v651 = vunpack.c.l.b16 %v270
        %v652 = vunpack.c.l.b16 %v271
        %v653 = vunpack.c.h.b16 %v271
        %v654 = vunpack.c.l.b16 %v272
        %v655 = vunpack.c.l.b16 %v273
        %v656 = vunpack.c.h.b16 %v273
        %v657 = vunpack.c.l.b16 %v274
        %v658 = vunpack.c.l.b16 %v275
        %v659 = vunpack.c.h.b16 %v275
        %v660 = vunpack.c.l.b16 %v276
        %v661 = vunpack.c.l.b16 %v277
        %v662 = vunpack.c.h.b16 %v277
        %v663 = vunpack.c.l.b16 %v278
        %v664 = vunpack.c.l.b16 %v279
        %v665 = vunpack.c.h.b16 %v279
        %v666 = vunpack.c.l.b16 %v280
        %v667 = vunpack.c.l.b16 %v281
        %v668 = vunpack.c.h.b16 %v281
        %v669 = vunpack.c.l.b16 %v282
        %v670 = vunpack.c.l.b16 %v283
        %v671 = vunpack.c.h.b16 %v283
        %v672 = vunpack.c.l.b16 %v284
        %v673 = vunpack.c.l.b16 %v285
        %v674 = vunpack.c.h.b16 %v285
        %v675 = vunpack.c.l.b16 %v286
        %v676 = vunpack.c.l.b16 %v287
        %v677 = vunpack.c.h.b16 %v287
        %v678 = vunpack.c.l.b16 %v288
        %v679 = vpack.c.b16 %v592, %v589
        %v680 = vpack.c.b16 %v593, %v590
        %v681 = vpack.c.b16 %v594, %v591
        %v682 = vpack.c.b16 %v598, %v595
        %v683 = vpack.c.b16 %v599, %v596
        %v684 = vpack.c.b16 %v600, %v597
        %v685 = vpack.c.b16 %v604, %v601
        %v686 = vpack.c.b16 %v605, %v602
        %v687 = vpack.c.b16 %v606, %v603
        %v688 = vpack.c.b16 %v610, %v607
        %v689 = vpack.c.b16 %v611, %v608
        %v690 = vpack.c.b16 %v612, %v609
        %v691 = vpack.c.b16 %v616, %v613
        %v692 = vpack.c.b16 %v617, %v614
        %v693 = vpack.c.b16 %v618, %v615
        %v694 = vpack.c.b16 %v622, %v619
        %v695 = vpack.c.b16 %v623, %v620
        %v696 = vpack.c.b16 %v624, %v621
        %v697 = vpack.c.b16 %v628, %v625
        %v698 = vpack.c.b16 %v629, %v626
        %v699 = vpack.c.b16 %v630, %v627
        %v700 = vpack.c.b16 %v634, %v631
        %v701 = vpack.c.b16 %v635, %v632
        %v702 = vpack.c.b16 %v636, %v633
        %v703 = vpack.c.b16 %v640, %v637
        %v704 = vpack.c.b16 %v641, %v638
        %v705 = vpack.c.b16 %v642, %v639
        %v706 = vpack.c.b16 %v646, %v643
        %v707 = vpack.c.b16 %v647, %v644
        %v708 = vpack.c.b16 %v648, %v645
        %v709 = vpack.c.b16 %v652, %v649
        %v710 = vpack.c.b16 %v653, %v650
        %v711 = vpack.c.b16 %v654, %v651
        %v712 = vpack.c.b16 %v658, %v655
        %v713 = vpack.c.b16 %v659, %v656
        %v714 = vpack.c.b16 %v660, %v657
        %v715 = vpack.c.b16 %v664, %v661
        %v716 = vpack.c.b16 %v665, %v662
        %v717 = vpack.c.b16 %v666, %v663
        %v718 = vpack.c.b16 %v670, %v667
        %v719 = vpack.c.b16 %v671, %v668
        %v720 = vpack.c.b16 %v672, %v669
        %v721 = vpack.c.b16 %v676, %v673
        %v722 = vpack.c.b16 %v677, %v674
        %v723 = vpack.c.b16 %v678, %v675
        %v1009 = vunpack.c.l.b16 %v289
        %v1010 = vunpack.c.h.b16 %v289
        %v1011 = vunpack.c.l.b16 %v290
        %v1012 = vunpack.c.h.b16 %v290
        %v1013 = vunpack.c.l.b16 %v291
        %v1014 = vunpack.c.h.b16 %v291
        %v1015 = vunpack.c.l.b16 %v292
        %v1016 = vunpack.c.h.b16 %v292
        %v1017 = vunpack.c.l.b16 %v293
        %v1018 = vunpack.c.l.b16 %v294
        %v1019 = vunpack.c.h.b16 %v294
        %v1020 = vunpack.c.l.b16 %v295
        %v1021 = vunpack.c.h.b16 %v295
        %v1022 = vunpack.c.l.b16 %v296
        %v1023 = vunpack.c.h.b16 %v296
        %v1024 = vunpack.c.l.b16 %v297
        %v1025 = vunpack.c.h.b16 %v297
        %v1026 = vunpack.c.l.b16 %v298
        %v1027 = vunpack.c.l.b16 %v299
        %v1028 = vunpack.c.h.b16 %v299
        %v1029 = vunpack.c.l.b16 %v300
        %v1030 = vunpack.c.h.b16 %v300
        %v1031 = vunpack.c.l.b16 %v301
        %v1032 = vunpack.c.h.b16 %v301
        %v1033 = vunpack.c.l.b16 %v302
        %v1034 = vunpack.c.h.b16 %v302
        %v1035 = vunpack.c.l.b16 %v303
        %v1036 = vunpack.c.l.b16 %v304
        %v1037 = vunpack.c.h.b16 %v304
        %v1038 = vunpack.c.l.b16 %v305
        %v1039 = vunpack.c.h.b16 %v305
        %v1040 = vunpack.c.l.b16 %v306
        %v1041 = vunpack.c.h.b16 %v306
        %v1042 = vunpack.c.l.b16 %v307
        %v1043 = vunpack.c.h.b16 %v307
        %v1044 = vunpack.c.l.b16 %v308
        %v1045 = vunpack.c.l.b16 %v309
        %v1046 = vunpack.c.h.b16 %v309
        %v1047 = vunpack.c.l.b16 %v310
        %v1048 = vunpack.c.h.b16 %v310
        %v1049 = vunpack.c.l.b16 %v311
        %v1050 = vunpack.c.h.b16 %v311
        %v1051 = vunpack.c.l.b16 %v312
        %v1052 = vunpack.c.h.b16 %v312
        %v1053 = vunpack.c.l.b16 %v313
        %v1054 = vunpack.c.l.b16 %v314
        %v1055 = vunpack.c.h.b16 %v314
        %v1056 = vunpack.c.l.b16 %v315
        %v1057 = vunpack.c.h.b16 %v315
        %v1058 = vunpack.c.l.b16 %v316
        %v1059 = vunpack.c.h.b16 %v316
        %v1060 = vunpack.c.l.b16 %v317
        %v1061 = vunpack.c.h.b16 %v317
        %v1062 = vunpack.c.l.b16 %v318
        %v1063 = vunpack.c.l.b16 %v319
        %v1064 = vunpack.c.h.b16 %v319
        %v1065 = vunpack.c.l.b16 %v320
        %v1066 = vunpack.c.h.b16 %v320
        %v1067 = vunpack.c.l.b16 %v321
        %v1068 = vunpack.c.h.b16 %v321
        %v1069 = vunpack.c.l.b16 %v322
        %v1070 = vunpack.c.h.b16 %v322
        %v1071 = vunpack.c.l.b16 %v323
        %v1072 = vunpack.c.l.b16 %v324
        %v1073 = vunpack.c.h.b16 %v324
        %v1074 = vunpack.c.l.b16 %v325
        %v1075 = vunpack.c.h.b16 %v325
        %v1076 = vunpack.c.l.b16 %v326
        %v1077 = vunpack.c.h.b16 %v326
        %v1078 = vunpack.c.l.b16 %v327
        %v1079 = vunpack.c.h.b16 %v327
        %v1080 = vunpack.c.l.b16 %v328
        %v1081 = vunpack.c.l.b16 %v329
        %v1082 = vunpack.c.h.b16 %v329
        %v1083 = vunpack.c.l.b16 %v330
        %v1084 = vunpack.c.h.b16 %v330
        %v1085 = vunpack.c.l.b16 %v331
        %v1086 = vunpack.c.h.b16 %v331
        %v1087 = vunpack.c.l.b16 %v332
        %v1088 = vunpack.c.h.b16 %v332
        %v1089 = vunpack.c.l.b16 %v333
        %v1090 = vunpack.c.l.b16 %v334
        %v1091 = vunpack.c.h.b16 %v334
        %v1092 = vunpack.c.l.b16 %v335
        %v1093 = vunpack.c.h.b16 %v335
        %v1094 = vunpack.c.l.b16 %v336
        %v1095 = vunpack.c.h.b16 %v336
        %v1096 = vunpack.c.l.b16 %v337
        %v1097 = vunpack.c.h.b16 %v337
        %v1098 = vunpack.c.l.b16 %v338
        %v1099 = vunpack.c.l.b16 %v339
        %v1100 = vunpack.c.h.b16 %v339
        %v1101 = vunpack.c.l.b16 %v340
        %v1102 = vunpack.c.h.b16 %v340
        %v1103 = vunpack.c.l.b16 %v341
        %v1104 = vunpack.c.h.b16 %v341
        %v1105 = vunpack.c.l.b16 %v342
        %v1106 = vunpack.c.h.b16 %v342
        %v1107 = vunpack.c.l.b16 %v343
        %v1108 = vunpack.c.l.b16 %v344
        %v1109 = vunpack.c.h.b16 %v344
        %v1110 = vunpack.c.l.b16 %v345
        %v1111 = vunpack.c.h.b16 %v345
        %v1112 = vunpack.c.l.b16 %v346
        %v1113 = vunpack.c.h.b16 %v346
        %v1114 = vunpack.c.l.b16 %v347
        %v1115 = vunpack.c.h.b16 %v347
        %v1116 = vunpack.c.l.b16 %v348
        %v1117 = vunpack.c.l.b16 %v349
        %v1118 = vunpack.c.h.b16 %v349
        %v1119 = vunpack.c.l.b16 %v350
        %v1120 = vunpack.c.h.b16 %v350
        %v1121 = vunpack.c.l.b16 %v351
        %v1122 = vunpack.c.h.b16 %v351
        %v1123 = vunpack.c.l.b16 %v352
        %v1124 = vunpack.c.h.b16 %v352
        %v1125 = vunpack.c.l.b16 %v353
        %v1126 = vunpack.c.l.b16 %v354
        %v1127 = vunpack.c.h.b16 %v354
        %v1128 = vunpack.c.l.b16 %v355
        %v1129 = vunpack.c.h.b16 %v355
        %v1130 = vunpack.c.l.b16 %v356
        %v1131 = vunpack.c.h.b16 %v356
        %v1132 = vunpack.c.l.b16 %v357
        %v1133 = vunpack.c.h.b16 %v357
        %v1134 = vunpack.c.l.b16 %v358
        %v1135 = vunpack.c.l.b16 %v359
        %v1136 = vunpack.c.h.b16 %v359
        %v1137 = vunpack.c.l.b16 %v360
        %v1138 = vunpack.c.h.b16 %v360
        %v1139 = vunpack.c.l.b16 %v361
        %v1140 = vunpack.c.h.b16 %v361
        %v1141 = vunpack.c.l.b16 %v362
        %v1142 = vunpack.c.h.b16 %v362
        %v1143 = vunpack.c.l.b16 %v363
        %v1144 = vunpack.c.l.b16 %v364
        %v1145 = vunpack.c.h.b16 %v364
        %v1146 = vunpack.c.l.b16 %v365
        %v1147 = vunpack.c.h.b16 %v365
        %v1148 = vunpack.c.l.b16 %v366
        %v1149 = vunpack.c.h.b16 %v366
        %v1150 = vunpack.c.l.b16 %v367
        %v1151 = vunpack.c.h.b16 %v367
        %v1152 = vunpack.c.l.b16 %v368
        %v1153 = vunpack.c.l.b16 %v369
        %v1154 = vunpack.c.h.b16 %v369
        %v1155 = vunpack.c.l.b16 %v370
        %v1156 = vunpack.c.h.b16 %v370
        %v1157 = vunpack.c.l.b16 %v371
        %v1158 = vunpack.c.h.b16 %v371
        %v1159 = vunpack.c.l.b16 %v372
        %v1160 = vunpack.c.h.b16 %v372
        %v1161 = vunpack.c.l.b16 %v373
        %v1162 = vunpack.c.l.b16 %v374
        %v1163 = vunpack.c.h.b16 %v374
        %v1164 = vunpack.c.l.b16 %v375
        %v1165 = vunpack.c.h.b16 %v375
        %v1166 = vunpack.c.l.b16 %v376
        %v1167 = vunpack.c.h.b16 %v376
        %v1168 = vunpack.c.l.b16 %v377
        %v1169 = vunpack.c.h.b16 %v377
        %v1170 = vunpack.c.l.b16 %v378
        %v1171 = vunpack.c.l.b16 %v379
        %v1172 = vunpack.c.h.b16 %v379
        %v1173 = vunpack.c.l.b16 %v380
        %v1174 = vunpack.c.h.b16 %v380
        %v1175 = vunpack.c.l.b16 %v381
        %v1176 = vunpack.c.h.b16 %v381
        %v1177 = vunpack.c.l.b16 %v382
        %v1178 = vunpack.c.h.b16 %v382
        %v1179 = vunpack.c.l.b16 %v383
        %v1180 = vunpack.c.l.b16 %v384
        %v1181 = vunpack.c.h.b16 %v384
        %v1182 = vunpack.c.l.b16 %v385
        %v1183 = vunpack.c.h.b16 %v385
        %v1184 = vunpack.c.l.b16 %v386
        %v1185 = vunpack.c.h.b16 %v386
        %v1186 = vunpack.c.l.b16 %v387
        %v1187 = vunpack.c.h.b16 %v387
        %v1188 = vunpack.c.l.b16 %v388
        %v1189 = vunpack.c.l.b16 %v389
        %v1190 = vunpack.c.h.b16 %v389
        %v1191 = vunpack.c.l.b16 %v390
        %v1192 = vunpack.c.h.b16 %v390
        %v1193 = vunpack.c.l.b16 %v391
        %v1194 = vunpack.c.h.b16 %v391
        %v1195 = vunpack.c.l.b16 %v392
        %v1196 = vunpack.c.h.b16 %v392
        %v1197 = vunpack.c.l.b16 %v393
        %v1198 = vunpack.c.l.b16 %v394
        %v1199 = vunpack.c.h.b16 %v394
        %v1200 = vunpack.c.l.b16 %v395
        %v1201 = vunpack.c.h.b16 %v395
        %v1202 = vunpack.c.l.b16 %v396
        %v1203 = vunpack.c.h.b16 %v396
        %v1204 = vunpack.c.l.b16 %v397
        %v1205 = vunpack.c.h.b16 %v397
        %v1206 = vunpack.c.l.b16 %v398
        %v1207 = vunpack.c.l.b16 %v399
        %v1208 = vunpack.c.h.b16 %v399
        %v1209 = vunpack.c.l.b16 %v400
        %v1210 = vunpack.c.h.b16 %v400
        %v1211 = vunpack.c.l.b16 %v401
        %v1212 = vunpack.c.h.b16 %v401
        %v1213 = vunpack.c.l.b16 %v402
        %v1214 = vunpack.c.h.b16 %v402
        %v1215 = vunpack.c.l.b16 %v403
        %v1216 = vunpack.c.l.b16 %v404
        %v1217 = vunpack.c.h.b16 %v404
        %v1218 = vunpack.c.l.b16 %v405
        %v1219 = vunpack.c.h.b16 %v405
        %v1220 = vunpack.c.l.b16 %v406
        %v1221 = vunpack.c.h.b16 %v406
        %v1222 = vunpack.c.l.b16 %v407
        %v1223 = vunpack.c.h.b16 %v407
        %v1224 = vunpack.c.l.b16 %v408
        %v1225 = vunpack.c.l.b16 %v409
        %v1226 = vunpack.c.h.b16 %v409
        %v1227 = vunpack.c.l.b16 %v410
        %v1228 = vunpack.c.h.b16 %v410
        %v1229 = vunpack.c.l.b16 %v411
        %v1230 = vunpack.c.h.b16 %v411
        %v1231 = vunpack.c.l.b16 %v412
        %v1232 = vunpack.c.h.b16 %v412
        %v1233 = vunpack.c.l.b16 %v413
        %v1234 = vunpack.c.l.b16 %v414
        %v1235 = vunpack.c.h.b16 %v414
        %v1236 = vunpack.c.l.b16 %v415
        %v1237 = vunpack.c.h.b16 %v415
        %v1238 = vunpack.c.l.b16 %v416
        %v1239 = vunpack.c.h.b16 %v416
        %v1240 = vunpack.c.l.b16 %v417
        %v1241 = vunpack.c.h.b16 %v417
        %v1242 = vunpack.c.l.b16 %v418
        %v1243 = vunpack.c.l.b16 %v419
        %v1244 = vunpack.c.h.b16 %v419
        %v1245 = vunpack.c.l.b16 %v420
        %v1246 = vunpack.c.h.b16 %v420
        %v1247 = vunpack.c.l.b16 %v421
        %v1248 = vunpack.c.h.b16 %v421
        %v1249 = vunpack.c.l.b16 %v422
        %v1250 = vunpack.c.h.b16 %v422
        %v1251 = vunpack.c.l.b16 %v423
        %v1252 = vunpack.c.l.b16 %v424
        %v1253 = vunpack.c.h.b16 %v424
        %v1254 = vunpack.c.l.b16 %v425
        %v1255 = vunpack.c.h.b16 %v425
        %v1256 = vunpack.c.l.b16 %v426
        %v1257 = vunpack.c.h.b16 %v426
        %v1258 = vunpack.c.l.b16 %v427
        %v1259 = vunpack.c.h.b16 %v427
        %v1260 = vunpack.c.l.b16 %v428
        %v1261 = vunpack.c.l.b16 %v429
        %v1262 = vunpack.c.h.b16 %v429
        %v1263 = vunpack.c.l.b16 %v430
        %v1264 = vunpack.c.h.b16 %v430
        %v1265 = vunpack.c.l.b16 %v431
        %v1266 = vunpack.c.h.b16 %v431
        %v1267 = vunpack.c.l.b16 %v432
        %v1268 = vunpack.c.h.b16 %v432
        %v1269 = vunpack.c.l.b16 %v433
        %v1270 = vunpack.c.l.b16 %v434
        %v1271 = vunpack.c.h.b16 %v434
        %v1272 = vunpack.c.l.b16 %v435
        %v1273 = vunpack.c.h.b16 %v435
        %v1274 = vunpack.c.l.b16 %v436
        %v1275 = vunpack.c.h.b16 %v436
        %v1276 = vunpack.c.l.b16 %v437
        %v1277 = vunpack.c.h.b16 %v437
        %v1278 = vunpack.c.l.b16 %v438
        %v1279 = vunpack.c.l.b16 %v439
        %v1280 = vunpack.c.h.b16 %v439
        %v1281 = vunpack.c.l.b16 %v440
        %v1282 = vunpack.c.h.b16 %v440
        %v1283 = vunpack.c.l.b16 %v441
        %v1284 = vunpack.c.h.b16 %v441
        %v1285 = vunpack.c.l.b16 %v442
        %v1286 = vunpack.c.h.b16 %v442
        %v1287 = vunpack.c.l.b16 %v443
        %v1288 = vunpack.c.l.b16 %v444
        %v1289 = vunpack.c.h.b16 %v444
        %v1290 = vunpack.c.l.b16 %v445
        %v1291 = vunpack.c.h.b16 %v445
        %v1292 = vunpack.c.l.b16 %v446
        %v1293 = vunpack.c.h.b16 %v446
        %v1294 = vunpack.c.l.b16 %v447
        %v1295 = vunpack.c.h.b16 %v447
        %v1296 = vunpack.c.l.b16 %v448
        %v1297 = vunpack.c.l.b16 %v449
        %v1298 = vunpack.c.h.b16 %v449
        %v1299 = vunpack.c.l.b16 %v450
        %v1300 = vunpack.c.h.b16 %v450
        %v1301 = vunpack.c.l.b16 %v451
        %v1302 = vunpack.c.h.b16 %v451
        %v1303 = vunpack.c.l.b16 %v452
        %v1304 = vunpack.c.h.b16 %v452
        %v1305 = vunpack.c.l.b16 %v453
        %v1306 = vunpack.c.l.b16 %v454
        %v1307 = vunpack.c.h.b16 %v454
        %v1308 = vunpack.c.l.b16 %v455
        %v1309 = vunpack.c.h.b16 %v455
        %v1310 = vunpack.c.l.b16 %v456
        %v1311 = vunpack.c.h.b16 %v456
        %v1312 = vunpack.c.l.b16 %v457
        %v1313 = vunpack.c.h.b16 %v457
        %v1314 = vunpack.c.l.b16 %v458
        %v1315 = vunpack.c.l.b16 %v459
        %v1316 = vunpack.c.h.b16 %v459
        %v1317 = vunpack.c.l.b16 %v460
        %v1318 = vunpack.c.h.b16 %v460
        %v1319 = vunpack.c.l.b16 %v461
        %v1320 = vunpack.c.h.b16 %v461
        %v1321 = vunpack.c.l.b16 %v462
        %v1322 = vunpack.c.h.b16 %v462
        %v1323 = vunpack.c.l.b16 %v463
        %v1324 = vunpack.c.l.b16 %v464
        %v1325 = vunpack.c.h.b16 %v464
        %v1326 = vunpack.c.l.b16 %v465
        %v1327 = vunpack.c.h.b16 %v465
        %v1328 = vunpack.c.l.b16 %v466
        %v1329 = vunpack.c.h.b16 %v466
        %v1330 = vunpack.c.l.b16 %v467
        %v1331 = vunpack.c.h.b16 %v467
        %v1332 = vunpack.c.l.b16 %v468
        %v1333 = vunpack.c.l.b16 %v469
        %v1334 = vunpack.c.h.b16 %v469
        %v1335 = vunpack.c.l.b16 %v470
        %v1336 = vunpack.c.h.b16 %v470
        %v1337 = vunpack.c.l.b16 %v471
        %v1338 = vunpack.c.h.b16 %v471
        %v1339 = vunpack.c.l.b16 %v472
        %v1340 = vunpack.c.h.b16 %v472
        %v1341 = vunpack.c.l.b16 %v473
        %v1342 = vunpack.c.l.b16 %v474
        %v1343 = vunpack.c.h.b16 %v474
        %v1344 = vunpack.c.l.b16 %v475
        %v1345 = vunpack.c.h.b16 %v475
        %v1346 = vunpack.c.l.b16 %v476
        %v1347 = vunpack.c.h.b16 %v476
        %v1348 = vunpack.c.l.b16 %v477
        %v1349 = vunpack.c.h.b16 %v477
        %v1350 = vunpack.c.l.b16 %v478
        %v1351 = vunpack.c.l.b16 %v479
        %v1352 = vunpack.c.h.b16 %v479
        %v1353 = vunpack.c.l.b16 %v480
        %v1354 = vunpack.c.h.b16 %v480
        %v1355 = vunpack.c.l.b16 %v481
        %v1356 = vunpack.c.h.b16 %v481
        %v1357 = vunpack.c.l.b16 %v482
        %v1358 = vunpack.c.h.b16 %v482
        %v1359 = vunpack.c.l.b16 %v483
        %v1360 = vunpack.c.l.b16 %v484
        %v1361 = vunpack.c.h.b16 %v484
        %v1362 = vunpack.c.l.b16 %v485
        %v1363 = vunpack.c.h.b16 %v485
        %v1364 = vunpack.c.l.b16 %v486
        %v1365 = vunpack.c.h.b16 %v486
        %v1366 = vunpack.c.l.b16 %v487
        %v1367 = vunpack.c.h.b16 %v487
        %v1368 = vunpack.c.l.b16 %v488
        %v1369 = vunpack.c.l.b16 %v489
        %v1370 = vunpack.c.h.b16 %v489
        %v1371 = vunpack.c.l.b16 %v490
        %v1372 = vunpack.c.h.b16 %v490
        %v1373 = vunpack.c.l.b16 %v491
        %v1374 = vunpack.c.h.b16 %v491
        %v1375 = vunpack.c.l.b16 %v492
        %v1376 = vunpack.c.h.b16 %v492
        %v1377 = vunpack.c.l.b16 %v493
        %v1378 = vunpack.c.l.b16 %v494
        %v1379 = vunpack.c.h.b16 %v494
        %v1380 = vunpack.c.l.b16 %v495
        %v1381 = vunpack.c.h.b16 %v495
        %v1382 = vunpack.c.l.b16 %v496
        %v1383 = vunpack.c.h.b16 %v496
        %v1384 = vunpack.c.l.b16 %v497
        %v1385 = vunpack.c.h.b16 %v497
        %v1386 = vunpack.c.l.b16 %v498
        %v1387 = vunpack.c.l.b16 %v499
        %v1388 = vunpack.c.h.b16 %v499
        %v1389 = vunpack.c.l.b16 %v500
        %v1390 = vunpack.c.h.b16 %v500
        %v1391 = vunpack.c.l.b16 %v501
        %v1392 = vunpack.c.h.b16 %v501
        %v1393 = vunpack.c.l.b16 %v502
        %v1394 = vunpack.c.h.b16 %v502
        %v1395 = vunpack.c.l.b16 %v503
        %v1396 = vunpack.c.l.b16 %v504
        %v1397 = vunpack.c.h.b16 %v504
        %v1398 = vunpack.c.l.b16 %v505
        %v1399 = vunpack.c.h.b16 %v505
        %v1400 = vunpack.c.l.b16 %v506
        %v1401 = vunpack.c.h.b16 %v506
        %v1402 = vunpack.c.l.b16 %v507
        %v1403 = vunpack.c.h.b16 %v507
        %v1404 = vunpack.c.l.b16 %v508
        %v1405 = vunpack.c.l.b16 %v509
        %v1406 = vunpack.c.h.b16 %v509
        %v1407 = vunpack.c.l.b16 %v510
        %v1408 = vunpack.c.h.b16 %v510
        %v1409 = vunpack.c.l.b16 %v511
        %v1410 = vunpack.c.h.b16 %v511
        %v1411 = vunpack.c.l.b16 %v512
        %v1412 = vunpack.c.h.b16 %v512
        %v1413 = vunpack.c.l.b16 %v513
        %v1414 = vunpack.c.l.b16 %v514
        %v1415 = vunpack.c.h.b16 %v514
        %v1416 = vunpack.c.l.b16 %v515
        %v1417 = vunpack.c.h.b16 %v515
        %v1418 = vunpack.c.l.b16 %v516
        %v1419 = vunpack.c.h.b16 %v516
        %v1420 = vunpack.c.l.b16 %v517
        %v1421 = vunpack.c.h.b16 %v517
        %v1422 = vunpack.c.l.b16 %v518
        %v1423 = vunpack.c.l.b16 %v519
        %v1424 = vunpack.c.h.b16 %v519
        %v1425 = vunpack.c.l.b16 %v520
        %v1426 = vunpack.c.h.b16 %v520
        %v1427 = vunpack.c.l.b16 %v521
        %v1428 = vunpack.c.h.b16 %v521
        %v1429 = vunpack.c.l.b16 %v522
        %v1430 = vunpack.c.h.b16 %v522
        %v1431 = vunpack.c.l.b16 %v523
        %v1432 = vunpack.c.l.b16 %v524
        %v1433 = vunpack.c.h.b16 %v524
        %v1434 = vunpack.c.l.b16 %v525
        %v1435 = vunpack.c.h.b16 %v525
        %v1436 = vunpack.c.l.b16 %v526
        %v1437 = vunpack.c.h.b16 %v526
        %v1438 = vunpack.c.l.b16 %v527
        %v1439 = vunpack.c.h.b16 %v527
        %v1440 = vunpack.c.l.b16 %v528
        %v1441 = vpack.c.b16 %v1018, %v1009
        %v1442 = vpack.c.b16 %v1019, %v1010
        %v1443 = vpack.c.b16 %v1020, %v1011
        %v1444 = vpack.c.b16 %v1021, %v1012
        %v1445 = vpack.c.b16 %v1022, %v1013
        %v1446 = vpack.c.b16 %v1023, %v1014
        %v1447 = vpack.c.b16 %v1024, %v1015
        %v1448 = vpack.c.b16 %v1025, %v1016
        %v1449 = vpack.c.b16 %v1026, %v1017
        %v1450 = vpack.c.b16 %v1036, %v1027
        %v1451 = vpack.c.b16 %v1037, %v1028
        %v1452 = vpack.c.b16 %v1038, %v1029
        %v1453 = vpack.c.b16 %v1039, %v1030
        %v1454 = vpack.c.b16 %v1040, %v1031
        %v1455 = vpack.c.b16 %v1041, %v1032
        %v1456 = vpack.c.b16 %v1042, %v1033
        %v1457 = vpack.c.b16 %v1043, %v1034
        %v1458 = vpack.c.b16 %v1044, %v1035
        %v1459 = vpack.c.b16 %v1054, %v1045
        %v1460 = vpack.c.b16 %v1055, %v1046
        %v1461 = vpack.c.b16 %v1056, %v1047
        %v1462 = vpack.c.b16 %v1057, %v1048
        %v1463 = vpack.c.b16 %v1058, %v1049
        %v1464 = vpack.c.b16 %v1059, %v1050
        %v1465 = vpack.c.b16 %v1060, %v1051
        %v1466 = vpack.c.b16 %v1061, %v1052
        %v1467 = vpack.c.b16 %v1062, %v1053
        %v1468 = vpack.c.b16 %v1072, %v1063
        %v1469 = vpack.c.b16 %v1073, %v1064
        %v1470 = vpack.c.b16 %v1074, %v1065
        %v1471 = vpack.c.b16 %v1075, %v1066
        %v1472 = vpack.c.b16 %v1076, %v1067
        %v1473 = vpack.c.b16 %v1077, %v1068
        %v1474 = vpack.c.b16 %v1078, %v1069
        %v1475 = vpack.c.b16 %v1079, %v1070
        %v1476 = vpack.c.b16 %v1080, %v1071
        %v1477 = vpack.c.b16 %v1090, %v1081
        %v1478 = vpack.c.b16 %v1091, %v1082
        %v1479 = vpack.c.b16 %v1092, %v1083
        %v1480 = vpack.c.b16 %v1093, %v1084
        %v1481 = vpack.c.b16 %v1094, %v1085
        %v1482 = vpack.c.b16 %v1095, %v1086
        %v1483 = vpack.c.b16 %v1096, %v1087
        %v1484 = vpack.c.b16 %v1097, %v1088
        %v1485 = vpack.c.b16 %v1098, %v1089
        %v1486 = vpack.c.b16 %v1108, %v1099
        %v1487 = vpack.c.b16 %v1109, %v1100
        %v1488 = vpack.c.b16 %v1110, %v1101
        %v1489 = vpack.c.b16 %v1111, %v1102
        %v1490 = vpack.c.b16 %v1112, %v1103
        %v1491 = vpack.c.b16 %v1113, %v1104
        %v1492 = vpack.c.b16 %v1114, %v1105
        %v1493 = vpack.c.b16 %v1115, %v1106
        %v1494 = vpack.c.b16 %v1116, %v1107
        %v1495 = vpack.c.b16 %v1126, %v1117
        %v1496 = vpack.c.b16 %v1127, %v1118
        %v1497 = vpack.c.b16 %v1128, %v1119
        %v1498 = vpack.c.b16 %v1129, %v1120
        %v1499 = vpack.c.b16 %v1130, %v1121
        %v1500 = vpack.c.b16 %v1131, %v1122
        %v1501 = vpack.c.b16 %v1132, %v1123
        %v1502 = vpack.c.b16 %v1133, %v1124
        %v1503 = vpack.c.b16 %v1134, %v1125
        %v1504 = vpack.c.b16 %v1144, %v1135
        %v1505 = vpack.c.b16 %v1145, %v1136
        %v1506 = vpack.c.b16 %v1146, %v1137
        %v1507 = vpack.c.b16 %v1147, %v1138
        %v1508 = vpack.c.b16 %v1148, %v1139
        %v1509 = vpack.c.b16 %v1149, %v1140
        %v1510 = vpack.c.b16 %v1150, %v1141
        %v1511 = vpack.c.b16 %v1151, %v1142
        %v1512 = vpack.c.b16 %v1152, %v1143
        %v1513 = vpack.c.b16 %v1162, %v1153
        %v1514 = vpack.c.b16 %v1163, %v1154
        %v1515 = vpack.c.b16 %v1164, %v1155
        %v1516 = vpack.c.b16 %v1165, %v1156
        %v1517 = vpack.c.b16 %v1166, %v1157
        %v1518 = vpack.c.b16 %v1167, %v1158
        %v1519 = vpack.c.b16 %v1168, %v1159
        %v1520 = vpack.c.b16 %v1169, %v1160
        %v1521 = vpack.c.b16 %v1170, %v1161
        %v1522 = vpack.c.b16 %v1180, %v1171
        %v1523 = vpack.c.b16 %v1181, %v1172
        %v1524 = vpack.c.b16 %v1182, %v1173
        %v1525 = vpack.c.b16 %v1183, %v1174
        %v1526 = vpack.c.b16 %v1184, %v1175
        %v1527 = vpack.c.b16 %v1185, %v1176
        %v1528 = vpack.c.b16 %v1186, %v1177
        %v1529 = vpack.c.b16 %v1187, %v1178
        %v1530 = vpack.c.b16 %v1188, %v1179
        %v1531 = vpack.c.b16 %v1198, %v1189
        %v1532 = vpack.c.b16 %v1199, %v1190
        %v1533 = vpack.c.b16 %v1200, %v1191
        %v1534 = vpack.c.b16 %v1201, %v1192
        %v1535 = vpack.c.b16 %v1202, %v1193
        %v1536 = vpack.c.b16 %v1203, %v1194
        %v1537 = vpack.c.b16 %v1204, %v1195
        %v1538 = vpack.c.b16 %v1205, %v1196
        %v1539 = vpack.c.b16 %v1206, %v1197
        %v1540 = vpack.c.b16 %v1216, %v1207
        %v1541 = vpack.c.b16 %v1217, %v1208
        %v1542 = vpack.c.b16 %v1218, %v1209
        %v1543 = vpack.c.b16 %v1219, %v1210
        %v1544 = vpack.c.b16 %v1220, %v1211
        %v1545 = vpack.c.b16 %v1221, %v1212
        %v1546 = vpack.c.b16 %v1222, %v1213
        %v1547 = vpack.c.b16 %v1223, %v1214
        %v1548 = vpack.c.b16 %v1224, %v1215
        %v1549 = vpack.c.b16 %v1234, %v1225
        %v1550 = vpack.c.b16 %v1235, %v1226
        %v1551 = vpack.c.b16 %v1236, %v1227
        %v1552 = vpack.c.b16 %v1237, %v1228
        %v1553 = vpack.c.b16 %v1238, %v1229
        %v1554 = vpack.c.b16 %v1239, %v1230
        %v1555 = vpack.c.b16 %v1240, %v1231
        %v1556 = vpack.c.b16 %v1241, %v1232
        %v1557 = vpack.c.b16 %v1242, %v1233
        %v1558 = vpack.c.b16 %v1252, %v1243
        %v1559 = vpack.c.b16 %v1253, %v1244
        %v1560 = vpack.c.b16 %v1254, %v1245
        %v1561 = vpack.c.b16 %v1255, %v1246
        %v1562 = vpack.c.b16 %v1256, %v1247
        %v1563 = vpack.c.b16 %v1257, %v1248
        %v1564 = vpack.c.b16 %v1258, %v1249
        %v1565 = vpack.c.b16 %v1259, %v1250
        %v1566 = vpack.c.b16 %v1260, %v1251
        %v1567 = vpack.c.b16 %v1270, %v1261
        %v1568 = vpack.c.b16 %v1271, %v1262
        %v1569 = vpack.c.b16 %v1272, %v1263
        %v1570 = vpack.c.b16 %v1273, %v1264
        %v1571 = vpack.c.b16 %v1274, %v1265
        %v1572 = vpack.c.b16 %v1275, %v1266
        %v1573 = vpack.c.b16 %v1276, %v1267
        %v1574 = vpack.c.b16 %v1277, %v1268
        %v1575 = vpack.c.b16 %v1278, %v1269
        %v1576 = vpack.c.b16 %v1288, %v1279
        %v1577 = vpack.c.b16 %v1289, %v1280
        %v1578 = vpack.c.b16 %v1290, %v1281
        %v1579 = vpack.c.b16 %v1291, %v1282
        %v1580 = vpack.c.b16 %v1292, %v1283
        %v1581 = vpack.c.b16 %v1293, %v1284
        %v1582 = vpack.c.b16 %v1294, %v1285
        %v1583 = vpack.c.b16 %v1295, %v1286
        %v1584 = vpack.c.b16 %v1296, %v1287
        %v1585 = vpack.c.b16 %v1306, %v1297
        %v1586 = vpack.c.b16 %v1307, %v1298
        %v1587 = vpack.c.b16 %v1308, %v1299
        %v1588 = vpack.c.b16 %v1309, %v1300
        %v1589 = vpack.c.b16 %v1310, %v1301
        %v1590 = vpack.c.b16 %v1311, %v1302
        %v1591 = vpack.c.b16 %v1312, %v1303
        %v1592 = vpack.c.b16 %v1313, %v1304
        %v1593 = vpack.c.b16 %v1314, %v1305
        %v1594 = vpack.c.b16 %v1324, %v1315
        %v1595 = vpack.c.b16 %v1325, %v1316
        %v1596 = vpack.c.b16 %v1326, %v1317
        %v1597 = vpack.c.b16 %v1327, %v1318
        %v1598 = vpack.c.b16 %v1328, %v1319
        %v1599 = vpack.c.b16 %v1329, %v1320
        %v1600 = vpack.c.b16 %v1330, %v1321
        %v1601 = vpack.c.b16 %v1331, %v1322
        %v1602 = vpack.c.b16 %v1332, %v1323
        %v1603 = vpack.c.b16 %v1342, %v1333
        %v1604 = vpack.c.b16 %v1343, %v1334
        %v1605 = vpack.c.b16 %v1344, %v1335
        %v1606 = vpack.c.b16 %v1345, %v1336
        %v1607 = vpack.c.b16 %v1346, %v1337
        %v1608 = vpack.c.b16 %v1347, %v1338
        %v1609 = vpack.c.b16 %v1348, %v1339
        %v1610 = vpack.c.b16 %v1349, %v1340
        %v1611 = vpack.c.b16 %v1350, %v1341
        %v1612 = vpack.c.b16 %v1360, %v1351
        %v1613 = vpack.c.b16 %v1361, %v1352
        %v1614 = vpack.c.b16 %v1362, %v1353
        %v1615 = vpack.c.b16 %v1363, %v1354
        %v1616 = vpack.c.b16 %v1364, %v1355
        %v1617 = vpack.c.b16 %v1365, %v1356
        %v1618 = vpack.c.b16 %v1366, %v1357
        %v1619 = vpack.c.b16 %v1367, %v1358
        %v1620 = vpack.c.b16 %v1368, %v1359
        %v1621 = vpack.c.b16 %v1378, %v1369
        %v1622 = vpack.c.b16 %v1379, %v1370
        %v1623 = vpack.c.b16 %v1380, %v1371
        %v1624 = vpack.c.b16 %v1381, %v1372
        %v1625 = vpack.c.b16 %v1382, %v1373
        %v1626 = vpack.c.b16 %v1383, %v1374
        %v1627 = vpack.c.b16 %v1384, %v1375
        %v1628 = vpack.c.b16 %v1385, %v1376
        %v1629 = vpack.c.b16 %v1386, %v1377
        %v1630 = vpack.c.b16 %v1396, %v1387
        %v1631 = vpack.c.b16 %v1397, %v1388
        %v1632 = vpack.c.b16 %v1398, %v1389
        %v1633 = vpack.c.b16 %v1399, %v1390
        %v1634 = vpack.c.b16 %v1400, %v1391
        %v1635 = vpack.c.b16 %v1401, %v1392
        %v1636 = vpack.c.b16 %v1402, %v1393
        %v1637 = vpack.c.b16 %v1403, %v1394
        %v1638 = vpack.c.b16 %v1404, %v1395
        %v1639 = vpack.c.b16 %v1414, %v1405
        %v1640 = vpack.c.b16 %v1415, %v1406
        %v1641 = vpack.c.b16 %v1416, %v1407
        %v1642 = vpack.c.b16 %v1417, %v1408
        %v1643 = vpack.c.b16 %v1418, %v1409
        %v1644 = vpack.c.b16 %v1419, %v1410
        %v1645 = vpack.c.b16 %v1420, %v1411
        %v1646 = vpack.c.b16 %v1421, %v1412
        %v1647 = vpack.c.b16 %v1422, %v1413
        %v1648 = vpack.c.b16 %v1432, %v1423
        %v1649 = vpack.c.b16 %v1433, %v1424
        %v1650 = vpack.c.b16 %v1434, %v1425
        %v1651 = vpack.c.b16 %v1435, %v1426
        %v1652 = vpack.c.b16 %v1436, %v1427
        %v1653 = vpack.c.b16 %v1437, %v1428
        %v1654 = vpack.c.b16 %v1438, %v1429
        %v1655 = vpack.c.b16 %v1439, %v1430
        %v1656 = vpack.c.b16 %v1440, %v1431
        %1873 = vmatprep.subr.bf16.mxu0 %v1442
        %1874 = vmatpush1.bf16.msra.mxu0 %v1441
        %1875 = vmatprep.subr.bf16.mxu0 %v1451
        %1876 = vmatpush1.bf16.msra.mxu0 %v1450
        %1877 = vmatprep.subr.bf16.mxu0 %v1460
        %1878 = vmatpush1.bf16.msra.mxu0 %v1459
        %1879 = vmatprep.subr.bf16.mxu0 %v1469
        %1880 = vmatpush1.bf16.msra.mxu0 %v1468
        %1881 = vmatprep.subr.bf16.mxu0 %v1478
        %1882 = vmatpush1.bf16.msra.mxu0 %v1477
        %1883 = vmatprep.subr.bf16.mxu0 %v1487
        %1884 = vmatpush1.bf16.msra.mxu0 %v1486
        %1885 = vmatprep.subr.bf16.mxu0 %v1496
        %1886 = vmatpush1.bf16.msra.mxu0 %v1495
        %1887 = vmatprep.subr.bf16.mxu0 %v1505
        %1888 = vmatpush1.bf16.msra.mxu0 %v1504
        %1889 = vmatprep.subr.bf16.mxu0 %v1514
        %1890 = vmatpush1.bf16.msra.mxu0 %v1513
        %1891 = vmatprep.subr.bf16.mxu0 %v1523
        %1892 = vmatpush1.bf16.msra.mxu0 %v1522
        %1893 = vmatprep.subr.bf16.mxu0 %v1532
        %1894 = vmatpush1.bf16.msra.mxu0 %v1531
        %1895 = vmatprep.subr.bf16.mxu0 %v1541
        %1896 = vmatpush1.bf16.msra.mxu0 %v1540
        %1897 = vmatprep.subr.bf16.mxu0 %v1550
        %1898 = vmatpush1.bf16.msra.mxu0 %v1549
        %1899 = vmatprep.subr.bf16.mxu0 %v1559
        %1900 = vmatpush1.bf16.msra.mxu0 %v1558
        %1901 = vmatprep.subr.bf16.mxu0 %v1568
        %1902 = vmatpush1.bf16.msra.mxu0 %v1567
        %1903 = vmatprep.subr.bf16.mxu0 %v1577
        %1904 = vmatpush1.bf16.msra.mxu0 %v1576
        %1905 = vmatprep.mubr.bf16.mxu0 %v680
        %1906 = vmatmul.mubr.bf16.gmra.mrb[0].mxu0 %v679
        %v1907 = vpop.f32.mrb[0].mxu0
        %v1908 = vadd.f32 0.0, %v1907
        %v1909 = vpop.f32.mrb[0].mxu0
        %v1910 = vadd.f32 0.0, %v1909
        %v1911 = vpop.f32.mrb[0].mxu0
        %v1912 = vadd.f32 0.0, %v1911
        %v1913 = vpop.f32.mrb[0].mxu0
        %v1914 = vadd.f32 0.0, %v1913
        %1915 = vmatprep.mubr.bf16.mxu0 %v683
        %1916 = vmatmul.mubr.bf16.gmra.mrb[0].mxu0 %v682
        %v1917 = vpop.f32.mrb[0].mxu0
        %v1918 = vadd.f32 0.0, %v1917
        %v1919 = vpop.f32.mrb[0].mxu0
        %v1920 = vadd.f32 0.0, %v1919
        %v1921 = vpop.f32.mrb[0].mxu0
        %v1922 = vadd.f32 0.0, %v1921
        %v1923 = vpop.f32.mrb[0].mxu0
        %v1924 = vadd.f32 0.0, %v1923
        %1925 = vmatprep.mubr.bf16.mxu0 %v686
        %1926 = vmatmul.mubr.bf16.gmra.mrb[0].mxu0 %v685
        %v1927 = vpop.f32.mrb[0].mxu0
        %v1928 = vadd.f32 0.0, %v1927
        %v1929 = vpop.f32.mrb[0].mxu0
        %v1930 = vadd.f32 0.0, %v1929
        %v1931 = vpop.f32.mrb[0].mxu0
        %v1932 = vadd.f32 0.0, %v1931
        %v1933 = vpop.f32.mrb[0].mxu0
        %v1934 = vadd.f32 0.0, %v1933
        %1935 = vmatprep.mubr.bf16.mxu0 %v689
        %1936 = vmatmul.mubr.bf16.gmra.mrb[0].mxu0 %v688
        %v1937 = vpop.f32.mrb[0].mxu0
        %v1938 = vadd.f32 0.0, %v1937
        %v1939 = vpop.f32.mrb[0].mxu0
        %v1940 = vadd.f32 0.0, %v1939
        %v1941 = vpop.f32.mrb[0].mxu0
        %v1942 = vadd.f32 0.0, %v1941
        %v1943 = vpop.f32.mrb[0].mxu0
        %v1944 = vadd.f32 0.0, %v1943
        %1945 = vmatprep.mubr.bf16.mxu0 %v692
        %1946 = vmatmul.mubr.bf16.gmra.mrb[0].mxu0 %v691
        %v1947 = vpop.f32.mrb[0].mxu0
        %v1948 = vadd.f32 0.0, %v1947
        %v1949 = vpop.f32.mrb[0].mxu0
        %v1950 = vadd.f32 0.0, %v1949
        %v1951 = vpop.f32.mrb[0].mxu0
        %v1952 = vadd.f32 0.0, %v1951
        %v1953 = vpop.f32.mrb[0].mxu0
        %v1954 = vadd.f32 0.0, %v1953
        %1955 = vmatprep.mubr.bf16.mxu0 %v695
        %1956 = vmatmul.mubr.bf16.gmra.mrb[0].mxu0 %v694
        %v1957 = vpop.f32.mrb[0].mxu0
        %v1958 = vadd.f32 0.0, %v1957
        %v1959 = vpop.f32.mrb[0].mxu0
        %v1960 = vadd.f32 0.0, %v1959
        %v1961 = vpop.f32.mrb[0].mxu0
        %v1962 = vadd.f32 0.0, %v1961
        %v1963 = vpop.f32.mrb[0].mxu0
        %v1964 = vadd.f32 0.0, %v1963
        %1965 = vmatprep.mubr.bf16.mxu0 %v698
        %1966 = vmatmul.mubr.bf16.gmra.mrb[0].mxu0 %v697
        %v1967 = vpop.f32.mrb[0].mxu0
        %v1968 = vadd.f32 0.0, %v1967
        %v1969 = vpop.f32.mrb[0].mxu0
        %v1970 = vadd.f32 0.0, %v1969
        %v1971 = vpop.f32.mrb[0].mxu0
        %v1972 = vadd.f32 0.0, %v1971
        %v1973 = vpop.f32.mrb[0].mxu0
        %v1974 = vadd.f32 0.0, %v1973
        %1975 = vmatprep.mubr.bf16.mxu0 %v701
        %1976 = vmatmul.mubr.bf16.gmra.mrb[0].mxu0 %v700
        %v1977 = vpop.f32.mrb[0].mxu0
        %v1978 = vadd.f32 0.0, %v1977
        %v1979 = vpop.f32.mrb[0].mxu0
        %v1980 = vadd.f32 0.0, %v1979
        %v1981 = vpop.f32.mrb[0].mxu0
        %v1982 = vadd.f32 0.0, %v1981
        %v1983 = vpop.f32.mrb[0].mxu0
        %v1984 = vadd.f32 0.0, %v1983
        %1985 = vmatprep.mubr.bf16.mxu0 %v704
        %1986 = vmatmul.mubr.bf16.gmra.mrb[0].mxu0 %v703
        %v1987 = vpop.f32.mrb[0].mxu0
        %v1988 = vadd.f32 0.0, %v1987
        %v1989 = vpop.f32.mrb[0].mxu0
        %v1990 = vadd.f32 0.0, %v1989
        %v1991 = vpop.f32.mrb[0].mxu0
        %v1992 = vadd.f32 0.0, %v1991
        %v1993 = vpop.f32.mrb[0].mxu0
        %v1994 = vadd.f32 0.0, %v1993
        %1995 = vmatprep.mubr.bf16.mxu0 %v707
        %1996 = vmatmul.mubr.bf16.gmra.mrb[0].mxu0 %v706
        %v1997 = vpop.f32.mrb[0].mxu0
        %v1998 = vadd.f32 0.0, %v1997
        %v1999 = vpop.f32.mrb[0].mxu0
        %v2000 = vadd.f32 0.0, %v1999
        %v2001 = vpop.f32.mrb[0].mxu0
        %v2002 = vadd.f32 0.0, %v2001
        %v2003 = vpop.f32.mrb[0].mxu0
        %v2004 = vadd.f32 0.0, %v2003
        %2005 = vmatprep.mubr.bf16.mxu0 %v710
        %2006 = vmatmul.mubr.bf16.gmra.mrb[0].mxu0 %v709
        %v2007 = vpop.f32.mrb[0].mxu0
        %v2008 = vadd.f32 0.0, %v2007
        %v2009 = vpop.f32.mrb[0].mxu0
        %v2010 = vadd.f32 0.0, %v2009
        %v2011 = vpop.f32.mrb[0].mxu0
        %v2012 = vadd.f32 0.0, %v2011
        %v2013 = vpop.f32.mrb[0].mxu0
        %v2014 = vadd.f32 0.0, %v2013
        %2015 = vmatprep.mubr.bf16.mxu0 %v713
        %2016 = vmatmul.mubr.bf16.gmra.mrb[0].mxu0 %v712
        %v2017 = vpop.f32.mrb[0].mxu0
        %v2018 = vadd.f32 0.0, %v2017
        %v2019 = vpop.f32.mrb[0].mxu0
        %v2020 = vadd.f32 0.0, %v2019
        %v2021 = vpop.f32.mrb[0].mxu0
        %v2022 = vadd.f32 0.0, %v2021
        %v2023 = vpop.f32.mrb[0].mxu0
        %v2024 = vadd.f32 0.0, %v2023
        %2025 = vmatprep.mubr.bf16.mxu0 %v716
        %2026 = vmatmul.mubr.bf16.gmra.mrb[0].mxu0 %v715
        %v2027 = vpop.f32.mrb[0].mxu0
        %v2028 = vadd.f32 0.0, %v2027
        %v2029 = vpop.f32.mrb[0].mxu0
        %v2030 = vadd.f32 0.0, %v2029
        %v2031 = vpop.f32.mrb[0].mxu0
        %v2032 = vadd.f32 0.0, %v2031
        %v2033 = vpop.f32.mrb[0].mxu0
        %v2034 = vadd.f32 0.0, %v2033
        %2035 = vmatprep.mubr.bf16.mxu0 %v719
        %2036 = vmatmul.mubr.bf16.gmra.mrb[0].mxu0 %v718
        %v2037 = vpop.f32.mrb[0].mxu0
        %v2038 = vadd.f32 0.0, %v2037
        %v2039 = vpop.f32.mrb[0].mxu0
        %v2040 = vadd.f32 0.0, %v2039
        %v2041 = vpop.f32.mrb[0].mxu0
        %v2042 = vadd.f32 0.0, %v2041
        %v2043 = vpop.f32.mrb[0].mxu0
        %v2044 = vadd.f32 0.0, %v2043
        %2045 = vmatprep.mubr.bf16.mxu0 %v722
        %2046 = vmatmul.mubr.bf16.gmra.mrb[0].mxu0 %v721
        %v2047 = vpop.f32.mrb[0].mxu0
        %v2048 = vadd.f32 0.0, %v2047
        %v2049 = vpop.f32.mrb[0].mxu0
        %v2050 = vadd.f32 0.0, %v2049
        %v2051 = vpop.f32.mrb[0].mxu0
        %v2052 = vadd.f32 0.0, %v2051
        %v2053 = vpop.f32.mrb[0].mxu0
        %v2054 = vadd.f32 0.0, %v2053
        %2055 = vdwg.mxu0
        %2056 = vmatprep.subr.bf16.mxu0 %v1586
        %2057 = vmatpush1.bf16.msra.mxu0 %v1585
        %2058 = vmatprep.subr.bf16.mxu0 %v1595
        %2059 = vmatpush1.bf16.msra.mxu0 %v1594
        %2060 = vmatprep.subr.bf16.mxu0 %v1604
        %2061 = vmatpush1.bf16.msra.mxu0 %v1603
        %2062 = vmatprep.subr.bf16.mxu0 %v1613
        %2063 = vmatpush1.bf16.msra.mxu0 %v1612
        %2064 = vmatprep.subr.bf16.mxu0 %v1622
        %2065 = vmatpush1.bf16.msra.mxu0 %v1621
        %2066 = vmatprep.subr.bf16.mxu0 %v1631
        %2067 = vmatpush1.bf16.msra.mxu0 %v1630
        %2068 = vmatprep.subr.bf16.mxu0 %v1640
        %2069 = vmatpush1.bf16.msra.mxu0 %v1639
        %2070 = vmatprep.subr.bf16.mxu0 %v1649
        %2071 = vmatpush1.bf16.msra.mxu0 %v1648
        %2072 = vmatprep.subr.bf16.mxu0 0
        %2073 = vmatpush1.bf16.msra.mxu0 0
        %2074 = vmatprep.subr.bf16.mxu0 0
        %2075 = vmatpush1.bf16.msra.mxu0 0
        %2076 = vmatprep.subr.bf16.mxu0 0
        %2077 = vmatpush1.bf16.msra.mxu0 0
        %2078 = vmatprep.subr.bf16.mxu0 0
        %2079 = vmatpush1.bf16.msra.mxu0 0
        %2080 = vmatprep.subr.bf16.mxu0 0
        %2081 = vmatpush1.bf16.msra.mxu0 0
        %2082 = vmatprep.subr.bf16.mxu0 0
        %2083 = vmatpush1.bf16.msra.mxu0 0
        %2084 = vmatprep.subr.bf16.mxu0 0
        %2085 = vmatpush1.bf16.msra.mxu0 0
        %2086 = vmatprep.subr.bf16.mxu0 0
        %2087 = vmatpush1.bf16.msra.mxu0 0
        %2088 = vmatprep.mubr.bf16.mxu0 0
        %2089 = vmatmul.mubr.bf16.gmra.mrb[0].mxu0 %v681
        %v2090 = vpop.f32.mrb[0].mxu0
        %v2091 = vadd.f32 %v1908, %v2090
        %v2092 = vpop.f32.mrb[0].mxu0
        %v2093 = vadd.f32 %v1910, %v2092
        %v2094 = vpop.f32.mrb[0].mxu0
        %v2095 = vadd.f32 %v1912, %v2094
        %v2096 = vpop.f32.mrb[0].mxu0
        %v2097 = vadd.f32 %v1914, %v2096
        %2098 = vmatprep.mubr.bf16.mxu0 0
        %2099 = vmatmul.mubr.bf16.gmra.mrb[0].mxu0 %v684
        %v2100 = vpop.f32.mrb[0].mxu0
        %v2101 = vadd.f32 %v1918, %v2100
        %v2102 = vpop.f32.mrb[0].mxu0
        %v2103 = vadd.f32 %v1920, %v2102
        %v2104 = vpop.f32.mrb[0].mxu0
        %v2105 = vadd.f32 %v1922, %v2104
        %v2106 = vpop.f32.mrb[0].mxu0
        %v2107 = vadd.f32 %v1924, %v2106
        %2108 = vmatprep.mubr.bf16.mxu0 0
        %2109 = vmatmul.mubr.bf16.gmra.mrb[0].mxu0 %v687
        %v2110 = vpop.f32.mrb[0].mxu0
        %v2111 = vadd.f32 %v1928, %v2110
        %v2112 = vpop.f32.mrb[0].mxu0
        %v2113 = vadd.f32 %v1930, %v2112
        %v2114 = vpop.f32.mrb[0].mxu0
        %v2115 = vadd.f32 %v1932, %v2114
        %v2116 = vpop.f32.mrb[0].mxu0
        %v2117 = vadd.f32 %v1934, %v2116
        %2118 = vmatprep.mubr.bf16.mxu0 0
        %2119 = vmatmul.mubr.bf16.gmra.mrb[0].mxu0 %v690
        %v2120 = vpop.f32.mrb[0].mxu0
        %v2121 = vadd.f32 %v1938, %v2120
        %v2122 = vpop.f32.mrb[0].mxu0
        %v2123 = vadd.f32 %v1940, %v2122
        %v2124 = vpop.f32.mrb[0].mxu0
        %v2125 = vadd.f32 %v1942, %v2124
        %v2126 = vpop.f32.mrb[0].mxu0
        %v2127 = vadd.f32 %v1944, %v2126
        %2128 = vmatprep.mubr.bf16.mxu0 0
        %2129 = vmatmul.mubr.bf16.gmra.mrb[0].mxu0 %v693
        %v2130 = vpop.f32.mrb[0].mxu0
        %v2131 = vadd.f32 %v1948, %v2130
        %v2132 = vpop.f32.mrb[0].mxu0
        %v2133 = vadd.f32 %v1950, %v2132
        %v2134 = vpop.f32.mrb[0].mxu0
        %v2135 = vadd.f32 %v1952, %v2134
        %v2136 = vpop.f32.mrb[0].mxu0
        %v2137 = vadd.f32 %v1954, %v2136
        %2138 = vmatprep.mubr.bf16.mxu0 0
        %2139 = vmatmul.mubr.bf16.gmra.mrb[0].mxu0 %v696
        %v2140 = vpop.f32.mrb[0].mxu0
        %v2141 = vadd.f32 %v1958, %v2140
        %v2142 = vpop.f32.mrb[0].mxu0
        %v2143 = vadd.f32 %v1960, %v2142
        %v2144 = vpop.f32.mrb[0].mxu0
        %v2145 = vadd.f32 %v1962, %v2144
        %v2146 = vpop.f32.mrb[0].mxu0
        %v2147 = vadd.f32 %v1964, %v2146
        %2148 = vmatprep.mubr.bf16.mxu0 0
        %2149 = vmatmul.mubr.bf16.gmra.mrb[0].mxu0 %v699
        %v2150 = vpop.f32.mrb[0].mxu0
        %v2151 = vadd.f32 %v1968, %v2150
        %v2152 = vpop.f32.mrb[0].mxu0
        %v2153 = vadd.f32 %v1970, %v2152
        %v2154 = vpop.f32.mrb[0].mxu0
        %v2155 = vadd.f32 %v1972, %v2154
        %v2156 = vpop.f32.mrb[0].mxu0
        %v2157 = vadd.f32 %v1974, %v2156
        %2158 = vmatprep.mubr.bf16.mxu0 0
        %2159 = vmatmul.mubr.bf16.gmra.mrb[0].mxu0 %v702
        %v2160 = vpop.f32.mrb[0].mxu0
        %v2161 = vadd.f32 %v1978, %v2160
        %v2162 = vpop.f32.mrb[0].mxu0
        %v2163 = vadd.f32 %v1980, %v2162
        %v2164 = vpop.f32.mrb[0].mxu0
        %v2165 = vadd.f32 %v1982, %v2164
        %v2166 = vpop.f32.mrb[0].mxu0
        %v2167 = vadd.f32 %v1984, %v2166
        %2168 = vmatprep.mubr.bf16.mxu0 0
        %2169 = vmatmul.mubr.bf16.gmra.mrb[0].mxu0 %v705
        %v2170 = vpop.f32.mrb[0].mxu0
        %v2171 = vadd.f32 %v1988, %v2170
        %v2172 = vpop.f32.mrb[0].mxu0
        %v2173 = vadd.f32 %v1990, %v2172
        %v2174 = vpop.f32.mrb[0].mxu0
        %v2175 = vadd.f32 %v1992, %v2174
        %v2176 = vpop.f32.mrb[0].mxu0
        %v2177 = vadd.f32 %v1994, %v2176
        %2178 = vmatprep.mubr.bf16.mxu0 0
        %2179 = vmatmul.mubr.bf16.gmra.mrb[0].mxu0 %v708
        %v2180 = vpop.f32.mrb[0].mxu0
        %v2181 = vadd.f32 %v1998, %v2180
        %v2182 = vpop.f32.mrb[0].mxu0
        %v2183 = vadd.f32 %v2000, %v2182
        %v2184 = vpop.f32.mrb[0].mxu0
        %v2185 = vadd.f32 %v2002, %v2184
        %v2186 = vpop.f32.mrb[0].mxu0
        %v2187 = vadd.f32 %v2004, %v2186
        %2188 = vmatprep.mubr.bf16.mxu0 0
        %2189 = vmatmul.mubr.bf16.gmra.mrb[0].mxu0 %v711
        %v2190 = vpop.f32.mrb[0].mxu0
        %v2191 = vadd.f32 %v2008, %v2190
        %v2192 = vpop.f32.mrb[0].mxu0
        %v2193 = vadd.f32 %v2010, %v2192
        %v2194 = vpop.f32.mrb[0].mxu0
        %v2195 = vadd.f32 %v2012, %v2194
        %v2196 = vpop.f32.mrb[0].mxu0
        %v2197 = vadd.f32 %v2014, %v2196
        %2198 = vmatprep.mubr.bf16.mxu0 0
        %2199 = vmatmul.mubr.bf16.gmra.mrb[0].mxu0 %v714
        %v2200 = vpop.f32.mrb[0].mxu0
        %v2201 = vadd.f32 %v2018, %v2200
        %v2202 = vpop.f32.mrb[0].mxu0
        %v2203 = vadd.f32 %v2020, %v2202
        %v2204 = vpop.f32.mrb[0].mxu0
        %v2205 = vadd.f32 %v2022, %v2204
        %v2206 = vpop.f32.mrb[0].mxu0
        %v2207 = vadd.f32 %v2024, %v2206
        %2208 = vmatprep.mubr.bf16.mxu0 0
        %2209 = vmatmul.mubr.bf16.gmra.mrb[0].mxu0 %v717
        %v2210 = vpop.f32.mrb[0].mxu0
        %v2211 = vadd.f32 %v2028, %v2210
        %v2212 = vpop.f32.mrb[0].mxu0
        %v2213 = vadd.f32 %v2030, %v2212
        %v2214 = vpop.f32.mrb[0].mxu0
        %v2215 = vadd.f32 %v2032, %v2214
        %v2216 = vpop.f32.mrb[0].mxu0
        %v2217 = vadd.f32 %v2034, %v2216
        %2218 = vmatprep.mubr.bf16.mxu0 0
        %2219 = vmatmul.mubr.bf16.gmra.mrb[0].mxu0 %v720
        %v2220 = vpop.f32.mrb[0].mxu0
        %v2221 = vadd.f32 %v2038, %v2220
        %v2222 = vpop.f32.mrb[0].mxu0
        %v2223 = vadd.f32 %v2040, %v2222
        %v2224 = vpop.f32.mrb[0].mxu0
        %v2225 = vadd.f32 %v2042, %v2224
        %v2226 = vpop.f32.mrb[0].mxu0
        %v2227 = vadd.f32 %v2044, %v2226
        %2228 = vmatprep.mubr.bf16.mxu0 0
        %2229 = vmatmul.mubr.bf16.gmra.mrb[0].mxu0 %v723
        %v2230 = vpop.f32.mrb[0].mxu0
        %v2231 = vadd.f32 %v2048, %v2230
        %v2232 = vpop.f32.mrb[0].mxu0
        %v2233 = vadd.f32 %v2050, %v2232
        %v2234 = vpop.f32.mrb[0].mxu0
        %v2235 = vadd.f32 %v2052, %v2234
        %v2236 = vpop.f32.mrb[0].mxu0
        %v2237 = vadd.f32 %v2054, %v2236
        %2238 = vdwg.mxu0
        %2239 = vmatprep.subr.bf16.mxu0 %v1444
        %2240 = vmatpush1.bf16.msra.mxu0 %v1443
        %2241 = vmatprep.subr.bf16.mxu0 %v1453
        %2242 = vmatpush1.bf16.msra.mxu0 %v1452
        %2243 = vmatprep.subr.bf16.mxu0 %v1462
        %2244 = vmatpush1.bf16.msra.mxu0 %v1461
        %2245 = vmatprep.subr.bf16.mxu0 %v1471
        %2246 = vmatpush1.bf16.msra.mxu0 %v1470
        %2247 = vmatprep.subr.bf16.mxu0 %v1480
        %2248 = vmatpush1.bf16.msra.mxu0 %v1479
        %2249 = vmatprep.subr.bf16.mxu0 %v1489
        %2250 = vmatpush1.bf16.msra.mxu0 %v1488
        %2251 = vmatprep.subr.bf16.mxu0 %v1498
        %2252 = vmatpush1.bf16.msra.mxu0 %v1497
        %2253 = vmatprep.subr.bf16.mxu0 %v1507
        %2254 = vmatpush1.bf16.msra.mxu0 %v1506
        %2255 = vmatprep.subr.bf16.mxu0 %v1516
        %2256 = vmatpush1.bf16.msra.mxu0 %v1515
        %2257 = vmatprep.subr.bf16.mxu0 %v1525
        %2258 = vmatpush1.bf16.msra.mxu0 %v1524
        %2259 = vmatprep.subr.bf16.mxu0 %v1534
        %2260 = vmatpush1.bf16.msra.mxu0 %v1533
        %2261 = vmatprep.subr.bf16.mxu0 %v1543
        %2262 = vmatpush1.bf16.msra.mxu0 %v1542
        %2263 = vmatprep.subr.bf16.mxu0 %v1552
        %2264 = vmatpush1.bf16.msra.mxu0 %v1551
        %2265 = vmatprep.subr.bf16.mxu0 %v1561
        %2266 = vmatpush1.bf16.msra.mxu0 %v1560
        %2267 = vmatprep.subr.bf16.mxu0 %v1570
        %2268 = vmatpush1.bf16.msra.mxu0 %v1569
        %2269 = vmatprep.subr.bf16.mxu0 %v1579
        %2270 = vmatpush1.bf16.msra.mxu0 %v1578
        %2271 = vmatprep.mubr.bf16.mxu0 %v680
        %2272 = vmatmul.mubr.bf16.gmra.mrb[0].mxu0 %v679
        %v2273 = vpop.f32.mrb[0].mxu0
        %v2274 = vadd.f32 0.0, %v2273
        %v2275 = vpop.f32.mrb[0].mxu0
        %v2276 = vadd.f32 0.0, %v2275
        %v2277 = vpop.f32.mrb[0].mxu0
        %v2278 = vadd.f32 0.0, %v2277
        %v2279 = vpop.f32.mrb[0].mxu0
        %v2280 = vadd.f32 0.0, %v2279
        %2281 = vmatprep.mubr.bf16.mxu0 %v683
        %2282 = vmatmul.mubr.bf16.gmra.mrb[0].mxu0 %v682
        %v2283 = vpop.f32.mrb[0].mxu0
        %v2284 = vadd.f32 0.0, %v2283
        %v2285 = vpop.f32.mrb[0].mxu0
        %v2286 = vadd.f32 0.0, %v2285
        %v2287 = vpop.f32.mrb[0].mxu0
        %v2288 = vadd.f32 0.0, %v2287
        %v2289 = vpop.f32.mrb[0].mxu0
        %v2290 = vadd.f32 0.0, %v2289
        %2291 = vmatprep.mubr.bf16.mxu0 %v686
        %2292 = vmatmul.mubr.bf16.gmra.mrb[0].mxu0 %v685
        %v2293 = vpop.f32.mrb[0].mxu0
        %v2294 = vadd.f32 0.0, %v2293
        %v2295 = vpop.f32.mrb[0].mxu0
        %v2296 = vadd.f32 0.0, %v2295
        %v2297 = vpop.f32.mrb[0].mxu0
        %v2298 = vadd.f32 0.0, %v2297
        %v2299 = vpop.f32.mrb[0].mxu0
        %v2300 = vadd.f32 0.0, %v2299
        %2301 = vmatprep.mubr.bf16.mxu0 %v689
        %2302 = vmatmul.mubr.bf16.gmra.mrb[0].mxu0 %v688
        %v2303 = vpop.f32.mrb[0].mxu0
        %v2304 = vadd.f32 0.0, %v2303
        %v2305 = vpop.f32.mrb[0].mxu0
        %v2306 = vadd.f32 0.0, %v2305
        %v2307 = vpop.f32.mrb[0].mxu0
        %v2308 = vadd.f32 0.0, %v2307
        %v2309 = vpop.f32.mrb[0].mxu0
        %v2310 = vadd.f32 0.0, %v2309
        %2311 = vmatprep.mubr.bf16.mxu0 %v692
        %2312 = vmatmul.mubr.bf16.gmra.mrb[0].mxu0 %v691
        %v2313 = vpop.f32.mrb[0].mxu0
        %v2314 = vadd.f32 0.0, %v2313
        %v2315 = vpop.f32.mrb[0].mxu0
        %v2316 = vadd.f32 0.0, %v2315
        %v2317 = vpop.f32.mrb[0].mxu0
        %v2318 = vadd.f32 0.0, %v2317
        %v2319 = vpop.f32.mrb[0].mxu0
        %v2320 = vadd.f32 0.0, %v2319
        %2321 = vmatprep.mubr.bf16.mxu0 %v695
        %2322 = vmatmul.mubr.bf16.gmra.mrb[0].mxu0 %v694
        %v2323 = vpop.f32.mrb[0].mxu0
        %v2324 = vadd.f32 0.0, %v2323
        %v2325 = vpop.f32.mrb[0].mxu0
        %v2326 = vadd.f32 0.0, %v2325
        %v2327 = vpop.f32.mrb[0].mxu0
        %v2328 = vadd.f32 0.0, %v2327
        %v2329 = vpop.f32.mrb[0].mxu0
        %v2330 = vadd.f32 0.0, %v2329
        %2331 = vmatprep.mubr.bf16.mxu0 %v698
        %2332 = vmatmul.mubr.bf16.gmra.mrb[0].mxu0 %v697
        %v2333 = vpop.f32.mrb[0].mxu0
        %v2334 = vadd.f32 0.0, %v2333
        %v2335 = vpop.f32.mrb[0].mxu0
        %v2336 = vadd.f32 0.0, %v2335
        %v2337 = vpop.f32.mrb[0].mxu0
        %v2338 = vadd.f32 0.0, %v2337
        %v2339 = vpop.f32.mrb[0].mxu0
        %v2340 = vadd.f32 0.0, %v2339
        %2341 = vmatprep.mubr.bf16.mxu0 %v701
        %2342 = vmatmul.mubr.bf16.gmra.mrb[0].mxu0 %v700
        %v2343 = vpop.f32.mrb[0].mxu0
        %v2344 = vadd.f32 0.0, %v2343
        %v2345 = vpop.f32.mrb[0].mxu0
        %v2346 = vadd.f32 0.0, %v2345
        %v2347 = vpop.f32.mrb[0].mxu0
        %v2348 = vadd.f32 0.0, %v2347
        %v2349 = vpop.f32.mrb[0].mxu0
        %v2350 = vadd.f32 0.0, %v2349
        %2351 = vmatprep.mubr.bf16.mxu0 %v704
        %2352 = vmatmul.mubr.bf16.gmra.mrb[0].mxu0 %v703
        %v2353 = vpop.f32.mrb[0].mxu0
        %v2354 = vadd.f32 0.0, %v2353
        %v2355 = vpop.f32.mrb[0].mxu0
        %v2356 = vadd.f32 0.0, %v2355
        %v2357 = vpop.f32.mrb[0].mxu0
        %v2358 = vadd.f32 0.0, %v2357
        %v2359 = vpop.f32.mrb[0].mxu0
        %v2360 = vadd.f32 0.0, %v2359
        %2361 = vmatprep.mubr.bf16.mxu0 %v707
        %2362 = vmatmul.mubr.bf16.gmra.mrb[0].mxu0 %v706
        %v2363 = vpop.f32.mrb[0].mxu0
        %v2364 = vadd.f32 0.0, %v2363
        %v2365 = vpop.f32.mrb[0].mxu0
        %v2366 = vadd.f32 0.0, %v2365
        %v2367 = vpop.f32.mrb[0].mxu0
        %v2368 = vadd.f32 0.0, %v2367
        %v2369 = vpop.f32.mrb[0].mxu0
        %v2370 = vadd.f32 0.0, %v2369
        %2371 = vmatprep.mubr.bf16.mxu0 %v710
        %2372 = vmatmul.mubr.bf16.gmra.mrb[0].mxu0 %v709
        %v2373 = vpop.f32.mrb[0].mxu0
        %v2374 = vadd.f32 0.0, %v2373
        %v2375 = vpop.f32.mrb[0].mxu0
        %v2376 = vadd.f32 0.0, %v2375
        %v2377 = vpop.f32.mrb[0].mxu0
        %v2378 = vadd.f32 0.0, %v2377
        %v2379 = vpop.f32.mrb[0].mxu0
        %v2380 = vadd.f32 0.0, %v2379
        %2381 = vmatprep.mubr.bf16.mxu0 %v713
        %2382 = vmatmul.mubr.bf16.gmra.mrb[0].mxu0 %v712
        %v2383 = vpop.f32.mrb[0].mxu0
        %v2384 = vadd.f32 0.0, %v2383
        %v2385 = vpop.f32.mrb[0].mxu0
        %v2386 = vadd.f32 0.0, %v2385
        %v2387 = vpop.f32.mrb[0].mxu0
        %v2388 = vadd.f32 0.0, %v2387
        %v2389 = vpop.f32.mrb[0].mxu0
        %v2390 = vadd.f32 0.0, %v2389
        %2391 = vmatprep.mubr.bf16.mxu0 %v716
        %2392 = vmatmul.mubr.bf16.gmra.mrb[0].mxu0 %v715
        %v2393 = vpop.f32.mrb[0].mxu0
        %v2394 = vadd.f32 0.0, %v2393
        %v2395 = vpop.f32.mrb[0].mxu0
        %v2396 = vadd.f32 0.0, %v2395
        %v2397 = vpop.f32.mrb[0].mxu0
        %v2398 = vadd.f32 0.0, %v2397
        %v2399 = vpop.f32.mrb[0].mxu0
        %v2400 = vadd.f32 0.0, %v2399
        %2401 = vmatprep.mubr.bf16.mxu0 %v719
        %2402 = vmatmul.mubr.bf16.gmra.mrb[0].mxu0 %v718
        %v2403 = vpop.f32.mrb[0].mxu0
        %v2404 = vadd.f32 0.0, %v2403
        %v2405 = vpop.f32.mrb[0].mxu0
        %v2406 = vadd.f32 0.0, %v2405
        %v2407 = vpop.f32.mrb[0].mxu0
        %v2408 = vadd.f32 0.0, %v2407
        %v2409 = vpop.f32.mrb[0].mxu0
        %v2410 = vadd.f32 0.0, %v2409
        %2411 = vmatprep.mubr.bf16.mxu0 %v722
        %2412 = vmatmul.mubr.bf16.gmra.mrb[0].mxu0 %v721
        %v2413 = vpop.f32.mrb[0].mxu0
        %v2414 = vadd.f32 0.0, %v2413
        %v2415 = vpop.f32.mrb[0].mxu0
        %v2416 = vadd.f32 0.0, %v2415
        %v2417 = vpop.f32.mrb[0].mxu0
        %v2418 = vadd.f32 0.0, %v2417
        %v2419 = vpop.f32.mrb[0].mxu0
        %v2420 = vadd.f32 0.0, %v2419
        %2421 = vdwg.mxu0
        %2422 = vmatprep.subr.bf16.mxu0 %v1588
        %2423 = vmatpush1.bf16.msra.mxu0 %v1587
        %2424 = vmatprep.subr.bf16.mxu0 %v1597
        %2425 = vmatpush1.bf16.msra.mxu0 %v1596
        %2426 = vmatprep.subr.bf16.mxu0 %v1606
        %2427 = vmatpush1.bf16.msra.mxu0 %v1605
        %2428 = vmatprep.subr.bf16.mxu0 %v1615
        %2429 = vmatpush1.bf16.msra.mxu0 %v1614
        %2430 = vmatprep.subr.bf16.mxu0 %v1624
        %2431 = vmatpush1.bf16.msra.mxu0 %v1623
        %2432 = vmatprep.subr.bf16.mxu0 %v1633
        %2433 = vmatpush1.bf16.msra.mxu0 %v1632
        %2434 = vmatprep.subr.bf16.mxu0 %v1642
        %2435 = vmatpush1.bf16.msra.mxu0 %v1641
        %2436 = vmatprep.subr.bf16.mxu0 %v1651
        %2437 = vmatpush1.bf16.msra.mxu0 %v1650
        %2438 = vmatprep.subr.bf16.mxu0 0
        %2439 = vmatpush1.bf16.msra.mxu0 0
        %2440 = vmatprep.subr.bf16.mxu0 0
        %2441 = vmatpush1.bf16.msra.mxu0 0
        %2442 = vmatprep.subr.bf16.mxu0 0
        %2443 = vmatpush1.bf16.msra.mxu0 0
        %2444 = vmatprep.subr.bf16.mxu0 0
        %2445 = vmatpush1.bf16.msra.mxu0 0
        %2446 = vmatprep.subr.bf16.mxu0 0
        %2447 = vmatpush1.bf16.msra.mxu0 0
        %2448 = vmatprep.subr.bf16.mxu0 0
        %2449 = vmatpush1.bf16.msra.mxu0 0
        %2450 = vmatprep.subr.bf16.mxu0 0
        %2451 = vmatpush1.bf16.msra.mxu0 0
        %2452 = vmatprep.subr.bf16.mxu0 0
        %2453 = vmatpush1.bf16.msra.mxu0 0
        %2454 = vmatprep.mubr.bf16.mxu0 0
        %2455 = vmatmul.mubr.bf16.gmra.mrb[0].mxu0 %v681
        %v2456 = vpop.f32.mrb[0].mxu0
        %v2457 = vadd.f32 %v2274, %v2456
        %v2458 = vpop.f32.mrb[0].mxu0
        %v2459 = vadd.f32 %v2276, %v2458
        %v2460 = vpop.f32.mrb[0].mxu0
        %v2461 = vadd.f32 %v2278, %v2460
        %v2462 = vpop.f32.mrb[0].mxu0
        %v2463 = vadd.f32 %v2280, %v2462
        %2464 = vmatprep.mubr.bf16.mxu0 0
        %2465 = vmatmul.mubr.bf16.gmra.mrb[0].mxu0 %v684
        %v2466 = vpop.f32.mrb[0].mxu0
        %v2467 = vadd.f32 %v2284, %v2466
        %v2468 = vpop.f32.mrb[0].mxu0
        %v2469 = vadd.f32 %v2286, %v2468
        %v2470 = vpop.f32.mrb[0].mxu0
        %v2471 = vadd.f32 %v2288, %v2470
        %v2472 = vpop.f32.mrb[0].mxu0
        %v2473 = vadd.f32 %v2290, %v2472
        %2474 = vmatprep.mubr.bf16.mxu0 0
        %2475 = vmatmul.mubr.bf16.gmra.mrb[0].mxu0 %v687
        %v2476 = vpop.f32.mrb[0].mxu0
        %v2477 = vadd.f32 %v2294, %v2476
        %v2478 = vpop.f32.mrb[0].mxu0
        %v2479 = vadd.f32 %v2296, %v2478
        %v2480 = vpop.f32.mrb[0].mxu0
        %v2481 = vadd.f32 %v2298, %v2480
        %v2482 = vpop.f32.mrb[0].mxu0
        %v2483 = vadd.f32 %v2300, %v2482
        %2484 = vmatprep.mubr.bf16.mxu0 0
        %2485 = vmatmul.mubr.bf16.gmra.mrb[0].mxu0 %v690
        %v2486 = vpop.f32.mrb[0].mxu0
        %v2487 = vadd.f32 %v2304, %v2486
        %v2488 = vpop.f32.mrb[0].mxu0
        %v2489 = vadd.f32 %v2306, %v2488
        %v2490 = vpop.f32.mrb[0].mxu0
        %v2491 = vadd.f32 %v2308, %v2490
        %v2492 = vpop.f32.mrb[0].mxu0
        %v2493 = vadd.f32 %v2310, %v2492
        %2494 = vmatprep.mubr.bf16.mxu0 0
        %2495 = vmatmul.mubr.bf16.gmra.mrb[0].mxu0 %v693
        %v2496 = vpop.f32.mrb[0].mxu0
        %v2497 = vadd.f32 %v2314, %v2496
        %v2498 = vpop.f32.mrb[0].mxu0
        %v2499 = vadd.f32 %v2316, %v2498
        %v2500 = vpop.f32.mrb[0].mxu0
        %v2501 = vadd.f32 %v2318, %v2500
        %v2502 = vpop.f32.mrb[0].mxu0
        %v2503 = vadd.f32 %v2320, %v2502
        %2504 = vmatprep.mubr.bf16.mxu0 0
        %2505 = vmatmul.mubr.bf16.gmra.mrb[0].mxu0 %v696
        %v2506 = vpop.f32.mrb[0].mxu0
        %v2507 = vadd.f32 %v2324, %v2506
        %v2508 = vpop.f32.mrb[0].mxu0
        %v2509 = vadd.f32 %v2326, %v2508
        %v2510 = vpop.f32.mrb[0].mxu0
        %v2511 = vadd.f32 %v2328, %v2510
        %v2512 = vpop.f32.mrb[0].mxu0
        %v2513 = vadd.f32 %v2330, %v2512
        %2514 = vmatprep.mubr.bf16.mxu0 0
        %2515 = vmatmul.mubr.bf16.gmra.mrb[0].mxu0 %v699
        %v2516 = vpop.f32.mrb[0].mxu0
        %v2517 = vadd.f32 %v2334, %v2516
        %v2518 = vpop.f32.mrb[0].mxu0
        %v2519 = vadd.f32 %v2336, %v2518
        %v2520 = vpop.f32.mrb[0].mxu0
        %v2521 = vadd.f32 %v2338, %v2520
        %v2522 = vpop.f32.mrb[0].mxu0
        %v2523 = vadd.f32 %v2340, %v2522
        %2524 = vmatprep.mubr.bf16.mxu0 0
        %2525 = vmatmul.mubr.bf16.gmra.mrb[0].mxu0 %v702
        %v2526 = vpop.f32.mrb[0].mxu0
        %v2527 = vadd.f32 %v2344, %v2526
        %v2528 = vpop.f32.mrb[0].mxu0
        %v2529 = vadd.f32 %v2346, %v2528
        %v2530 = vpop.f32.mrb[0].mxu0
        %v2531 = vadd.f32 %v2348, %v2530
        %v2532 = vpop.f32.mrb[0].mxu0
        %v2533 = vadd.f32 %v2350, %v2532
        %2534 = vmatprep.mubr.bf16.mxu0 0
        %2535 = vmatmul.mubr.bf16.gmra.mrb[0].mxu0 %v705
        %v2536 = vpop.f32.mrb[0].mxu0
        %v2537 = vadd.f32 %v2354, %v2536
        %v2538 = vpop.f32.mrb[0].mxu0
        %v2539 = vadd.f32 %v2356, %v2538
        %v2540 = vpop.f32.mrb[0].mxu0
        %v2541 = vadd.f32 %v2358, %v2540
        %v2542 = vpop.f32.mrb[0].mxu0
        %v2543 = vadd.f32 %v2360, %v2542
        %2544 = vmatprep.mubr.bf16.mxu0 0
        %2545 = vmatmul.mubr.bf16.gmra.mrb[0].mxu0 %v708
        %v2546 = vpop.f32.mrb[0].mxu0
        %v2547 = vadd.f32 %v2364, %v2546
        %v2548 = vpop.f32.mrb[0].mxu0
        %v2549 = vadd.f32 %v2366, %v2548
        %v2550 = vpop.f32.mrb[0].mxu0
        %v2551 = vadd.f32 %v2368, %v2550
        %v2552 = vpop.f32.mrb[0].mxu0
        %v2553 = vadd.f32 %v2370, %v2552
        %2554 = vmatprep.mubr.bf16.mxu0 0
        %2555 = vmatmul.mubr.bf16.gmra.mrb[0].mxu0 %v711
        %v2556 = vpop.f32.mrb[0].mxu0
        %v2557 = vadd.f32 %v2374, %v2556
        %v2558 = vpop.f32.mrb[0].mxu0
        %v2559 = vadd.f32 %v2376, %v2558
        %v2560 = vpop.f32.mrb[0].mxu0
        %v2561 = vadd.f32 %v2378, %v2560
        %v2562 = vpop.f32.mrb[0].mxu0
        %v2563 = vadd.f32 %v2380, %v2562
        %2564 = vmatprep.mubr.bf16.mxu0 0
        %2565 = vmatmul.mubr.bf16.gmra.mrb[0].mxu0 %v714
        %v2566 = vpop.f32.mrb[0].mxu0
        %v2567 = vadd.f32 %v2384, %v2566
        %v2568 = vpop.f32.mrb[0].mxu0
        %v2569 = vadd.f32 %v2386, %v2568
        %v2570 = vpop.f32.mrb[0].mxu0
        %v2571 = vadd.f32 %v2388, %v2570
        %v2572 = vpop.f32.mrb[0].mxu0
        %v2573 = vadd.f32 %v2390, %v2572
        %2574 = vmatprep.mubr.bf16.mxu0 0
        %2575 = vmatmul.mubr.bf16.gmra.mrb[0].mxu0 %v717
        %v2576 = vpop.f32.mrb[0].mxu0
        %v2577 = vadd.f32 %v2394, %v2576
        %v2578 = vpop.f32.mrb[0].mxu0
        %v2579 = vadd.f32 %v2396, %v2578
        %v2580 = vpop.f32.mrb[0].mxu0
        %v2581 = vadd.f32 %v2398, %v2580
        %v2582 = vpop.f32.mrb[0].mxu0
        %v2583 = vadd.f32 %v2400, %v2582
        %2584 = vmatprep.mubr.bf16.mxu0 0
        %2585 = vmatmul.mubr.bf16.gmra.mrb[0].mxu0 %v720
        %v2586 = vpop.f32.mrb[0].mxu0
        %v2587 = vadd.f32 %v2404, %v2586
        %v2588 = vpop.f32.mrb[0].mxu0
        %v2589 = vadd.f32 %v2406, %v2588
        %v2590 = vpop.f32.mrb[0].mxu0
        %v2591 = vadd.f32 %v2408, %v2590
        %v2592 = vpop.f32.mrb[0].mxu0
        %v2593 = vadd.f32 %v2410, %v2592
        %2594 = vmatprep.mubr.bf16.mxu0 0
        %2595 = vmatmul.mubr.bf16.gmra.mrb[0].mxu0 %v723
        %v2596 = vpop.f32.mrb[0].mxu0
        %v2597 = vadd.f32 %v2414, %v2596
        %v2598 = vpop.f32.mrb[0].mxu0
        %v2599 = vadd.f32 %v2416, %v2598
        %v2600 = vpop.f32.mrb[0].mxu0
        %v2601 = vadd.f32 %v2418, %v2600
        %v2602 = vpop.f32.mrb[0].mxu0
        %v2603 = vadd.f32 %v2420, %v2602
        %2604 = vdwg.mxu0
        %2605 = vmatprep.subr.bf16.mxu0 %v1446
        %2606 = vmatpush1.bf16.msra.mxu0 %v1445
        %2607 = vmatprep.subr.bf16.mxu0 %v1455
        %2608 = vmatpush1.bf16.msra.mxu0 %v1454
        %2609 = vmatprep.subr.bf16.mxu0 %v1464
        %2610 = vmatpush1.bf16.msra.mxu0 %v1463
        %2611 = vmatprep.subr.bf16.mxu0 %v1473
        %2612 = vmatpush1.bf16.msra.mxu0 %v1472
        %2613 = vmatprep.subr.bf16.mxu0 %v1482
        %2614 = vmatpush1.bf16.msra.mxu0 %v1481
        %2615 = vmatprep.subr.bf16.mxu0 %v1491
        %2616 = vmatpush1.bf16.msra.mxu0 %v1490
        %2617 = vmatprep.subr.bf16.mxu0 %v1500
        %2618 = vmatpush1.bf16.msra.mxu0 %v1499
        %2619 = vmatprep.subr.bf16.mxu0 %v1509
        %2620 = vmatpush1.bf16.msra.mxu0 %v1508
        %2621 = vmatprep.subr.bf16.mxu0 %v1518
        %2622 = vmatpush1.bf16.msra.mxu0 %v1517
        %2623 = vmatprep.subr.bf16.mxu0 %v1527
        %2624 = vmatpush1.bf16.msra.mxu0 %v1526
        %2625 = vmatprep.subr.bf16.mxu0 %v1536
        %2626 = vmatpush1.bf16.msra.mxu0 %v1535
        %2627 = vmatprep.subr.bf16.mxu0 %v1545
        %2628 = vmatpush1.bf16.msra.mxu0 %v1544
        %2629 = vmatprep.subr.bf16.mxu0 %v1554
        %2630 = vmatpush1.bf16.msra.mxu0 %v1553
        %2631 = vmatprep.subr.bf16.mxu0 %v1563
        %2632 = vmatpush1.bf16.msra.mxu0 %v1562
        %2633 = vmatprep.subr.bf16.mxu0 %v1572
        %2634 = vmatpush1.bf16.msra.mxu0 %v1571
        %2635 = vmatprep.subr.bf16.mxu0 %v1581
        %2636 = vmatpush1.bf16.msra.mxu0 %v1580
        %2637 = vmatprep.mubr.bf16.mxu0 %v680
        %2638 = vmatmul.mubr.bf16.gmra.mrb[0].mxu0 %v679
        %v2639 = vpop.f32.mrb[0].mxu0
        %v2640 = vadd.f32 0.0, %v2639
        %v2641 = vpop.f32.mrb[0].mxu0
        %v2642 = vadd.f32 0.0, %v2641
        %v2643 = vpop.f32.mrb[0].mxu0
        %v2644 = vadd.f32 0.0, %v2643
        %v2645 = vpop.f32.mrb[0].mxu0
        %v2646 = vadd.f32 0.0, %v2645
        %2647 = vmatprep.mubr.bf16.mxu0 %v683
        %2648 = vmatmul.mubr.bf16.gmra.mrb[0].mxu0 %v682
        %v2649 = vpop.f32.mrb[0].mxu0
        %v2650 = vadd.f32 0.0, %v2649
        %v2651 = vpop.f32.mrb[0].mxu0
        %v2652 = vadd.f32 0.0, %v2651
        %v2653 = vpop.f32.mrb[0].mxu0
        %v2654 = vadd.f32 0.0, %v2653
        %v2655 = vpop.f32.mrb[0].mxu0
        %v2656 = vadd.f32 0.0, %v2655
        %2657 = vmatprep.mubr.bf16.mxu0 %v686
        %2658 = vmatmul.mubr.bf16.gmra.mrb[0].mxu0 %v685
        %v2659 = vpop.f32.mrb[0].mxu0
        %v2660 = vadd.f32 0.0, %v2659
        %v2661 = vpop.f32.mrb[0].mxu0
        %v2662 = vadd.f32 0.0, %v2661
        %v2663 = vpop.f32.mrb[0].mxu0
        %v2664 = vadd.f32 0.0, %v2663
        %v2665 = vpop.f32.mrb[0].mxu0
        %v2666 = vadd.f32 0.0, %v2665
        %2667 = vmatprep.mubr.bf16.mxu0 %v689
        %2668 = vmatmul.mubr.bf16.gmra.mrb[0].mxu0 %v688
        %v2669 = vpop.f32.mrb[0].mxu0
        %v2670 = vadd.f32 0.0, %v2669
        %v2671 = vpop.f32.mrb[0].mxu0
        %v2672 = vadd.f32 0.0, %v2671
        %v2673 = vpop.f32.mrb[0].mxu0
        %v2674 = vadd.f32 0.0, %v2673
        %v2675 = vpop.f32.mrb[0].mxu0
        %v2676 = vadd.f32 0.0, %v2675
        %2677 = vmatprep.mubr.bf16.mxu0 %v692
        %2678 = vmatmul.mubr.bf16.gmra.mrb[0].mxu0 %v691
        %v2679 = vpop.f32.mrb[0].mxu0
        %v2680 = vadd.f32 0.0, %v2679
        %v2681 = vpop.f32.mrb[0].mxu0
        %v2682 = vadd.f32 0.0, %v2681
        %v2683 = vpop.f32.mrb[0].mxu0
        %v2684 = vadd.f32 0.0, %v2683
        %v2685 = vpop.f32.mrb[0].mxu0
        %v2686 = vadd.f32 0.0, %v2685
        %2687 = vmatprep.mubr.bf16.mxu0 %v695
        %2688 = vmatmul.mubr.bf16.gmra.mrb[0].mxu0 %v694
        %v2689 = vpop.f32.mrb[0].mxu0
        %v2690 = vadd.f32 0.0, %v2689
        %v2691 = vpop.f32.mrb[0].mxu0
        %v2692 = vadd.f32 0.0, %v2691
        %v2693 = vpop.f32.mrb[0].mxu0
        %v2694 = vadd.f32 0.0, %v2693
        %v2695 = vpop.f32.mrb[0].mxu0
        %v2696 = vadd.f32 0.0, %v2695
        %2697 = vmatprep.mubr.bf16.mxu0 %v698
        %2698 = vmatmul.mubr.bf16.gmra.mrb[0].mxu0 %v697
        %v2699 = vpop.f32.mrb[0].mxu0
        %v2700 = vadd.f32 0.0, %v2699
        %v2701 = vpop.f32.mrb[0].mxu0
        %v2702 = vadd.f32 0.0, %v2701
        %v2703 = vpop.f32.mrb[0].mxu0
        %v2704 = vadd.f32 0.0, %v2703
        %v2705 = vpop.f32.mrb[0].mxu0
        %v2706 = vadd.f32 0.0, %v2705
        %2707 = vmatprep.mubr.bf16.mxu0 %v701
        %2708 = vmatmul.mubr.bf16.gmra.mrb[0].mxu0 %v700
        %v2709 = vpop.f32.mrb[0].mxu0
        %v2710 = vadd.f32 0.0, %v2709
        %v2711 = vpop.f32.mrb[0].mxu0
        %v2712 = vadd.f32 0.0, %v2711
        %v2713 = vpop.f32.mrb[0].mxu0
        %v2714 = vadd.f32 0.0, %v2713
        %v2715 = vpop.f32.mrb[0].mxu0
        %v2716 = vadd.f32 0.0, %v2715
        %2717 = vmatprep.mubr.bf16.mxu0 %v704
        %2718 = vmatmul.mubr.bf16.gmra.mrb[0].mxu0 %v703
        %v2719 = vpop.f32.mrb[0].mxu0
        %v2720 = vadd.f32 0.0, %v2719
        %v2721 = vpop.f32.mrb[0].mxu0
        %v2722 = vadd.f32 0.0, %v2721
        %v2723 = vpop.f32.mrb[0].mxu0
        %v2724 = vadd.f32 0.0, %v2723
        %v2725 = vpop.f32.mrb[0].mxu0
        %v2726 = vadd.f32 0.0, %v2725
        %2727 = vmatprep.mubr.bf16.mxu0 %v707
        %2728 = vmatmul.mubr.bf16.gmra.mrb[0].mxu0 %v706
        %v2729 = vpop.f32.mrb[0].mxu0
        %v2730 = vadd.f32 0.0, %v2729
        %v2731 = vpop.f32.mrb[0].mxu0
        %v2732 = vadd.f32 0.0, %v2731
        %v2733 = vpop.f32.mrb[0].mxu0
        %v2734 = vadd.f32 0.0, %v2733
        %v2735 = vpop.f32.mrb[0].mxu0
        %v2736 = vadd.f32 0.0, %v2735
        %2737 = vmatprep.mubr.bf16.mxu0 %v710
        %2738 = vmatmul.mubr.bf16.gmra.mrb[0].mxu0 %v709
        %v2739 = vpop.f32.mrb[0].mxu0
        %v2740 = vadd.f32 0.0, %v2739
        %v2741 = vpop.f32.mrb[0].mxu0
        %v2742 = vadd.f32 0.0, %v2741
        %v2743 = vpop.f32.mrb[0].mxu0
        %v2744 = vadd.f32 0.0, %v2743
        %v2745 = vpop.f32.mrb[0].mxu0
        %v2746 = vadd.f32 0.0, %v2745
        %2747 = vmatprep.mubr.bf16.mxu0 %v713
        %2748 = vmatmul.mubr.bf16.gmra.mrb[0].mxu0 %v712
        %v2749 = vpop.f32.mrb[0].mxu0
        %v2750 = vadd.f32 0.0, %v2749
        %v2751 = vpop.f32.mrb[0].mxu0
        %v2752 = vadd.f32 0.0, %v2751
        %v2753 = vpop.f32.mrb[0].mxu0
        %v2754 = vadd.f32 0.0, %v2753
        %v2755 = vpop.f32.mrb[0].mxu0
        %v2756 = vadd.f32 0.0, %v2755
        %2757 = vmatprep.mubr.bf16.mxu0 %v716
        %2758 = vmatmul.mubr.bf16.gmra.mrb[0].mxu0 %v715
        %v2759 = vpop.f32.mrb[0].mxu0
        %v2760 = vadd.f32 0.0, %v2759
        %v2761 = vpop.f32.mrb[0].mxu0
        %v2762 = vadd.f32 0.0, %v2761
        %v2763 = vpop.f32.mrb[0].mxu0
        %v2764 = vadd.f32 0.0, %v2763
        %v2765 = vpop.f32.mrb[0].mxu0
        %v2766 = vadd.f32 0.0, %v2765
        %2767 = vmatprep.mubr.bf16.mxu0 %v719
        %2768 = vmatmul.mubr.bf16.gmra.mrb[0].mxu0 %v718
        %v2769 = vpop.f32.mrb[0].mxu0
        %v2770 = vadd.f32 0.0, %v2769
        %v2771 = vpop.f32.mrb[0].mxu0
        %v2772 = vadd.f32 0.0, %v2771
        %v2773 = vpop.f32.mrb[0].mxu0
        %v2774 = vadd.f32 0.0, %v2773
        %v2775 = vpop.f32.mrb[0].mxu0
        %v2776 = vadd.f32 0.0, %v2775
        %2777 = vmatprep.mubr.bf16.mxu0 %v722
        %2778 = vmatmul.mubr.bf16.gmra.mrb[0].mxu0 %v721
        %v2779 = vpop.f32.mrb[0].mxu0
        %v2780 = vadd.f32 0.0, %v2779
        %v2781 = vpop.f32.mrb[0].mxu0
        %v2782 = vadd.f32 0.0, %v2781
        %v2783 = vpop.f32.mrb[0].mxu0
        %v2784 = vadd.f32 0.0, %v2783
        %v2785 = vpop.f32.mrb[0].mxu0
        %v2786 = vadd.f32 0.0, %v2785
        %2787 = vdwg.mxu0
        %2788 = vmatprep.subr.bf16.mxu0 %v1590
        %2789 = vmatpush1.bf16.msra.mxu0 %v1589
        %2790 = vmatprep.subr.bf16.mxu0 %v1599
        %2791 = vmatpush1.bf16.msra.mxu0 %v1598
        %2792 = vmatprep.subr.bf16.mxu0 %v1608
        %2793 = vmatpush1.bf16.msra.mxu0 %v1607
        %2794 = vmatprep.subr.bf16.mxu0 %v1617
        %2795 = vmatpush1.bf16.msra.mxu0 %v1616
        %2796 = vmatprep.subr.bf16.mxu0 %v1626
        %2797 = vmatpush1.bf16.msra.mxu0 %v1625
        %2798 = vmatprep.subr.bf16.mxu0 %v1635
        %2799 = vmatpush1.bf16.msra.mxu0 %v1634
        %2800 = vmatprep.subr.bf16.mxu0 %v1644
        %2801 = vmatpush1.bf16.msra.mxu0 %v1643
        %2802 = vmatprep.subr.bf16.mxu0 %v1653
        %2803 = vmatpush1.bf16.msra.mxu0 %v1652
        %2804 = vmatprep.subr.bf16.mxu0 0
        %2805 = vmatpush1.bf16.msra.mxu0 0
        %2806 = vmatprep.subr.bf16.mxu0 0
        %2807 = vmatpush1.bf16.msra.mxu0 0
        %2808 = vmatprep.subr.bf16.mxu0 0
        %2809 = vmatpush1.bf16.msra.mxu0 0
        %2810 = vmatprep.subr.bf16.mxu0 0
        %2811 = vmatpush1.bf16.msra.mxu0 0
        %2812 = vmatprep.subr.bf16.mxu0 0
        %2813 = vmatpush1.bf16.msra.mxu0 0
        %2814 = vmatprep.subr.bf16.mxu0 0
        %2815 = vmatpush1.bf16.msra.mxu0 0
        %2816 = vmatprep.subr.bf16.mxu0 0
        %2817 = vmatpush1.bf16.msra.mxu0 0
        %2818 = vmatprep.subr.bf16.mxu0 0
        %2819 = vmatpush1.bf16.msra.mxu0 0
        %2820 = vmatprep.mubr.bf16.mxu0 0
        %2821 = vmatmul.mubr.bf16.gmra.mrb[0].mxu0 %v681
        %v2822 = vpop.f32.mrb[0].mxu0
        %v2823 = vadd.f32 %v2640, %v2822
        %v2824 = vpop.f32.mrb[0].mxu0
        %v2825 = vadd.f32 %v2642, %v2824
        %v2826 = vpop.f32.mrb[0].mxu0
        %v2827 = vadd.f32 %v2644, %v2826
        %v2828 = vpop.f32.mrb[0].mxu0
        %v2829 = vadd.f32 %v2646, %v2828
        %2830 = vmatprep.mubr.bf16.mxu0 0
        %2831 = vmatmul.mubr.bf16.gmra.mrb[0].mxu0 %v684
        %v2832 = vpop.f32.mrb[0].mxu0
        %v2833 = vadd.f32 %v2650, %v2832
        %v2834 = vpop.f32.mrb[0].mxu0
        %v2835 = vadd.f32 %v2652, %v2834
        %v2836 = vpop.f32.mrb[0].mxu0
        %v2837 = vadd.f32 %v2654, %v2836
        %v2838 = vpop.f32.mrb[0].mxu0
        %v2839 = vadd.f32 %v2656, %v2838
        %2840 = vmatprep.mubr.bf16.mxu0 0
        %2841 = vmatmul.mubr.bf16.gmra.mrb[0].mxu0 %v687
        %v2842 = vpop.f32.mrb[0].mxu0
        %v2843 = vadd.f32 %v2660, %v2842
        %v2844 = vpop.f32.mrb[0].mxu0
        %v2845 = vadd.f32 %v2662, %v2844
        %v2846 = vpop.f32.mrb[0].mxu0
        %v2847 = vadd.f32 %v2664, %v2846
        %v2848 = vpop.f32.mrb[0].mxu0
        %v2849 = vadd.f32 %v2666, %v2848
        %2850 = vmatprep.mubr.bf16.mxu0 0
        %2851 = vmatmul.mubr.bf16.gmra.mrb[0].mxu0 %v690
        %v2852 = vpop.f32.mrb[0].mxu0
        %v2853 = vadd.f32 %v2670, %v2852
        %v2854 = vpop.f32.mrb[0].mxu0
        %v2855 = vadd.f32 %v2672, %v2854
        %v2856 = vpop.f32.mrb[0].mxu0
        %v2857 = vadd.f32 %v2674, %v2856
        %v2858 = vpop.f32.mrb[0].mxu0
        %v2859 = vadd.f32 %v2676, %v2858
        %2860 = vmatprep.mubr.bf16.mxu0 0
        %2861 = vmatmul.mubr.bf16.gmra.mrb[0].mxu0 %v693
        %v2862 = vpop.f32.mrb[0].mxu0
        %v2863 = vadd.f32 %v2680, %v2862
        %v2864 = vpop.f32.mrb[0].mxu0
        %v2865 = vadd.f32 %v2682, %v2864
        %v2866 = vpop.f32.mrb[0].mxu0
        %v2867 = vadd.f32 %v2684, %v2866
        %v2868 = vpop.f32.mrb[0].mxu0
        %v2869 = vadd.f32 %v2686, %v2868
        %2870 = vmatprep.mubr.bf16.mxu0 0
        %2871 = vmatmul.mubr.bf16.gmra.mrb[0].mxu0 %v696
        %v2872 = vpop.f32.mrb[0].mxu0
        %v2873 = vadd.f32 %v2690, %v2872
        %v2874 = vpop.f32.mrb[0].mxu0
        %v2875 = vadd.f32 %v2692, %v2874
        %v2876 = vpop.f32.mrb[0].mxu0
        %v2877 = vadd.f32 %v2694, %v2876
        %v2878 = vpop.f32.mrb[0].mxu0
        %v2879 = vadd.f32 %v2696, %v2878
        %2880 = vmatprep.mubr.bf16.mxu0 0
        %2881 = vmatmul.mubr.bf16.gmra.mrb[0].mxu0 %v699
        %v2882 = vpop.f32.mrb[0].mxu0
        %v2883 = vadd.f32 %v2700, %v2882
        %v2884 = vpop.f32.mrb[0].mxu0
        %v2885 = vadd.f32 %v2702, %v2884
        %v2886 = vpop.f32.mrb[0].mxu0
        %v2887 = vadd.f32 %v2704, %v2886
        %v2888 = vpop.f32.mrb[0].mxu0
        %v2889 = vadd.f32 %v2706, %v2888
        %2890 = vmatprep.mubr.bf16.mxu0 0
        %2891 = vmatmul.mubr.bf16.gmra.mrb[0].mxu0 %v702
        %v2892 = vpop.f32.mrb[0].mxu0
        %v2893 = vadd.f32 %v2710, %v2892
        %v2894 = vpop.f32.mrb[0].mxu0
        %v2895 = vadd.f32 %v2712, %v2894
        %v2896 = vpop.f32.mrb[0].mxu0
        %v2897 = vadd.f32 %v2714, %v2896
        %v2898 = vpop.f32.mrb[0].mxu0
        %v2899 = vadd.f32 %v2716, %v2898
        %2900 = vmatprep.mubr.bf16.mxu0 0
        %2901 = vmatmul.mubr.bf16.gmra.mrb[0].mxu0 %v705
        %v2902 = vpop.f32.mrb[0].mxu0
        %v2903 = vadd.f32 %v2720, %v2902
        %v2904 = vpop.f32.mrb[0].mxu0
        %v2905 = vadd.f32 %v2722, %v2904
        %v2906 = vpop.f32.mrb[0].mxu0
        %v2907 = vadd.f32 %v2724, %v2906
        %v2908 = vpop.f32.mrb[0].mxu0
        %v2909 = vadd.f32 %v2726, %v2908
        %2910 = vmatprep.mubr.bf16.mxu0 0
        %2911 = vmatmul.mubr.bf16.gmra.mrb[0].mxu0 %v708
        %v2912 = vpop.f32.mrb[0].mxu0
        %v2913 = vadd.f32 %v2730, %v2912
        %v2914 = vpop.f32.mrb[0].mxu0
        %v2915 = vadd.f32 %v2732, %v2914
        %v2916 = vpop.f32.mrb[0].mxu0
        %v2917 = vadd.f32 %v2734, %v2916
        %v2918 = vpop.f32.mrb[0].mxu0
        %v2919 = vadd.f32 %v2736, %v2918
        %2920 = vmatprep.mubr.bf16.mxu0 0
        %2921 = vmatmul.mubr.bf16.gmra.mrb[0].mxu0 %v711
        %v2922 = vpop.f32.mrb[0].mxu0
        %v2923 = vadd.f32 %v2740, %v2922
        %v2924 = vpop.f32.mrb[0].mxu0
        %v2925 = vadd.f32 %v2742, %v2924
        %v2926 = vpop.f32.mrb[0].mxu0
        %v2927 = vadd.f32 %v2744, %v2926
        %v2928 = vpop.f32.mrb[0].mxu0
        %v2929 = vadd.f32 %v2746, %v2928
        %2930 = vmatprep.mubr.bf16.mxu0 0
        %2931 = vmatmul.mubr.bf16.gmra.mrb[0].mxu0 %v714
        %v2932 = vpop.f32.mrb[0].mxu0
        %v2933 = vadd.f32 %v2750, %v2932
        %v2934 = vpop.f32.mrb[0].mxu0
        %v2935 = vadd.f32 %v2752, %v2934
        %v2936 = vpop.f32.mrb[0].mxu0
        %v2937 = vadd.f32 %v2754, %v2936
        %v2938 = vpop.f32.mrb[0].mxu0
        %v2939 = vadd.f32 %v2756, %v2938
        %2940 = vmatprep.mubr.bf16.mxu0 0
        %2941 = vmatmul.mubr.bf16.gmra.mrb[0].mxu0 %v717
        %v2942 = vpop.f32.mrb[0].mxu0
        %v2943 = vadd.f32 %v2760, %v2942
        %v2944 = vpop.f32.mrb[0].mxu0
        %v2945 = vadd.f32 %v2762, %v2944
        %v2946 = vpop.f32.mrb[0].mxu0
        %v2947 = vadd.f32 %v2764, %v2946
        %v2948 = vpop.f32.mrb[0].mxu0
        %v2949 = vadd.f32 %v2766, %v2948
        %2950 = vmatprep.mubr.bf16.mxu0 0
        %2951 = vmatmul.mubr.bf16.gmra.mrb[0].mxu0 %v720
        %v2952 = vpop.f32.mrb[0].mxu0
        %v2953 = vadd.f32 %v2770, %v2952
        %v2954 = vpop.f32.mrb[0].mxu0
        %v2955 = vadd.f32 %v2772, %v2954
        %v2956 = vpop.f32.mrb[0].mxu0
        %v2957 = vadd.f32 %v2774, %v2956
        %v2958 = vpop.f32.mrb[0].mxu0
        %v2959 = vadd.f32 %v2776, %v2958
        %2960 = vmatprep.mubr.bf16.mxu0 0
        %2961 = vmatmul.mubr.bf16.gmra.mrb[0].mxu0 %v723
        %v2962 = vpop.f32.mrb[0].mxu0
        %v2963 = vadd.f32 %v2780, %v2962
        %v2964 = vpop.f32.mrb[0].mxu0
        %v2965 = vadd.f32 %v2782, %v2964
        %v2966 = vpop.f32.mrb[0].mxu0
        %v2967 = vadd.f32 %v2784, %v2966
        %v2968 = vpop.f32.mrb[0].mxu0
        %v2969 = vadd.f32 %v2786, %v2968
        %2970 = vdwg.mxu0
        %2971 = vmatprep.subr.bf16.mxu0 %v1448
        %2972 = vmatpush1.bf16.msra.mxu0 %v1447
        %2973 = vmatprep.subr.bf16.mxu0 %v1457
        %2974 = vmatpush1.bf16.msra.mxu0 %v1456
        %2975 = vmatprep.subr.bf16.mxu0 %v1466
        %2976 = vmatpush1.bf16.msra.mxu0 %v1465
        %2977 = vmatprep.subr.bf16.mxu0 %v1475
        %2978 = vmatpush1.bf16.msra.mxu0 %v1474
        %2979 = vmatprep.subr.bf16.mxu0 %v1484
        %2980 = vmatpush1.bf16.msra.mxu0 %v1483
        %2981 = vmatprep.subr.bf16.mxu0 %v1493
        %2982 = vmatpush1.bf16.msra.mxu0 %v1492
        %2983 = vmatprep.subr.bf16.mxu0 %v1502
        %2984 = vmatpush1.bf16.msra.mxu0 %v1501
        %2985 = vmatprep.subr.bf16.mxu0 %v1511
        %2986 = vmatpush1.bf16.msra.mxu0 %v1510
        %2987 = vmatprep.subr.bf16.mxu0 %v1520
        %2988 = vmatpush1.bf16.msra.mxu0 %v1519
        %2989 = vmatprep.subr.bf16.mxu0 %v1529
        %2990 = vmatpush1.bf16.msra.mxu0 %v1528
        %2991 = vmatprep.subr.bf16.mxu0 %v1538
        %2992 = vmatpush1.bf16.msra.mxu0 %v1537
        %2993 = vmatprep.subr.bf16.mxu0 %v1547
        %2994 = vmatpush1.bf16.msra.mxu0 %v1546
        %2995 = vmatprep.subr.bf16.mxu0 %v1556
        %2996 = vmatpush1.bf16.msra.mxu0 %v1555
        %2997 = vmatprep.subr.bf16.mxu0 %v1565
        %2998 = vmatpush1.bf16.msra.mxu0 %v1564
        %2999 = vmatprep.subr.bf16.mxu0 %v1574
        %3000 = vmatpush1.bf16.msra.mxu0 %v1573
        %3001 = vmatprep.subr.bf16.mxu0 %v1583
        %3002 = vmatpush1.bf16.msra.mxu0 %v1582
        %3003 = vmatprep.mubr.bf16.mxu0 %v680
        %3004 = vmatmul.mubr.bf16.gmra.mrb[0].mxu0 %v679
        %v3005 = vpop.f32.mrb[0].mxu0
        %v3006 = vadd.f32 0.0, %v3005
        %v3007 = vpop.f32.mrb[0].mxu0
        %v3008 = vadd.f32 0.0, %v3007
        %v3009 = vpop.f32.mrb[0].mxu0
        %v3010 = vadd.f32 0.0, %v3009
        %v3011 = vpop.f32.mrb[0].mxu0
        %v3012 = vadd.f32 0.0, %v3011
        %3013 = vmatprep.mubr.bf16.mxu0 %v683
        %3014 = vmatmul.mubr.bf16.gmra.mrb[0].mxu0 %v682
        %v3015 = vpop.f32.mrb[0].mxu0
        %v3016 = vadd.f32 0.0, %v3015
        %v3017 = vpop.f32.mrb[0].mxu0
        %v3018 = vadd.f32 0.0, %v3017
        %v3019 = vpop.f32.mrb[0].mxu0
        %v3020 = vadd.f32 0.0, %v3019
        %v3021 = vpop.f32.mrb[0].mxu0
        %v3022 = vadd.f32 0.0, %v3021
        %3023 = vmatprep.mubr.bf16.mxu0 %v686
        %3024 = vmatmul.mubr.bf16.gmra.mrb[0].mxu0 %v685
        %v3025 = vpop.f32.mrb[0].mxu0
        %v3026 = vadd.f32 0.0, %v3025
        %v3027 = vpop.f32.mrb[0].mxu0
        %v3028 = vadd.f32 0.0, %v3027
        %v3029 = vpop.f32.mrb[0].mxu0
        %v3030 = vadd.f32 0.0, %v3029
        %v3031 = vpop.f32.mrb[0].mxu0
        %v3032 = vadd.f32 0.0, %v3031
        %3033 = vmatprep.mubr.bf16.mxu0 %v689
        %3034 = vmatmul.mubr.bf16.gmra.mrb[0].mxu0 %v688
        %v3035 = vpop.f32.mrb[0].mxu0
        %v3036 = vadd.f32 0.0, %v3035
        %v3037 = vpop.f32.mrb[0].mxu0
        %v3038 = vadd.f32 0.0, %v3037
        %v3039 = vpop.f32.mrb[0].mxu0
        %v3040 = vadd.f32 0.0, %v3039
        %v3041 = vpop.f32.mrb[0].mxu0
        %v3042 = vadd.f32 0.0, %v3041
        %3043 = vmatprep.mubr.bf16.mxu0 %v692
        %3044 = vmatmul.mubr.bf16.gmra.mrb[0].mxu0 %v691
        %v3045 = vpop.f32.mrb[0].mxu0
        %v3046 = vadd.f32 0.0, %v3045
        %v3047 = vpop.f32.mrb[0].mxu0
        %v3048 = vadd.f32 0.0, %v3047
        %v3049 = vpop.f32.mrb[0].mxu0
        %v3050 = vadd.f32 0.0, %v3049
        %v3051 = vpop.f32.mrb[0].mxu0
        %v3052 = vadd.f32 0.0, %v3051
        %3053 = vmatprep.mubr.bf16.mxu0 %v695
        %3054 = vmatmul.mubr.bf16.gmra.mrb[0].mxu0 %v694
        %v3055 = vpop.f32.mrb[0].mxu0
        %v3056 = vadd.f32 0.0, %v3055
        %v3057 = vpop.f32.mrb[0].mxu0
        %v3058 = vadd.f32 0.0, %v3057
        %v3059 = vpop.f32.mrb[0].mxu0
        %v3060 = vadd.f32 0.0, %v3059
        %v3061 = vpop.f32.mrb[0].mxu0
        %v3062 = vadd.f32 0.0, %v3061
        %3063 = vmatprep.mubr.bf16.mxu0 %v698
        %3064 = vmatmul.mubr.bf16.gmra.mrb[0].mxu0 %v697
        %v3065 = vpop.f32.mrb[0].mxu0
        %v3066 = vadd.f32 0.0, %v3065
        %v3067 = vpop.f32.mrb[0].mxu0
        %v3068 = vadd.f32 0.0, %v3067
        %v3069 = vpop.f32.mrb[0].mxu0
        %v3070 = vadd.f32 0.0, %v3069
        %v3071 = vpop.f32.mrb[0].mxu0
        %v3072 = vadd.f32 0.0, %v3071
        %3073 = vmatprep.mubr.bf16.mxu0 %v701
        %3074 = vmatmul.mubr.bf16.gmra.mrb[0].mxu0 %v700
        %v3075 = vpop.f32.mrb[0].mxu0
        %v3076 = vadd.f32 0.0, %v3075
        %v3077 = vpop.f32.mrb[0].mxu0
        %v3078 = vadd.f32 0.0, %v3077
        %v3079 = vpop.f32.mrb[0].mxu0
        %v3080 = vadd.f32 0.0, %v3079
        %v3081 = vpop.f32.mrb[0].mxu0
        %v3082 = vadd.f32 0.0, %v3081
        %3083 = vmatprep.mubr.bf16.mxu0 %v704
        %3084 = vmatmul.mubr.bf16.gmra.mrb[0].mxu0 %v703
        %v3085 = vpop.f32.mrb[0].mxu0
        %v3086 = vadd.f32 0.0, %v3085
        %v3087 = vpop.f32.mrb[0].mxu0
        %v3088 = vadd.f32 0.0, %v3087
        %v3089 = vpop.f32.mrb[0].mxu0
        %v3090 = vadd.f32 0.0, %v3089
        %v3091 = vpop.f32.mrb[0].mxu0
        %v3092 = vadd.f32 0.0, %v3091
        %3093 = vmatprep.mubr.bf16.mxu0 %v707
        %3094 = vmatmul.mubr.bf16.gmra.mrb[0].mxu0 %v706
        %v3095 = vpop.f32.mrb[0].mxu0
        %v3096 = vadd.f32 0.0, %v3095
        %v3097 = vpop.f32.mrb[0].mxu0
        %v3098 = vadd.f32 0.0, %v3097
        %v3099 = vpop.f32.mrb[0].mxu0
        %v3100 = vadd.f32 0.0, %v3099
        %v3101 = vpop.f32.mrb[0].mxu0
        %v3102 = vadd.f32 0.0, %v3101
        %3103 = vmatprep.mubr.bf16.mxu0 %v710
        %3104 = vmatmul.mubr.bf16.gmra.mrb[0].mxu0 %v709
        %v3105 = vpop.f32.mrb[0].mxu0
        %v3106 = vadd.f32 0.0, %v3105
        %v3107 = vpop.f32.mrb[0].mxu0
        %v3108 = vadd.f32 0.0, %v3107
        %v3109 = vpop.f32.mrb[0].mxu0
        %v3110 = vadd.f32 0.0, %v3109
        %v3111 = vpop.f32.mrb[0].mxu0
        %v3112 = vadd.f32 0.0, %v3111
        %3113 = vmatprep.mubr.bf16.mxu0 %v713
        %3114 = vmatmul.mubr.bf16.gmra.mrb[0].mxu0 %v712
        %v3115 = vpop.f32.mrb[0].mxu0
        %v3116 = vadd.f32 0.0, %v3115
        %v3117 = vpop.f32.mrb[0].mxu0
        %v3118 = vadd.f32 0.0, %v3117
        %v3119 = vpop.f32.mrb[0].mxu0
        %v3120 = vadd.f32 0.0, %v3119
        %v3121 = vpop.f32.mrb[0].mxu0
        %v3122 = vadd.f32 0.0, %v3121
        %3123 = vmatprep.mubr.bf16.mxu0 %v716
        %3124 = vmatmul.mubr.bf16.gmra.mrb[0].mxu0 %v715
        %v3125 = vpop.f32.mrb[0].mxu0
        %v3126 = vadd.f32 0.0, %v3125
        %v3127 = vpop.f32.mrb[0].mxu0
        %v3128 = vadd.f32 0.0, %v3127
        %v3129 = vpop.f32.mrb[0].mxu0
        %v3130 = vadd.f32 0.0, %v3129
        %v3131 = vpop.f32.mrb[0].mxu0
        %v3132 = vadd.f32 0.0, %v3131
        %3133 = vmatprep.mubr.bf16.mxu0 %v719
        %3134 = vmatmul.mubr.bf16.gmra.mrb[0].mxu0 %v718
        %v3135 = vpop.f32.mrb[0].mxu0
        %v3136 = vadd.f32 0.0, %v3135
        %v3137 = vpop.f32.mrb[0].mxu0
        %v3138 = vadd.f32 0.0, %v3137
        %v3139 = vpop.f32.mrb[0].mxu0
        %v3140 = vadd.f32 0.0, %v3139
        %v3141 = vpop.f32.mrb[0].mxu0
        %v3142 = vadd.f32 0.0, %v3141
        %3143 = vmatprep.mubr.bf16.mxu0 %v722
        %3144 = vmatmul.mubr.bf16.gmra.mrb[0].mxu0 %v721
        %v3145 = vpop.f32.mrb[0].mxu0
        %v3146 = vadd.f32 0.0, %v3145
        %v3147 = vpop.f32.mrb[0].mxu0
        %v3148 = vadd.f32 0.0, %v3147
        %v3149 = vpop.f32.mrb[0].mxu0
        %v3150 = vadd.f32 0.0, %v3149
        %v3151 = vpop.f32.mrb[0].mxu0
        %v3152 = vadd.f32 0.0, %v3151
        %3153 = vdwg.mxu0
        %3154 = vmatprep.subr.bf16.mxu0 %v1592
        %3155 = vmatpush1.bf16.msra.mxu0 %v1591
        %3156 = vmatprep.subr.bf16.mxu0 %v1601
        %3157 = vmatpush1.bf16.msra.mxu0 %v1600
        %3158 = vmatprep.subr.bf16.mxu0 %v1610
        %3159 = vmatpush1.bf16.msra.mxu0 %v1609
        %3160 = vmatprep.subr.bf16.mxu0 %v1619
        %3161 = vmatpush1.bf16.msra.mxu0 %v1618
        %3162 = vmatprep.subr.bf16.mxu0 %v1628
        %3163 = vmatpush1.bf16.msra.mxu0 %v1627
        %3164 = vmatprep.subr.bf16.mxu0 %v1637
        %3165 = vmatpush1.bf16.msra.mxu0 %v1636
        %3166 = vmatprep.subr.bf16.mxu0 %v1646
        %3167 = vmatpush1.bf16.msra.mxu0 %v1645
        %3168 = vmatprep.subr.bf16.mxu0 %v1655
        %3169 = vmatpush1.bf16.msra.mxu0 %v1654
        %3170 = vmatprep.subr.bf16.mxu0 0
        %3171 = vmatpush1.bf16.msra.mxu0 0
        %3172 = vmatprep.subr.bf16.mxu0 0
        %3173 = vmatpush1.bf16.msra.mxu0 0
        %3174 = vmatprep.subr.bf16.mxu0 0
        %3175 = vmatpush1.bf16.msra.mxu0 0
        %3176 = vmatprep.subr.bf16.mxu0 0
        %3177 = vmatpush1.bf16.msra.mxu0 0
        %3178 = vmatprep.subr.bf16.mxu0 0
        %3179 = vmatpush1.bf16.msra.mxu0 0
        %3180 = vmatprep.subr.bf16.mxu0 0
        %3181 = vmatpush1.bf16.msra.mxu0 0
        %3182 = vmatprep.subr.bf16.mxu0 0
        %3183 = vmatpush1.bf16.msra.mxu0 0
        %3184 = vmatprep.subr.bf16.mxu0 0
        %3185 = vmatpush1.bf16.msra.mxu0 0
        %3186 = vmatprep.mubr.bf16.mxu0 0
        %3187 = vmatmul.mubr.bf16.gmra.mrb[0].mxu0 %v681
        %v3188 = vpop.f32.mrb[0].mxu0
        %v3189 = vadd.f32 %v3006, %v3188
        %v3190 = vpop.f32.mrb[0].mxu0
        %v3191 = vadd.f32 %v3008, %v3190
        %v3192 = vpop.f32.mrb[0].mxu0
        %v3193 = vadd.f32 %v3010, %v3192
        %v3194 = vpop.f32.mrb[0].mxu0
        %v3195 = vadd.f32 %v3012, %v3194
        %3196 = vmatprep.mubr.bf16.mxu0 0
        %3197 = vmatmul.mubr.bf16.gmra.mrb[0].mxu0 %v684
        %v3198 = vpop.f32.mrb[0].mxu0
        %v3199 = vadd.f32 %v3016, %v3198
        %v3200 = vpop.f32.mrb[0].mxu0
        %v3201 = vadd.f32 %v3018, %v3200
        %v3202 = vpop.f32.mrb[0].mxu0
        %v3203 = vadd.f32 %v3020, %v3202
        %v3204 = vpop.f32.mrb[0].mxu0
        %v3205 = vadd.f32 %v3022, %v3204
        %3206 = vmatprep.mubr.bf16.mxu0 0
        %3207 = vmatmul.mubr.bf16.gmra.mrb[0].mxu0 %v687
        %v3208 = vpop.f32.mrb[0].mxu0
        %v3209 = vadd.f32 %v3026, %v3208
        %v3210 = vpop.f32.mrb[0].mxu0
        %v3211 = vadd.f32 %v3028, %v3210
        %v3212 = vpop.f32.mrb[0].mxu0
        %v3213 = vadd.f32 %v3030, %v3212
        %v3214 = vpop.f32.mrb[0].mxu0
        %v3215 = vadd.f32 %v3032, %v3214
        %3216 = vmatprep.mubr.bf16.mxu0 0
        %3217 = vmatmul.mubr.bf16.gmra.mrb[0].mxu0 %v690
        %v3218 = vpop.f32.mrb[0].mxu0
        %v3219 = vadd.f32 %v3036, %v3218
        %v3220 = vpop.f32.mrb[0].mxu0
        %v3221 = vadd.f32 %v3038, %v3220
        %v3222 = vpop.f32.mrb[0].mxu0
        %v3223 = vadd.f32 %v3040, %v3222
        %v3224 = vpop.f32.mrb[0].mxu0
        %v3225 = vadd.f32 %v3042, %v3224
        %3226 = vmatprep.mubr.bf16.mxu0 0
        %3227 = vmatmul.mubr.bf16.gmra.mrb[0].mxu0 %v693
        %v3228 = vpop.f32.mrb[0].mxu0
        %v3229 = vadd.f32 %v3046, %v3228
        %v3230 = vpop.f32.mrb[0].mxu0
        %v3231 = vadd.f32 %v3048, %v3230
        %v3232 = vpop.f32.mrb[0].mxu0
        %v3233 = vadd.f32 %v3050, %v3232
        %v3234 = vpop.f32.mrb[0].mxu0
        %v3235 = vadd.f32 %v3052, %v3234
        %3236 = vmatprep.mubr.bf16.mxu0 0
        %3237 = vmatmul.mubr.bf16.gmra.mrb[0].mxu0 %v696
        %v3238 = vpop.f32.mrb[0].mxu0
        %v3239 = vadd.f32 %v3056, %v3238
        %v3240 = vpop.f32.mrb[0].mxu0
        %v3241 = vadd.f32 %v3058, %v3240
        %v3242 = vpop.f32.mrb[0].mxu0
        %v3243 = vadd.f32 %v3060, %v3242
        %v3244 = vpop.f32.mrb[0].mxu0
        %v3245 = vadd.f32 %v3062, %v3244
        %3246 = vmatprep.mubr.bf16.mxu0 0
        %3247 = vmatmul.mubr.bf16.gmra.mrb[0].mxu0 %v699
        %v3248 = vpop.f32.mrb[0].mxu0
        %v3249 = vadd.f32 %v3066, %v3248
        %v3250 = vpop.f32.mrb[0].mxu0
        %v3251 = vadd.f32 %v3068, %v3250
        %v3252 = vpop.f32.mrb[0].mxu0
        %v3253 = vadd.f32 %v3070, %v3252
        %v3254 = vpop.f32.mrb[0].mxu0
        %v3255 = vadd.f32 %v3072, %v3254
        %3256 = vmatprep.mubr.bf16.mxu0 0
        %3257 = vmatmul.mubr.bf16.gmra.mrb[0].mxu0 %v702
        %v3258 = vpop.f32.mrb[0].mxu0
        %v3259 = vadd.f32 %v3076, %v3258
        %v3260 = vpop.f32.mrb[0].mxu0
        %v3261 = vadd.f32 %v3078, %v3260
        %v3262 = vpop.f32.mrb[0].mxu0
        %v3263 = vadd.f32 %v3080, %v3262
        %v3264 = vpop.f32.mrb[0].mxu0
        %v3265 = vadd.f32 %v3082, %v3264
        %3266 = vmatprep.mubr.bf16.mxu0 0
        %3267 = vmatmul.mubr.bf16.gmra.mrb[0].mxu0 %v705
        %v3268 = vpop.f32.mrb[0].mxu0
        %v3269 = vadd.f32 %v3086, %v3268
        %v3270 = vpop.f32.mrb[0].mxu0
        %v3271 = vadd.f32 %v3088, %v3270
        %v3272 = vpop.f32.mrb[0].mxu0
        %v3273 = vadd.f32 %v3090, %v3272
        %v3274 = vpop.f32.mrb[0].mxu0
        %v3275 = vadd.f32 %v3092, %v3274
        %3276 = vmatprep.mubr.bf16.mxu0 0
        %3277 = vmatmul.mubr.bf16.gmra.mrb[0].mxu0 %v708
        %v3278 = vpop.f32.mrb[0].mxu0
        %v3279 = vadd.f32 %v3096, %v3278
        %v3280 = vpop.f32.mrb[0].mxu0
        %v3281 = vadd.f32 %v3098, %v3280
        %v3282 = vpop.f32.mrb[0].mxu0
        %v3283 = vadd.f32 %v3100, %v3282
        %v3284 = vpop.f32.mrb[0].mxu0
        %v3285 = vadd.f32 %v3102, %v3284
        %3286 = vmatprep.mubr.bf16.mxu0 0
        %3287 = vmatmul.mubr.bf16.gmra.mrb[0].mxu0 %v711
        %v3288 = vpop.f32.mrb[0].mxu0
        %v3289 = vadd.f32 %v3106, %v3288
        %v3290 = vpop.f32.mrb[0].mxu0
        %v3291 = vadd.f32 %v3108, %v3290
        %v3292 = vpop.f32.mrb[0].mxu0
        %v3293 = vadd.f32 %v3110, %v3292
        %v3294 = vpop.f32.mrb[0].mxu0
        %v3295 = vadd.f32 %v3112, %v3294
        %3296 = vmatprep.mubr.bf16.mxu0 0
        %3297 = vmatmul.mubr.bf16.gmra.mrb[0].mxu0 %v714
        %v3298 = vpop.f32.mrb[0].mxu0
        %v3299 = vadd.f32 %v3116, %v3298
        %v3300 = vpop.f32.mrb[0].mxu0
        %v3301 = vadd.f32 %v3118, %v3300
        %v3302 = vpop.f32.mrb[0].mxu0
        %v3303 = vadd.f32 %v3120, %v3302
        %v3304 = vpop.f32.mrb[0].mxu0
        %v3305 = vadd.f32 %v3122, %v3304
        %3306 = vmatprep.mubr.bf16.mxu0 0
        %3307 = vmatmul.mubr.bf16.gmra.mrb[0].mxu0 %v717
        %v3308 = vpop.f32.mrb[0].mxu0
        %v3309 = vadd.f32 %v3126, %v3308
        %v3310 = vpop.f32.mrb[0].mxu0
        %v3311 = vadd.f32 %v3128, %v3310
        %v3312 = vpop.f32.mrb[0].mxu0
        %v3313 = vadd.f32 %v3130, %v3312
        %v3314 = vpop.f32.mrb[0].mxu0
        %v3315 = vadd.f32 %v3132, %v3314
        %3316 = vmatprep.mubr.bf16.mxu0 0
        %3317 = vmatmul.mubr.bf16.gmra.mrb[0].mxu0 %v720
        %v3318 = vpop.f32.mrb[0].mxu0
        %v3319 = vadd.f32 %v3136, %v3318
        %v3320 = vpop.f32.mrb[0].mxu0
        %v3321 = vadd.f32 %v3138, %v3320
        %v3322 = vpop.f32.mrb[0].mxu0
        %v3323 = vadd.f32 %v3140, %v3322
        %v3324 = vpop.f32.mrb[0].mxu0
        %v3325 = vadd.f32 %v3142, %v3324
        %3326 = vmatprep.mubr.bf16.mxu0 0
        %3327 = vmatmul.mubr.bf16.gmra.mrb[0].mxu0 %v723
        %v3328 = vpop.f32.mrb[0].mxu0
        %v3329 = vadd.f32 %v3146, %v3328
        %v3330 = vpop.f32.mrb[0].mxu0
        %v3331 = vadd.f32 %v3148, %v3330
        %v3332 = vpop.f32.mrb[0].mxu0
        %v3333 = vadd.f32 %v3150, %v3332
        %v3334 = vpop.f32.mrb[0].mxu0
        %v3335 = vadd.f32 %v3152, %v3334
        %3336 = vdwg.mxu0
        %3337 = vmatprep.subr.bf16.mxu0 0
        %3338 = vmatpush1.bf16.msra.mxu0 %v1449
        %3339 = vmatprep.subr.bf16.mxu0 0
        %3340 = vmatpush1.bf16.msra.mxu0 %v1458
        %3341 = vmatprep.subr.bf16.mxu0 0
        %3342 = vmatpush1.bf16.msra.mxu0 %v1467
        %3343 = vmatprep.subr.bf16.mxu0 0
        %3344 = vmatpush1.bf16.msra.mxu0 %v1476
        %3345 = vmatprep.subr.bf16.mxu0 0
        %3346 = vmatpush1.bf16.msra.mxu0 %v1485
        %3347 = vmatprep.subr.bf16.mxu0 0
        %3348 = vmatpush1.bf16.msra.mxu0 %v1494
        %3349 = vmatprep.subr.bf16.mxu0 0
        %3350 = vmatpush1.bf16.msra.mxu0 %v1503
        %3351 = vmatprep.subr.bf16.mxu0 0
        %3352 = vmatpush1.bf16.msra.mxu0 %v1512
        %3353 = vmatprep.subr.bf16.mxu0 0
        %3354 = vmatpush1.bf16.msra.mxu0 %v1521
        %3355 = vmatprep.subr.bf16.mxu0 0
        %3356 = vmatpush1.bf16.msra.mxu0 %v1530
        %3357 = vmatprep.subr.bf16.mxu0 0
        %3358 = vmatpush1.bf16.msra.mxu0 %v1539
        %3359 = vmatprep.subr.bf16.mxu0 0
        %3360 = vmatpush1.bf16.msra.mxu0 %v1548
        %3361 = vmatprep.subr.bf16.mxu0 0
        %3362 = vmatpush1.bf16.msra.mxu0 %v1557
        %3363 = vmatprep.subr.bf16.mxu0 0
        %3364 = vmatpush1.bf16.msra.mxu0 %v1566
        %3365 = vmatprep.subr.bf16.mxu0 0
        %3366 = vmatpush1.bf16.msra.mxu0 %v1575
        %3367 = vmatprep.subr.bf16.mxu0 0
        %3368 = vmatpush1.bf16.msra.mxu0 %v1584
        %3369 = vmatprep.mubr.bf16.mxu0 %v680
        %3370 = vmatmul.mubr.bf16.gmra.mrb[0].mxu0 %v679
        %v3371 = vpop.f32.mrb[0].mxu0
        %v3372 = vadd.f32 0.0, %v3371
        %v3373 = vpop.f32.mrb[0].mxu0
        %v3374 = vpop.f32.mrb[0].mxu0
        %v3375 = vadd.f32 0.0, %v3374
        %v3376 = vpop.f32.mrb[0].mxu0
        %3377 = vmatprep.mubr.bf16.mxu0 %v683
        %3378 = vmatmul.mubr.bf16.gmra.mrb[0].mxu0 %v682
        %v3379 = vpop.f32.mrb[0].mxu0
        %v3380 = vadd.f32 0.0, %v3379
        %v3381 = vpop.f32.mrb[0].mxu0
        %v3382 = vpop.f32.mrb[0].mxu0
        %v3383 = vadd.f32 0.0, %v3382
        %v3384 = vpop.f32.mrb[0].mxu0
        %3385 = vmatprep.mubr.bf16.mxu0 %v686
        %3386 = vmatmul.mubr.bf16.gmra.mrb[0].mxu0 %v685
        %v3387 = vpop.f32.mrb[0].mxu0
        %v3388 = vadd.f32 0.0, %v3387
        %v3389 = vpop.f32.mrb[0].mxu0
        %v3390 = vpop.f32.mrb[0].mxu0
        %v3391 = vadd.f32 0.0, %v3390
        %v3392 = vpop.f32.mrb[0].mxu0
        %3393 = vmatprep.mubr.bf16.mxu0 %v689
        %3394 = vmatmul.mubr.bf16.gmra.mrb[0].mxu0 %v688
        %v3395 = vpop.f32.mrb[0].mxu0
        %v3396 = vadd.f32 0.0, %v3395
        %v3397 = vpop.f32.mrb[0].mxu0
        %v3398 = vpop.f32.mrb[0].mxu0
        %v3399 = vadd.f32 0.0, %v3398
        %v3400 = vpop.f32.mrb[0].mxu0
        %3401 = vmatprep.mubr.bf16.mxu0 %v692
        %3402 = vmatmul.mubr.bf16.gmra.mrb[0].mxu0 %v691
        %v3403 = vpop.f32.mrb[0].mxu0
        %v3404 = vadd.f32 0.0, %v3403
        %v3405 = vpop.f32.mrb[0].mxu0
        %v3406 = vpop.f32.mrb[0].mxu0
        %v3407 = vadd.f32 0.0, %v3406
        %v3408 = vpop.f32.mrb[0].mxu0
        %3409 = vmatprep.mubr.bf16.mxu0 %v695
        %3410 = vmatmul.mubr.bf16.gmra.mrb[0].mxu0 %v694
        %v3411 = vpop.f32.mrb[0].mxu0
        %v3412 = vadd.f32 0.0, %v3411
        %v3413 = vpop.f32.mrb[0].mxu0
        %v3414 = vpop.f32.mrb[0].mxu0
        %v3415 = vadd.f32 0.0, %v3414
        %v3416 = vpop.f32.mrb[0].mxu0
        %3417 = vmatprep.mubr.bf16.mxu0 %v698
        %3418 = vmatmul.mubr.bf16.gmra.mrb[0].mxu0 %v697
        %v3419 = vpop.f32.mrb[0].mxu0
        %v3420 = vadd.f32 0.0, %v3419
        %v3421 = vpop.f32.mrb[0].mxu0
        %v3422 = vpop.f32.mrb[0].mxu0
        %v3423 = vadd.f32 0.0, %v3422
        %v3424 = vpop.f32.mrb[0].mxu0
        %3425 = vmatprep.mubr.bf16.mxu0 %v701
        %3426 = vmatmul.mubr.bf16.gmra.mrb[0].mxu0 %v700
        %v3427 = vpop.f32.mrb[0].mxu0
        %v3428 = vadd.f32 0.0, %v3427
        %v3429 = vpop.f32.mrb[0].mxu0
        %v3430 = vpop.f32.mrb[0].mxu0
        %v3431 = vadd.f32 0.0, %v3430
        %v3432 = vpop.f32.mrb[0].mxu0
        %3433 = vmatprep.mubr.bf16.mxu0 %v704
        %3434 = vmatmul.mubr.bf16.gmra.mrb[0].mxu0 %v703
        %v3435 = vpop.f32.mrb[0].mxu0
        %v3436 = vadd.f32 0.0, %v3435
        %v3437 = vpop.f32.mrb[0].mxu0
        %v3438 = vpop.f32.mrb[0].mxu0
        %v3439 = vadd.f32 0.0, %v3438
        %v3440 = vpop.f32.mrb[0].mxu0
        %3441 = vmatprep.mubr.bf16.mxu0 %v707
        %3442 = vmatmul.mubr.bf16.gmra.mrb[0].mxu0 %v706
        %v3443 = vpop.f32.mrb[0].mxu0
        %v3444 = vadd.f32 0.0, %v3443
        %v3445 = vpop.f32.mrb[0].mxu0
        %v3446 = vpop.f32.mrb[0].mxu0
        %v3447 = vadd.f32 0.0, %v3446
        %v3448 = vpop.f32.mrb[0].mxu0
        %3449 = vmatprep.mubr.bf16.mxu0 %v710
        %3450 = vmatmul.mubr.bf16.gmra.mrb[0].mxu0 %v709
        %v3451 = vpop.f32.mrb[0].mxu0
        %v3452 = vadd.f32 0.0, %v3451
        %v3453 = vpop.f32.mrb[0].mxu0
        %v3454 = vpop.f32.mrb[0].mxu0
        %v3455 = vadd.f32 0.0, %v3454
        %v3456 = vpop.f32.mrb[0].mxu0
        %3457 = vmatprep.mubr.bf16.mxu0 %v713
        %3458 = vmatmul.mubr.bf16.gmra.mrb[0].mxu0 %v712
        %v3459 = vpop.f32.mrb[0].mxu0
        %v3460 = vadd.f32 0.0, %v3459
        %v3461 = vpop.f32.mrb[0].mxu0
        %v3462 = vpop.f32.mrb[0].mxu0
        %v3463 = vadd.f32 0.0, %v3462
        %v3464 = vpop.f32.mrb[0].mxu0
        %3465 = vmatprep.mubr.bf16.mxu0 %v716
        %3466 = vmatmul.mubr.bf16.gmra.mrb[0].mxu0 %v715
        %v3467 = vpop.f32.mrb[0].mxu0
        %v3468 = vadd.f32 0.0, %v3467
        %v3469 = vpop.f32.mrb[0].mxu0
        %v3470 = vpop.f32.mrb[0].mxu0
        %v3471 = vadd.f32 0.0, %v3470
        %v3472 = vpop.f32.mrb[0].mxu0
        %3473 = vmatprep.mubr.bf16.mxu0 %v719
        %3474 = vmatmul.mubr.bf16.gmra.mrb[0].mxu0 %v718
        %v3475 = vpop.f32.mrb[0].mxu0
        %v3476 = vadd.f32 0.0, %v3475
        %v3477 = vpop.f32.mrb[0].mxu0
        %v3478 = vpop.f32.mrb[0].mxu0
        %v3479 = vadd.f32 0.0, %v3478
        %v3480 = vpop.f32.mrb[0].mxu0
        %3481 = vmatprep.mubr.bf16.mxu0 %v722
        %3482 = vmatmul.mubr.bf16.gmra.mrb[0].mxu0 %v721
        %v3483 = vpop.f32.mrb[0].mxu0
        %v3484 = vadd.f32 0.0, %v3483
        %v3485 = vpop.f32.mrb[0].mxu0
        %v3486 = vpop.f32.mrb[0].mxu0
        %v3487 = vadd.f32 0.0, %v3486
        %v3488 = vpop.f32.mrb[0].mxu0
        %3489 = vdwg.mxu0
        %3490 = vmatprep.subr.bf16.mxu0 0
        %3491 = vmatpush1.bf16.msra.mxu0 %v1593
        %3492 = vmatprep.subr.bf16.mxu0 0
        %3493 = vmatpush1.bf16.msra.mxu0 %v1602
        %3494 = vmatprep.subr.bf16.mxu0 0
        %3495 = vmatpush1.bf16.msra.mxu0 %v1611
        %3496 = vmatprep.subr.bf16.mxu0 0
        %3497 = vmatpush1.bf16.msra.mxu0 %v1620
        %3498 = vmatprep.subr.bf16.mxu0 0
        %3499 = vmatpush1.bf16.msra.mxu0 %v1629
        %3500 = vmatprep.subr.bf16.mxu0 0
        %3501 = vmatpush1.bf16.msra.mxu0 %v1638
        %3502 = vmatprep.subr.bf16.mxu0 0
        %3503 = vmatpush1.bf16.msra.mxu0 %v1647
        %3504 = vmatprep.subr.bf16.mxu0 0
        %3505 = vmatpush1.bf16.msra.mxu0 %v1656
        %3506 = vmatprep.subr.bf16.mxu0 0
        %3507 = vmatpush1.bf16.msra.mxu0 0
        %3508 = vmatprep.subr.bf16.mxu0 0
        %3509 = vmatpush1.bf16.msra.mxu0 0
        %3510 = vmatprep.subr.bf16.mxu0 0
        %3511 = vmatpush1.bf16.msra.mxu0 0
        %3512 = vmatprep.subr.bf16.mxu0 0
        %3513 = vmatpush1.bf16.msra.mxu0 0
        %3514 = vmatprep.subr.bf16.mxu0 0
        %3515 = vmatpush1.bf16.msra.mxu0 0
        %3516 = vmatprep.subr.bf16.mxu0 0
        %3517 = vmatpush1.bf16.msra.mxu0 0
        %3518 = vmatprep.subr.bf16.mxu0 0
        %3519 = vmatpush1.bf16.msra.mxu0 0
        %3520 = vmatprep.subr.bf16.mxu0 0
        %3521 = vmatpush1.bf16.msra.mxu0 0
        %3522 = vmatprep.mubr.bf16.mxu0 0
        %3523 = vmatmul.mubr.bf16.gmra.mrb[0].mxu0 %v681
        %v3524 = vpop.f32.mrb[0].mxu0
        %v3525 = vadd.f32 %v3372, %v3524
        %v3526 = vpop.f32.mrb[0].mxu0
        %v3527 = vpop.f32.mrb[0].mxu0
        %v3528 = vadd.f32 %v3375, %v3527
        %v3529 = vpop.f32.mrb[0].mxu0
        %3530 = vmatprep.mubr.bf16.mxu0 0
        %3531 = vmatmul.mubr.bf16.gmra.mrb[0].mxu0 %v684
        %v3532 = vpop.f32.mrb[0].mxu0
        %v3533 = vadd.f32 %v3380, %v3532
        %v3534 = vpop.f32.mrb[0].mxu0
        %v3535 = vpop.f32.mrb[0].mxu0
        %v3536 = vadd.f32 %v3383, %v3535
        %v3537 = vpop.f32.mrb[0].mxu0
        %3538 = vmatprep.mubr.bf16.mxu0 0
        %3539 = vmatmul.mubr.bf16.gmra.mrb[0].mxu0 %v687
        %v3540 = vpop.f32.mrb[0].mxu0
        %v3541 = vadd.f32 %v3388, %v3540
        %v3542 = vpop.f32.mrb[0].mxu0
        %v3543 = vpop.f32.mrb[0].mxu0
        %v3544 = vadd.f32 %v3391, %v3543
        %v3545 = vpop.f32.mrb[0].mxu0
        %3546 = vmatprep.mubr.bf16.mxu0 0
        %3547 = vmatmul.mubr.bf16.gmra.mrb[0].mxu0 %v690
        %v3548 = vpop.f32.mrb[0].mxu0
        %v3549 = vadd.f32 %v3396, %v3548
        %v3550 = vpop.f32.mrb[0].mxu0
        %v3551 = vpop.f32.mrb[0].mxu0
        %v3552 = vadd.f32 %v3399, %v3551
        %v3553 = vpop.f32.mrb[0].mxu0
        %3554 = vmatprep.mubr.bf16.mxu0 0
        %3555 = vmatmul.mubr.bf16.gmra.mrb[0].mxu0 %v693
        %v3556 = vpop.f32.mrb[0].mxu0
        %v3557 = vadd.f32 %v3404, %v3556
        %v3558 = vpop.f32.mrb[0].mxu0
        %v3559 = vpop.f32.mrb[0].mxu0
        %v3560 = vadd.f32 %v3407, %v3559
        %v3561 = vpop.f32.mrb[0].mxu0
        %3562 = vmatprep.mubr.bf16.mxu0 0
        %3563 = vmatmul.mubr.bf16.gmra.mrb[0].mxu0 %v696
        %v3564 = vpop.f32.mrb[0].mxu0
        %v3565 = vadd.f32 %v3412, %v3564
        %v3566 = vpop.f32.mrb[0].mxu0
        %v3567 = vpop.f32.mrb[0].mxu0
        %v3568 = vadd.f32 %v3415, %v3567
        %v3569 = vpop.f32.mrb[0].mxu0
        %3570 = vmatprep.mubr.bf16.mxu0 0
        %3571 = vmatmul.mubr.bf16.gmra.mrb[0].mxu0 %v699
        %v3572 = vpop.f32.mrb[0].mxu0
        %v3573 = vadd.f32 %v3420, %v3572
        %v3574 = vpop.f32.mrb[0].mxu0
        %v3575 = vpop.f32.mrb[0].mxu0
        %v3576 = vadd.f32 %v3423, %v3575
        %v3577 = vpop.f32.mrb[0].mxu0
        %3578 = vmatprep.mubr.bf16.mxu0 0
        %3579 = vmatmul.mubr.bf16.gmra.mrb[0].mxu0 %v702
        %v3580 = vpop.f32.mrb[0].mxu0
        %v3581 = vadd.f32 %v3428, %v3580
        %v3582 = vpop.f32.mrb[0].mxu0
        %v3583 = vpop.f32.mrb[0].mxu0
        %v3584 = vadd.f32 %v3431, %v3583
        %v3585 = vpop.f32.mrb[0].mxu0
        %3586 = vmatprep.mubr.bf16.mxu0 0
        %3587 = vmatmul.mubr.bf16.gmra.mrb[0].mxu0 %v705
        %v3588 = vpop.f32.mrb[0].mxu0
        %v3589 = vadd.f32 %v3436, %v3588
        %v3590 = vpop.f32.mrb[0].mxu0
        %v3591 = vpop.f32.mrb[0].mxu0
        %v3592 = vadd.f32 %v3439, %v3591
        %v3593 = vpop.f32.mrb[0].mxu0
        %3594 = vmatprep.mubr.bf16.mxu0 0
        %3595 = vmatmul.mubr.bf16.gmra.mrb[0].mxu0 %v708
        %v3596 = vpop.f32.mrb[0].mxu0
        %v3597 = vadd.f32 %v3444, %v3596
        %v3598 = vpop.f32.mrb[0].mxu0
        %v3599 = vpop.f32.mrb[0].mxu0
        %v3600 = vadd.f32 %v3447, %v3599
        %v3601 = vpop.f32.mrb[0].mxu0
        %3602 = vmatprep.mubr.bf16.mxu0 0
        %3603 = vmatmul.mubr.bf16.gmra.mrb[0].mxu0 %v711
        %v3604 = vpop.f32.mrb[0].mxu0
        %v3605 = vadd.f32 %v3452, %v3604
        %v3606 = vpop.f32.mrb[0].mxu0
        %v3607 = vpop.f32.mrb[0].mxu0
        %v3608 = vadd.f32 %v3455, %v3607
        %v3609 = vpop.f32.mrb[0].mxu0
        %3610 = vmatprep.mubr.bf16.mxu0 0
        %3611 = vmatmul.mubr.bf16.gmra.mrb[0].mxu0 %v714
        %v3612 = vpop.f32.mrb[0].mxu0
        %v3613 = vadd.f32 %v3460, %v3612
        %v3614 = vpop.f32.mrb[0].mxu0
        %v3615 = vpop.f32.mrb[0].mxu0
        %v3616 = vadd.f32 %v3463, %v3615
        %v3617 = vpop.f32.mrb[0].mxu0
        %3618 = vmatprep.mubr.bf16.mxu0 0
        %3619 = vmatmul.mubr.bf16.gmra.mrb[0].mxu0 %v717
        %v3620 = vpop.f32.mrb[0].mxu0
        %v3621 = vadd.f32 %v3468, %v3620
        %v3622 = vpop.f32.mrb[0].mxu0
        %v3623 = vpop.f32.mrb[0].mxu0
        %v3624 = vadd.f32 %v3471, %v3623
        %v3625 = vpop.f32.mrb[0].mxu0
        %3626 = vmatprep.mubr.bf16.mxu0 0
        %3627 = vmatmul.mubr.bf16.gmra.mrb[0].mxu0 %v720
        %v3628 = vpop.f32.mrb[0].mxu0
        %v3629 = vadd.f32 %v3476, %v3628
        %v3630 = vpop.f32.mrb[0].mxu0
        %v3631 = vpop.f32.mrb[0].mxu0
        %v3632 = vadd.f32 %v3479, %v3631
        %v3633 = vpop.f32.mrb[0].mxu0
        %3634 = vmatprep.mubr.bf16.mxu0 0
        %3635 = vmatmul.mubr.bf16.gmra.mrb[0].mxu0 %v723
        %v3636 = vpop.f32.mrb[0].mxu0
        %v3637 = vadd.f32 %v3484, %v3636
        %v3638 = vpop.f32.mrb[0].mxu0
        %v3639 = vpop.f32.mrb[0].mxu0
        %v3640 = vadd.f32 %v3487, %v3639
        %v3641 = vpop.f32.mrb[0].mxu0
        %3642 = vdwg.mxu0
        %3643 = vst [vmem:[#allocation2] sm:$0xff] %v2091
        %3644 = vst [vmem:[#allocation2 + $0x8] sm:$0xff] %v2093
        %3645 = vst [vmem:[#allocation2 + $0x10] sm:$0xff] %v2457
        %3646 = vst [vmem:[#allocation2 + $0x18] sm:$0xff] %v2459
        %3647 = vst [vmem:[#allocation2 + $0x20] sm:$0xff] %v2823
        %3648 = vst [vmem:[#allocation2 + $0x28] sm:$0xff] %v2825
        %3649 = vst [vmem:[#allocation2 + $0x30] sm:$0xff] %v3189
        %3650 = vst [vmem:[#allocation2 + $0x38] sm:$0xff] %v3191
        %vm3651 = vcmask 457728
        %3652 = vst.msk [vmem:[#allocation2 + $0x40] sm:$0xff] %vm3651, %v3525
        %3653 = vst [vmem:[#allocation2 + $0x48] sm:$0xff] %v2095
        %3654 = vst [vmem:[#allocation2 + $0x50] sm:$0xff] %v2097
        %3655 = vst [vmem:[#allocation2 + $0x58] sm:$0xff] %v2461
        %3656 = vst [vmem:[#allocation2 + $0x60] sm:$0xff] %v2463
        %3657 = vst [vmem:[#allocation2 + $0x68] sm:$0xff] %v2827
        %3658 = vst [vmem:[#allocation2 + $0x70] sm:$0xff] %v2829
        %3659 = vst [vmem:[#allocation2 + $0x78] sm:$0xff] %v3193
        %3660 = vst [vmem:[#allocation2 + $0x80] sm:$0xff] %v3195
        %3661 = vst.msk [vmem:[#allocation2 + $0x88] sm:$0xff] %vm3651, %v3528
        %3662 = vst [vmem:[#allocation2 + $0x90] sm:$0xff] %v2101
        %3663 = vst [vmem:[#allocation2 + $0x98] sm:$0xff] %v2103
        %3664 = vst [vmem:[#allocation2 + $0xa0] sm:$0xff] %v2467
        %3665 = vst [vmem:[#allocation2 + $0xa8] sm:$0xff] %v2469
        %3666 = vst [vmem:[#allocation2 + $0xb0] sm:$0xff] %v2833
        %3667 = vst [vmem:[#allocation2 + $0xb8] sm:$0xff] %v2835
        %3668 = vst [vmem:[#allocation2 + $0xc0] sm:$0xff] %v3199
        %3669 = vst [vmem:[#allocation2 + $0xc8] sm:$0xff] %v3201
        %3670 = vst.msk [vmem:[#allocation2 + $0xd0] sm:$0xff] %vm3651, %v3533
        %3671 = vst [vmem:[#allocation2 + $0xd8] sm:$0xff] %v2105
        %3672 = vst [vmem:[#allocation2 + $0xe0] sm:$0xff] %v2107
        %3673 = vst [vmem:[#allocation2 + $0xe8] sm:$0xff] %v2471
        %3674 = vst [vmem:[#allocation2 + $0xf0] sm:$0xff] %v2473
        %3675 = vst [vmem:[#allocation2 + $0xf8] sm:$0xff] %v2837
        %3676 = vst [vmem:[#allocation2 + $0x100] sm:$0xff] %v2839
        %3677 = vst [vmem:[#allocation2 + $0x108] sm:$0xff] %v3203
        %3678 = vst [vmem:[#allocation2 + $0x110] sm:$0xff] %v3205
        %3679 = vst.msk [vmem:[#allocation2 + $0x118] sm:$0xff] %vm3651, %v3536
        %3680 = vst [vmem:[#allocation2 + $0x120] sm:$0xff] %v2111
        %3681 = vst [vmem:[#allocation2 + $0x128] sm:$0xff] %v2113
        %3682 = vst [vmem:[#allocation2 + $0x130] sm:$0xff] %v2477
        %3683 = vst [vmem:[#allocation2 + $0x138] sm:$0xff] %v2479
        %3684 = vst [vmem:[#allocation2 + $0x140] sm:$0xff] %v2843
        %3685 = vst [vmem:[#allocation2 + $0x148] sm:$0xff] %v2845
        %3686 = vst [vmem:[#allocation2 + $0x150] sm:$0xff] %v3209
        %3687 = vst [vmem:[#allocation2 + $0x158] sm:$0xff] %v3211
        %3688 = vst.msk [vmem:[#allocation2 + $0x160] sm:$0xff] %vm3651, %v3541
        %3689 = vst [vmem:[#allocation2 + $0x168] sm:$0xff] %v2115
        %3690 = vst [vmem:[#allocation2 + $0x170] sm:$0xff] %v2117
        %3691 = vst [vmem:[#allocation2 + $0x178] sm:$0xff] %v2481
        %3692 = vst [vmem:[#allocation2 + $0x180] sm:$0xff] %v2483
        %3693 = vst [vmem:[#allocation2 + $0x188] sm:$0xff] %v2847
        %3694 = vst [vmem:[#allocation2 + $0x190] sm:$0xff] %v2849
        %3695 = vst [vmem:[#allocation2 + $0x198] sm:$0xff] %v3213
        %3696 = vst [vmem:[#allocation2 + $0x1a0] sm:$0xff] %v3215
        %3697 = vst.msk [vmem:[#allocation2 + $0x1a8] sm:$0xff] %vm3651, %v3544
        %3698 = vst [vmem:[#allocation2 + $0x1b0] sm:$0xff] %v2121
        %3699 = vst [vmem:[#allocation2 + $0x1b8] sm:$0xff] %v2123
        %3700 = vst [vmem:[#allocation2 + $0x1c0] sm:$0xff] %v2487
        %3701 = vst [vmem:[#allocation2 + $0x1c8] sm:$0xff] %v2489
        %3702 = vst [vmem:[#allocation2 + $0x1d0] sm:$0xff] %v2853
        %3703 = vst [vmem:[#allocation2 + $0x1d8] sm:$0xff] %v2855
        %3704 = vst [vmem:[#allocation2 + $0x1e0] sm:$0xff] %v3219
        %3705 = vst [vmem:[#allocation2 + $0x1e8] sm:$0xff] %v3221
        %3706 = vst.msk [vmem:[#allocation2 + $0x1f0] sm:$0xff] %vm3651, %v3549
        %3707 = vst [vmem:[#allocation2 + $0x1f8] sm:$0xff] %v2125
        %3708 = vst [vmem:[#allocation2 + $0x200] sm:$0xff] %v2127
        %3709 = vst [vmem:[#allocation2 + $0x208] sm:$0xff] %v2491
        %3710 = vst [vmem:[#allocation2 + $0x210] sm:$0xff] %v2493
        %3711 = vst [vmem:[#allocation2 + $0x218] sm:$0xff] %v2857
        %3712 = vst [vmem:[#allocation2 + $0x220] sm:$0xff] %v2859
        %3713 = vst [vmem:[#allocation2 + $0x228] sm:$0xff] %v3223
        %3714 = vst [vmem:[#allocation2 + $0x230] sm:$0xff] %v3225
        %3715 = vst.msk [vmem:[#allocation2 + $0x238] sm:$0xff] %vm3651, %v3552
        %3716 = vst [vmem:[#allocation2 + $0x240] sm:$0xff] %v2131
        %3717 = vst [vmem:[#allocation2 + $0x248] sm:$0xff] %v2133
        %3718 = vst [vmem:[#allocation2 + $0x250] sm:$0xff] %v2497
        %3719 = vst [vmem:[#allocation2 + $0x258] sm:$0xff] %v2499
        %3720 = vst [vmem:[#allocation2 + $0x260] sm:$0xff] %v2863
        %3721 = vst [vmem:[#allocation2 + $0x268] sm:$0xff] %v2865
        %3722 = vst [vmem:[#allocation2 + $0x270] sm:$0xff] %v3229
        %3723 = vst [vmem:[#allocation2 + $0x278] sm:$0xff] %v3231
        %3724 = vst.msk [vmem:[#allocation2 + $0x280] sm:$0xff] %vm3651, %v3557
        %3725 = vst [vmem:[#allocation2 + $0x288] sm:$0xff] %v2135
        %3726 = vst [vmem:[#allocation2 + $0x290] sm:$0xff] %v2137
        %3727 = vst [vmem:[#allocation2 + $0x298] sm:$0xff] %v2501
        %3728 = vst [vmem:[#allocation2 + $0x2a0] sm:$0xff] %v2503
        %3729 = vst [vmem:[#allocation2 + $0x2a8] sm:$0xff] %v2867
        %3730 = vst [vmem:[#allocation2 + $0x2b0] sm:$0xff] %v2869
        %3731 = vst [vmem:[#allocation2 + $0x2b8] sm:$0xff] %v3233
        %3732 = vst [vmem:[#allocation2 + $0x2c0] sm:$0xff] %v3235
        %3733 = vst.msk [vmem:[#allocation2 + $0x2c8] sm:$0xff] %vm3651, %v3560
        %3734 = vst [vmem:[#allocation2 + $0x2d0] sm:$0xff] %v2141
        %3735 = vst [vmem:[#allocation2 + $0x2d8] sm:$0xff] %v2143
        %3736 = vst [vmem:[#allocation2 + $0x2e0] sm:$0xff] %v2507
        %3737 = vst [vmem:[#allocation2 + $0x2e8] sm:$0xff] %v2509
        %3738 = vst [vmem:[#allocation2 + $0x2f0] sm:$0xff] %v2873
        %3739 = vst [vmem:[#allocation2 + $0x2f8] sm:$0xff] %v2875
        %3740 = vst [vmem:[#allocation2 + $0x300] sm:$0xff] %v3239
        %3741 = vst [vmem:[#allocation2 + $0x308] sm:$0xff] %v3241
        %3742 = vst.msk [vmem:[#allocation2 + $0x310] sm:$0xff] %vm3651, %v3565
        %3743 = vst [vmem:[#allocation2 + $0x318] sm:$0xff] %v2145
        %3744 = vst [vmem:[#allocation2 + $0x320] sm:$0xff] %v2147
        %3745 = vst [vmem:[#allocation2 + $0x328] sm:$0xff] %v2511
        %3746 = vst [vmem:[#allocation2 + $0x330] sm:$0xff] %v2513
        %3747 = vst [vmem:[#allocation2 + $0x338] sm:$0xff] %v2877
        %3748 = vst [vmem:[#allocation2 + $0x340] sm:$0xff] %v2879
        %3749 = vst [vmem:[#allocation2 + $0x348] sm:$0xff] %v3243
        %3750 = vst [vmem:[#allocation2 + $0x350] sm:$0xff] %v3245
        %3751 = vst.msk [vmem:[#allocation2 + $0x358] sm:$0xff] %vm3651, %v3568
        %3752 = vst [vmem:[#allocation2 + $0x360] sm:$0xff] %v2151
        %3753 = vst [vmem:[#allocation2 + $0x368] sm:$0xff] %v2153
        %3754 = vst [vmem:[#allocation2 + $0x370] sm:$0xff] %v2517
        %3755 = vst [vmem:[#allocation2 + $0x378] sm:$0xff] %v2519
        %3756 = vst [vmem:[#allocation2 + $0x380] sm:$0xff] %v2883
        %3757 = vst [vmem:[#allocation2 + $0x388] sm:$0xff] %v2885
        %3758 = vst [vmem:[#allocation2 + $0x390] sm:$0xff] %v3249
        %3759 = vst [vmem:[#allocation2 + $0x398] sm:$0xff] %v3251
        %3760 = vst.msk [vmem:[#allocation2 + $0x3a0] sm:$0xff] %vm3651, %v3573
        %3761 = vst [vmem:[#allocation2 + $0x3a8] sm:$0xff] %v2155
        %3762 = vst [vmem:[#allocation2 + $0x3b0] sm:$0xff] %v2157
        %3763 = vst [vmem:[#allocation2 + $0x3b8] sm:$0xff] %v2521
        %3764 = vst [vmem:[#allocation2 + $0x3c0] sm:$0xff] %v2523
        %3765 = vst [vmem:[#allocation2 + $0x3c8] sm:$0xff] %v2887
        %3766 = vst [vmem:[#allocation2 + $0x3d0] sm:$0xff] %v2889
        %3767 = vst [vmem:[#allocation2 + $0x3d8] sm:$0xff] %v3253
        %3768 = vst [vmem:[#allocation2 + $0x3e0] sm:$0xff] %v3255
        %3769 = vst.msk [vmem:[#allocation2 + $0x3e8] sm:$0xff] %vm3651, %v3576
        %3770 = vst [vmem:[#allocation2 + $0x3f0] sm:$0xff] %v2161
        %3771 = vst [vmem:[#allocation2 + $0x3f8] sm:$0xff] %v2163
        %3772 = vst [vmem:[#allocation2 + $0x400] sm:$0xff] %v2527
        %3773 = vst [vmem:[#allocation2 + $0x408] sm:$0xff] %v2529
        %3774 = vst [vmem:[#allocation2 + $0x410] sm:$0xff] %v2893
        %3775 = vst [vmem:[#allocation2 + $0x418] sm:$0xff] %v2895
        %3776 = vst [vmem:[#allocation2 + $0x420] sm:$0xff] %v3259
        %3777 = vst [vmem:[#allocation2 + $0x428] sm:$0xff] %v3261
        %3778 = vst.msk [vmem:[#allocation2 + $0x430] sm:$0xff] %vm3651, %v3581
        %3779 = vst [vmem:[#allocation2 + $0x438] sm:$0xff] %v2165
        %3780 = vst [vmem:[#allocation2 + $0x440] sm:$0xff] %v2167
        %3781 = vst [vmem:[#allocation2 + $0x448] sm:$0xff] %v2531
        %3782 = vst [vmem:[#allocation2 + $0x450] sm:$0xff] %v2533
        %3783 = vst [vmem:[#allocation2 + $0x458] sm:$0xff] %v2897
        %3784 = vst [vmem:[#allocation2 + $0x460] sm:$0xff] %v2899
        %3785 = vst [vmem:[#allocation2 + $0x468] sm:$0xff] %v3263
        %3786 = vst [vmem:[#allocation2 + $0x470] sm:$0xff] %v3265
        %3787 = vst.msk [vmem:[#allocation2 + $0x478] sm:$0xff] %vm3651, %v3584
        %3788 = vst [vmem:[#allocation2 + $0x480] sm:$0xff] %v2171
        %3789 = vst [vmem:[#allocation2 + $0x488] sm:$0xff] %v2173
        %3790 = vst [vmem:[#allocation2 + $0x490] sm:$0xff] %v2537
        %3791 = vst [vmem:[#allocation2 + $0x498] sm:$0xff] %v2539
        %3792 = vst [vmem:[#allocation2 + $0x4a0] sm:$0xff] %v2903
        %3793 = vst [vmem:[#allocation2 + $0x4a8] sm:$0xff] %v2905
        %3794 = vst [vmem:[#allocation2 + $0x4b0] sm:$0xff] %v3269
        %3795 = vst [vmem:[#allocation2 + $0x4b8] sm:$0xff] %v3271
        %3796 = vst.msk [vmem:[#allocation2 + $0x4c0] sm:$0xff] %vm3651, %v3589
        %3797 = vst [vmem:[#allocation2 + $0x4c8] sm:$0xff] %v2175
        %3798 = vst [vmem:[#allocation2 + $0x4d0] sm:$0xff] %v2177
        %3799 = vst [vmem:[#allocation2 + $0x4d8] sm:$0xff] %v2541
        %3800 = vst [vmem:[#allocation2 + $0x4e0] sm:$0xff] %v2543
        %3801 = vst [vmem:[#allocation2 + $0x4e8] sm:$0xff] %v2907
        %3802 = vst [vmem:[#allocation2 + $0x4f0] sm:$0xff] %v2909
        %3803 = vst [vmem:[#allocation2 + $0x4f8] sm:$0xff] %v3273
        %3804 = vst [vmem:[#allocation2 + $0x500] sm:$0xff] %v3275
        %3805 = vst.msk [vmem:[#allocation2 + $0x508] sm:$0xff] %vm3651, %v3592
        %3806 = vst [vmem:[#allocation2 + $0x510] sm:$0xff] %v2181
        %3807 = vst [vmem:[#allocation2 + $0x518] sm:$0xff] %v2183
        %3808 = vst [vmem:[#allocation2 + $0x520] sm:$0xff] %v2547
        %3809 = vst [vmem:[#allocation2 + $0x528] sm:$0xff] %v2549
        %3810 = vst [vmem:[#allocation2 + $0x530] sm:$0xff] %v2913
        %3811 = vst [vmem:[#allocation2 + $0x538] sm:$0xff] %v2915
        %3812 = vst [vmem:[#allocation2 + $0x540] sm:$0xff] %v3279
        %3813 = vst [vmem:[#allocation2 + $0x548] sm:$0xff] %v3281
        %3814 = vst.msk [vmem:[#allocation2 + $0x550] sm:$0xff] %vm3651, %v3597
        %3815 = vst [vmem:[#allocation2 + $0x558] sm:$0xff] %v2185
        %3816 = vst [vmem:[#allocation2 + $0x560] sm:$0xff] %v2187
        %3817 = vst [vmem:[#allocation2 + $0x568] sm:$0xff] %v2551
        %3818 = vst [vmem:[#allocation2 + $0x570] sm:$0xff] %v2553
        %3819 = vst [vmem:[#allocation2 + $0x578] sm:$0xff] %v2917
        %3820 = vst [vmem:[#allocation2 + $0x580] sm:$0xff] %v2919
        %3821 = vst [vmem:[#allocation2 + $0x588] sm:$0xff] %v3283
        %3822 = vst [vmem:[#allocation2 + $0x590] sm:$0xff] %v3285
        %3823 = vst.msk [vmem:[#allocation2 + $0x598] sm:$0xff] %vm3651, %v3600
        %3824 = vst [vmem:[#allocation2 + $0x5a0] sm:$0xff] %v2191
        %3825 = vst [vmem:[#allocation2 + $0x5a8] sm:$0xff] %v2193
        %3826 = vst [vmem:[#allocation2 + $0x5b0] sm:$0xff] %v2557
        %3827 = vst [vmem:[#allocation2 + $0x5b8] sm:$0xff] %v2559
        %3828 = vst [vmem:[#allocation2 + $0x5c0] sm:$0xff] %v2923
        %3829 = vst [vmem:[#allocation2 + $0x5c8] sm:$0xff] %v2925
        %3830 = vst [vmem:[#allocation2 + $0x5d0] sm:$0xff] %v3289
        %3831 = vst [vmem:[#allocation2 + $0x5d8] sm:$0xff] %v3291
        %3832 = vst.msk [vmem:[#allocation2 + $0x5e0] sm:$0xff] %vm3651, %v3605
        %3833 = vst [vmem:[#allocation2 + $0x5e8] sm:$0xff] %v2195
        %3834 = vst [vmem:[#allocation2 + $0x5f0] sm:$0xff] %v2197
        %3835 = vst [vmem:[#allocation2 + $0x5f8] sm:$0xff] %v2561
        %3836 = vst [vmem:[#allocation2 + $0x600] sm:$0xff] %v2563
        %3837 = vst [vmem:[#allocation2 + $0x608] sm:$0xff] %v2927
        %3838 = vst [vmem:[#allocation2 + $0x610] sm:$0xff] %v2929
        %3839 = vst [vmem:[#allocation2 + $0x618] sm:$0xff] %v3293
        %3840 = vst [vmem:[#allocation2 + $0x620] sm:$0xff] %v3295
        %3841 = vst.msk [vmem:[#allocation2 + $0x628] sm:$0xff] %vm3651, %v3608
        %3842 = vst [vmem:[#allocation2 + $0x630] sm:$0xff] %v2201
        %3843 = vst [vmem:[#allocation2 + $0x638] sm:$0xff] %v2203
        %3844 = vst [vmem:[#allocation2 + $0x640] sm:$0xff] %v2567
        %3845 = vst [vmem:[#allocation2 + $0x648] sm:$0xff] %v2569
        %3846 = vst [vmem:[#allocation2 + $0x650] sm:$0xff] %v2933
        %3847 = vst [vmem:[#allocation2 + $0x658] sm:$0xff] %v2935
        %3848 = vst [vmem:[#allocation2 + $0x660] sm:$0xff] %v3299
        %3849 = vst [vmem:[#allocation2 + $0x668] sm:$0xff] %v3301
        %3850 = vst.msk [vmem:[#allocation2 + $0x670] sm:$0xff] %vm3651, %v3613
        %3851 = vst [vmem:[#allocation2 + $0x678] sm:$0xff] %v2205
        %3852 = vst [vmem:[#allocation2 + $0x680] sm:$0xff] %v2207
        %3853 = vst [vmem:[#allocation2 + $0x688] sm:$0xff] %v2571
        %3854 = vst [vmem:[#allocation2 + $0x690] sm:$0xff] %v2573
        %3855 = vst [vmem:[#allocation2 + $0x698] sm:$0xff] %v2937
        %3856 = vst [vmem:[#allocation2 + $0x6a0] sm:$0xff] %v2939
        %3857 = vst [vmem:[#allocation2 + $0x6a8] sm:$0xff] %v3303
        %3858 = vst [vmem:[#allocation2 + $0x6b0] sm:$0xff] %v3305
        %3859 = vst.msk [vmem:[#allocation2 + $0x6b8] sm:$0xff] %vm3651, %v3616
        %3860 = vst [vmem:[#allocation2 + $0x6c0] sm:$0xff] %v2211
        %3861 = vst [vmem:[#allocation2 + $0x6c8] sm:$0xff] %v2213
        %3862 = vst [vmem:[#allocation2 + $0x6d0] sm:$0xff] %v2577
        %3863 = vst [vmem:[#allocation2 + $0x6d8] sm:$0xff] %v2579
        %3864 = vst [vmem:[#allocation2 + $0x6e0] sm:$0xff] %v2943
        %3865 = vst [vmem:[#allocation2 + $0x6e8] sm:$0xff] %v2945
        %3866 = vst [vmem:[#allocation2 + $0x6f0] sm:$0xff] %v3309
        %3867 = vst [vmem:[#allocation2 + $0x6f8] sm:$0xff] %v3311
        %3868 = vst.msk [vmem:[#allocation2 + $0x700] sm:$0xff] %vm3651, %v3621
        %3869 = vst [vmem:[#allocation2 + $0x708] sm:$0xff] %v2215
        %3870 = vst [vmem:[#allocation2 + $0x710] sm:$0xff] %v2217
        %3871 = vst [vmem:[#allocation2 + $0x718] sm:$0xff] %v2581
        %3872 = vst [vmem:[#allocation2 + $0x720] sm:$0xff] %v2583
        %3873 = vst [vmem:[#allocation2 + $0x728] sm:$0xff] %v2947
        %3874 = vst [vmem:[#allocation2 + $0x730] sm:$0xff] %v2949
        %3875 = vst [vmem:[#allocation2 + $0x738] sm:$0xff] %v3313
        %3876 = vst [vmem:[#allocation2 + $0x740] sm:$0xff] %v3315
        %3877 = vst.msk [vmem:[#allocation2 + $0x748] sm:$0xff] %vm3651, %v3624
        %3878 = vst [vmem:[#allocation2 + $0x750] sm:$0xff] %v2221
        %3879 = vst [vmem:[#allocation2 + $0x758] sm:$0xff] %v2223
        %3880 = vst [vmem:[#allocation2 + $0x760] sm:$0xff] %v2587
        %3881 = vst [vmem:[#allocation2 + $0x768] sm:$0xff] %v2589
        %3882 = vst [vmem:[#allocation2 + $0x770] sm:$0xff] %v2953
        %3883 = vst [vmem:[#allocation2 + $0x778] sm:$0xff] %v2955
        %3884 = vst [vmem:[#allocation2 + $0x780] sm:$0xff] %v3319
        %3885 = vst [vmem:[#allocation2 + $0x788] sm:$0xff] %v3321
        %3886 = vst.msk [vmem:[#allocation2 + $0x790] sm:$0xff] %vm3651, %v3629
        %3887 = vst [vmem:[#allocation2 + $0x798] sm:$0xff] %v2225
        %3888 = vst [vmem:[#allocation2 + $0x7a0] sm:$0xff] %v2227
        %3889 = vst [vmem:[#allocation2 + $0x7a8] sm:$0xff] %v2591
        %3890 = vst [vmem:[#allocation2 + $0x7b0] sm:$0xff] %v2593
        %3891 = vst [vmem:[#allocation2 + $0x7b8] sm:$0xff] %v2957
        %3892 = vst [vmem:[#allocation2 + $0x7c0] sm:$0xff] %v2959
        %3893 = vst [vmem:[#allocation2 + $0x7c8] sm:$0xff] %v3323
        %3894 = vst [vmem:[#allocation2 + $0x7d0] sm:$0xff] %v3325
        %3895 = vst.msk [vmem:[#allocation2 + $0x7d8] sm:$0xff] %vm3651, %v3632
        %3896 = vst [vmem:[#allocation2 + $0x7e0] sm:$0xff] %v2231
        %3897 = vst [vmem:[#allocation2 + $0x7e8] sm:$0xff] %v2233
        %3898 = vst [vmem:[#allocation2 + $0x7f0] sm:$0xff] %v2597
        %3899 = vst [vmem:[#allocation2 + $0x7f8] sm:$0xff] %v2599
        %3900 = vst [vmem:[#allocation2 + $0x800] sm:$0xff] %v2963
        %3901 = vst [vmem:[#allocation2 + $0x808] sm:$0xff] %v2965
        %3902 = vst [vmem:[#allocation2 + $0x810] sm:$0xff] %v3329
        %3903 = vst [vmem:[#allocation2 + $0x818] sm:$0xff] %v3331
        %3904 = vst.msk [vmem:[#allocation2 + $0x820] sm:$0xff] %vm3651, %v3637
        %3905 = vst [vmem:[#allocation2 + $0x828] sm:$0xff] %v2235
        %3906 = vst [vmem:[#allocation2 + $0x830] sm:$0xff] %v2237
        %3907 = vst [vmem:[#allocation2 + $0x838] sm:$0xff] %v2601
        %3908 = vst [vmem:[#allocation2 + $0x840] sm:$0xff] %v2603
        %3909 = vst [vmem:[#allocation2 + $0x848] sm:$0xff] %v2967
        %3910 = vst [vmem:[#allocation2 + $0x850] sm:$0xff] %v2969
        %3911 = vst [vmem:[#allocation2 + $0x858] sm:$0xff] %v3333
        %3912 = vst [vmem:[#allocation2 + $0x860] sm:$0xff] %v3335
        %3913 = vst.msk [vmem:[#allocation2 + $0x868] sm:$0xff] %vm3651, %v3640
        %v3914 = vld [vmem:[%s2] sm:$0xff]
        loop: start=0, step=1, limit=14
        $region41: #{model_forward.1} parent=39 // loop_pre_header
          _
        $region42: #{model_forward.1} parent=39 // loop_header
          %s3916 = sphi 0, %s3920
          %p3917 = scmp.ge.s32.totalorder %s3916, 14
          %v3921 = vphi 0.0, %v4360
        $region43: #{model_forward.1} parent=39 // loop_header_branch
          %3919 = sbr.rel (%p3917) target = $region47
        $region44: #{model_forward.1} parent=39 // loop_body
          %s3922 = smul.u32 %s3916, 16
          %s3923 = sadd.s32 %s3922, 8
          %s3924 = sadd.s32 %s3923, 8
          %s3925 = sshra.s32 %s3922, 3
          %s3926 = sand.u32 %s3922, 7
          %s3927 = smul.u32 %s3925, 9
          %s3928 = smul.addr %s3927, 8
          %s3929 = scalar_lea.vmem [#allocation2], %s3928
          %v3930 = vld [vmem:[%s3929] sm:$0xff]
          %v3931 = vld [vmem:[%s3929 + $0x8] sm:$0xff]
          %v3932 = vld [vmem:[%s3929 + $0x10] sm:$0xff]
          %v3933 = vld [vmem:[%s3929 + $0x18] sm:$0xff]
          %v3934 = vld [vmem:[%s3929 + $0x20] sm:$0xff]
          %v3935 = vld [vmem:[%s3929 + $0x28] sm:$0xff]
          %v3936 = vld [vmem:[%s3929 + $0x30] sm:$0xff]
          %v3937 = vld [vmem:[%s3929 + $0x38] sm:$0xff]
          %v3938 = vld [vmem:[%s3929 + $0x40] sm:$0xff]
          %s3939 = sshra.s32 %s3923, 3
          %s3940 = sand.u32 %s3923, 7
          %s3941 = smul.u32 %s3939, 9
          %s3942 = smul.addr %s3941, 8
          %s3943 = scalar_lea.vmem [#allocation2], %s3942
          %v3944 = vld [vmem:[%s3943] sm:$0xff]
          %v3945 = vld [vmem:[%s3943 + $0x8] sm:$0xff]
          %v3946 = vld [vmem:[%s3943 + $0x10] sm:$0xff]
          %v3947 = vld [vmem:[%s3943 + $0x18] sm:$0xff]
          %v3948 = vld [vmem:[%s3943 + $0x20] sm:$0xff]
          %v3949 = vld [vmem:[%s3943 + $0x28] sm:$0xff]
          %v3950 = vld [vmem:[%s3943 + $0x30] sm:$0xff]
          %v3951 = vld [vmem:[%s3943 + $0x38] sm:$0xff]
          %v3952 = vld [vmem:[%s3943 + $0x40] sm:$0xff]
          %v3953 = vmax.f32 %v3930, %v3944
          %v3954 = vmax.f32 %v3931, %v3945
          %v3955 = vmax.f32 %v3932, %v3946
          %v3956 = vmax.f32 %v3933, %v3947
          %v3957 = vmax.f32 %v3934, %v3948
          %v3958 = vmax.f32 %v3935, %v3949
          %v3959 = vmax.f32 %v3936, %v3950
          %v3960 = vmax.f32 %v3937, %v3951
          %v3961 = vmax.f32 %v3938, %v3952
          %s3962 = sshra.s32 %s3924, 3
          %s3963 = sand.u32 %s3924, 7
          %s3964 = smul.u32 %s3962, 9
          %s3965 = smul.addr %s3964, 8
          %s3966 = scalar_lea.vmem [#allocation2], %s3965
          %v3967 = vld [vmem:[%s3966] sm:$0xff]
          %v3968 = vld [vmem:[%s3966 + $0x8] sm:$0xff]
          %v3969 = vld [vmem:[%s3966 + $0x10] sm:$0xff]
          %v3970 = vld [vmem:[%s3966 + $0x18] sm:$0xff]
          %v3971 = vld [vmem:[%s3966 + $0x20] sm:$0xff]
          %v3972 = vld [vmem:[%s3966 + $0x28] sm:$0xff]
          %v3973 = vld [vmem:[%s3966 + $0x30] sm:$0xff]
          %v3974 = vld [vmem:[%s3966 + $0x38] sm:$0xff]
          %v3975 = vld [vmem:[%s3966 + $0x40] sm:$0xff]
          %v3976 = vmax.f32 %v3953, %v3967
          %v3977 = vmax.f32 %v3954, %v3968
          %v3978 = vmax.f32 %v3955, %v3969
          %v3979 = vmax.f32 %v3956, %v3970
          %v3980 = vmax.f32 %v3957, %v3971
          %v3981 = vmax.f32 %v3958, %v3972
          %v3982 = vmax.f32 %v3959, %v3973
          %v3983 = vmax.f32 %v3960, %v3974
          %v3984 = vmax.f32 %v3961, %v3975
          %3994 = vrot.lane.b32.xlu0 %v3976, 92
          %v3995 = vpop.permute.xlu0 %3994
          %3996 = vrot.lane.b32.xlu0 %v3977, 92
          %v3997 = vpop.permute.xlu0 %3996
          %3998 = vrot.lane.b32.xlu0 %v3978, 92
          %v3999 = vpop.permute.xlu0 %3998
          %4000 = vrot.lane.b32.xlu0 %v3979, 92
          %v4001 = vpop.permute.xlu0 %4000
          %4002 = vrot.lane.b32.xlu0 %v3980, 92
          %v4003 = vpop.permute.xlu0 %4002
          %4004 = vrot.lane.b32.xlu0 %v3981, 92
          %v4005 = vpop.permute.xlu0 %4004
          %4006 = vrot.lane.b32.xlu0 %v3982, 92
          %v4007 = vpop.permute.xlu0 %4006
          %4008 = vrot.lane.b32.xlu0 %v3983, 92
          %v4009 = vpop.permute.xlu0 %4008
          %4010 = vrot.lane.b32.xlu0 %v3984, 92
          %v4011 = vpop.permute.xlu0 %4010
          %vm4012 = vcmask 752640
          %v4013 = vsel %vm4012, %v3995, %v3997
          %v4014 = vsel %vm4012, %v3997, %v3999
          %v4015 = vsel %vm4012, %v3999, %v4001
          %v4016 = vsel %vm4012, %v4001, %v4003
          %v4017 = vsel %vm4012, %v4003, %v4005
          %v4018 = vsel %vm4012, %v4005, %v4007
          %v4019 = vsel %vm4012, %v4007, %v4009
          %v4020 = vsel %vm4012, %v4009, %v4011
          %v4029 = vmax.f32 %v3976, %v4013
          %v4030 = vmax.f32 %v3977, %v4014
          %v4031 = vmax.f32 %v3978, %v4015
          %v4032 = vmax.f32 %v3979, %v4016
          %v4033 = vmax.f32 %v3980, %v4017
          %v4034 = vmax.f32 %v3981, %v4018
          %v4035 = vmax.f32 %v3982, %v4019
          %v4036 = vmax.f32 %v3983, %v4020
          %4037 = vrot.lane.b32.xlu0 %v3976, 56
          %v4038 = vpop.permute.xlu0 %4037
          %4039 = vrot.lane.b32.xlu0 %v3977, 56
          %v4040 = vpop.permute.xlu0 %4039
          %4041 = vrot.lane.b32.xlu0 %v3978, 56
          %v4042 = vpop.permute.xlu0 %4041
          %4043 = vrot.lane.b32.xlu0 %v3979, 56
          %v4044 = vpop.permute.xlu0 %4043
          %4045 = vrot.lane.b32.xlu0 %v3980, 56
          %v4046 = vpop.permute.xlu0 %4045
          %4047 = vrot.lane.b32.xlu0 %v3981, 56
          %v4048 = vpop.permute.xlu0 %4047
          %4049 = vrot.lane.b32.xlu0 %v3982, 56
          %v4050 = vpop.permute.xlu0 %4049
          %4051 = vrot.lane.b32.xlu0 %v3983, 56
          %v4052 = vpop.permute.xlu0 %4051
          %4053 = vrot.lane.b32.xlu0 %v3984, 56
          %v4054 = vpop.permute.xlu0 %4053
          %v4055 = vsel %vm3651, %v4038, %v4040
          %v4056 = vsel %vm3651, %v4040, %v4042
          %v4057 = vsel %vm3651, %v4042, %v4044
          %v4058 = vsel %vm3651, %v4044, %v4046
          %v4059 = vsel %vm3651, %v4046, %v4048
          %v4060 = vsel %vm3651, %v4048, %v4050
          %v4061 = vsel %vm3651, %v4050, %v4052
          %v4062 = vsel %vm3651, %v4052, %v4054
          %v4071 = vmax.f32 %v4029, %v4055
          %v4072 = vmax.f32 %v4030, %v4056
          %v4073 = vmax.f32 %v4031, %v4057
          %v4074 = vmax.f32 %v4032, %v4058
          %v4075 = vmax.f32 %v4033, %v4059
          %v4076 = vmax.f32 %v4034, %v4060
          %v4077 = vmax.f32 %v4035, %v4061
          %v4078 = vmax.f32 %v4036, %v4062
          %v4080 = vlaneseq
          %v4081 = vshrl.u32 %v4080, 7
          %v4082 = vsub.s32 0, %v4081
          %v4083 = vrot.slane %v3914, %v4082
          %v4084 = vlaneseq
          %v4085 = vshrl.u32 %v4084, 7
          %v4086 = vsub.s32 1, %v4085
          %v4087 = vrot.slane %v3914, %v4086
          %v4088 = vlaneseq
          %v4089 = vshrl.u32 %v4088, 7
          %v4090 = vsub.s32 2, %v4089
          %v4091 = vrot.slane %v3914, %v4090
          %v4092 = vlaneseq
          %v4093 = vshrl.u32 %v4092, 7
          %v4094 = vsub.s32 3, %v4093
          %v4095 = vrot.slane %v3914, %v4094
          %v4096 = vlaneseq
          %v4097 = vshrl.u32 %v4096, 7
          %v4098 = vsub.s32 4, %v4097
          %v4099 = vrot.slane %v3914, %v4098
          %v4100 = vlaneseq
          %v4101 = vshrl.u32 %v4100, 7
          %v4102 = vsub.s32 5, %v4101
          %v4103 = vrot.slane %v3914, %v4102
          %v4104 = vlaneseq
          %v4105 = vshrl.u32 %v4104, 7
          %v4106 = vsub.s32 6, %v4105
          %v4107 = vrot.slane %v3914, %v4106
          %v4108 = vlaneseq
          %v4109 = vshrl.u32 %v4108, 7
          %v4110 = vsub.s32 7, %v4109
          %v4111 = vrot.slane %v3914, %v4110
          %v4120 = vadd.f32 %v4071, %v4083
          %v4121 = vadd.f32 %v4072, %v4087
          %v4122 = vadd.f32 %v4073, %v4091
          %v4123 = vadd.f32 %v4074, %v4095
          %v4124 = vadd.f32 %v4075, %v4099
          %v4125 = vadd.f32 %v4076, %v4103
          %v4126 = vadd.f32 %v4077, %v4107
          %v4127 = vadd.f32 %v4078, %v4111
          %v4128 = vmax.f32 %v4120, 0.0
          %v4129 = vmax.f32 %v4121, 0.0
          %v4130 = vmax.f32 %v4122, 0.0
          %v4131 = vmax.f32 %v4123, 0.0
          %v4132 = vmax.f32 %v4124, 0.0
          %v4133 = vmax.f32 %v4125, 0.0
          %v4134 = vmax.f32 %v4126, 0.0
          %v4135 = vmax.f32 %v4127, 0.0
          %v4136 = vpack.c.bf16 %v4128, %v4128
          %v4137 = vpack.c.bf16 %v4129, %v4129
          %v4138 = vpack.c.bf16 %v4130, %v4130
          %v4139 = vpack.c.bf16 %v4131, %v4131
          %v4140 = vpack.c.bf16 %v4132, %v4132
          %v4141 = vpack.c.bf16 %v4133, %v4133
          %v4142 = vpack.c.bf16 %v4134, %v4134
          %v4143 = vpack.c.bf16 %v4135, %v4135
          %s4144 = smul.addr %s3922, 4
          %s4145 = scalar_lea.vmem %s3, %s4144
          %v4146 = vld [vmem:[%s4145] sm:$0xff]
          %v4147 = vld [vmem:[%s4145 + $0x8] sm:$0xff]
          %v4148 = vld [vmem:[%s4145 + $0x10] sm:$0xff]
          %v4149 = vld [vmem:[%s4145 + $0x18] sm:$0xff]
          %v4150 = vld [vmem:[%s4145 + $0x20] sm:$0x11]
          %v4151 = vld [vmem:[%s4145 + $0x28] sm:$0x11]
          %v4152 = vld [vmem:[%s4145 + $0x30] sm:$0x11]
          %v4153 = vld [vmem:[%s4145 + $0x38] sm:$0x11]
          %v4162 = vunpack.c.l.b16 %v4146
          %v4163 = vunpack.c.h.b16 %v4146
          %v4164 = vunpack.c.l.b16 %v4147
          %v4165 = vunpack.c.h.b16 %v4147
          %v4166 = vunpack.c.l.b16 %v4148
          %v4167 = vunpack.c.h.b16 %v4148
          %v4168 = vunpack.c.l.b16 %v4149
          %v4169 = vunpack.c.h.b16 %v4149
          %v4170 = vunpack.c.l.b16 %v4150
          %v4171 = vunpack.c.h.b16 %v4150
          %v4172 = vunpack.c.l.b16 %v4151
          %v4173 = vunpack.c.h.b16 %v4151
          %v4174 = vunpack.c.l.b16 %v4152
          %v4175 = vunpack.c.h.b16 %v4152
          %v4176 = vunpack.c.l.b16 %v4153
          %v4177 = vunpack.c.h.b16 %v4153
          %v4178 = vpack.c.b16 %v4170, %v4162
          %v4179 = vpack.c.b16 %v4171, %v4163
          %v4180 = vpack.c.b16 %v4172, %v4164
          %v4181 = vpack.c.b16 %v4173, %v4165
          %v4182 = vpack.c.b16 %v4174, %v4166
          %v4183 = vpack.c.b16 %v4175, %v4167
          %v4184 = vpack.c.b16 %v4176, %v4168
          %v4185 = vpack.c.b16 %v4177, %v4169
          %vm4193 = vcmask 916480
          %v4195 = vsel %vm4193, %v4143, 0
          %v4198 = vsel %vm4193, %v4185, 0
          %4200 = vmatprep.subr.bf16.mxu0 %v4179
          %4201 = vmatpush1.bf16.xpose.msra.mxu0 %v4178
          %4202 = vmatprep.subr.bf16.mxu0 0
          %4203 = vmatpush1.bf16.xpose.msra.mxu0 0
          %4204 = vmatprep.subr.bf16.mxu0 0
          %4205 = vmatpush1.bf16.xpose.msra.mxu0 0
          %4206 = vmatprep.subr.bf16.mxu0 0
          %4207 = vmatpush1.bf16.xpose.msra.mxu0 0
          %4208 = vmatprep.subr.bf16.mxu0 0
          %4209 = vmatpush1.bf16.xpose.msra.mxu0 0
          %4210 = vmatprep.subr.bf16.mxu0 0
          %4211 = vmatpush1.bf16.xpose.msra.mxu0 0
          %4212 = vmatprep.subr.bf16.mxu0 0
          %4213 = vmatpush1.bf16.xpose.msra.mxu0 0
          %4214 = vmatprep.subr.bf16.mxu0 0
          %4215 = vmatpush1.bf16.xpose.msra.mxu0 0
          %4216 = vmatprep.subr.bf16.mxu0 0
          %4217 = vmatpush1.bf16.xpose.msra.mxu0 0
          %4218 = vmatprep.subr.bf16.mxu0 0
          %4219 = vmatpush1.bf16.xpose.msra.mxu0 0
          %4220 = vmatprep.subr.bf16.mxu0 0
          %4221 = vmatpush1.bf16.xpose.msra.mxu0 0
          %4222 = vmatprep.subr.bf16.mxu0 0
          %4223 = vmatpush1.bf16.xpose.msra.mxu0 0
          %4224 = vmatprep.subr.bf16.mxu0 0
          %4225 = vmatpush1.bf16.xpose.msra.mxu0 0
          %4226 = vmatprep.subr.bf16.mxu0 0
          %4227 = vmatpush1.bf16.xpose.msra.mxu0 0
          %4228 = vmatprep.subr.bf16.mxu0 0
          %4229 = vmatpush1.bf16.xpose.msra.mxu0 0
          %4230 = vmatprep.subr.bf16.mxu0 0
          %4231 = vmatpush1.bf16.xpose.msra.mxu0 0
          %4232 = vmatprep.mubr.bf16.mxu0 %v4137
          %4233 = vmatmul.mubr.bf16.gmra.mrb[0].mxu0 %v4136
          %v4234 = vpop.f32.mrb[0].mxu0
          %v4235 = vadd.f32 0.0, %v4234
          %v4236 = vpop.f32.mrb[0].mxu0
          %v4237 = vpop.f32.mrb[0].mxu0
          %v4238 = vpop.f32.mrb[0].mxu0
          %4239 = vdwg.mxu0
          %4240 = vmatprep.subr.bf16.mxu0 %v4181
          %4241 = vmatpush1.bf16.xpose.msra.mxu0 %v4180
          %4242 = vmatprep.subr.bf16.mxu0 0
          %4243 = vmatpush1.bf16.xpose.msra.mxu0 0
          %4244 = vmatprep.subr.bf16.mxu0 0
          %4245 = vmatpush1.bf16.xpose.msra.mxu0 0
          %4246 = vmatprep.subr.bf16.mxu0 0
          %4247 = vmatpush1.bf16.xpose.msra.mxu0 0
          %4248 = vmatprep.subr.bf16.mxu0 0
          %4249 = vmatpush1.bf16.xpose.msra.mxu0 0
          %4250 = vmatprep.subr.bf16.mxu0 0
          %4251 = vmatpush1.bf16.xpose.msra.mxu0 0
          %4252 = vmatprep.subr.bf16.mxu0 0
          %4253 = vmatpush1.bf16.xpose.msra.mxu0 0
          %4254 = vmatprep.subr.bf16.mxu0 0
          %4255 = vmatpush1.bf16.xpose.msra.mxu0 0
          %4256 = vmatprep.subr.bf16.mxu0 0
          %4257 = vmatpush1.bf16.xpose.msra.mxu0 0
          %4258 = vmatprep.subr.bf16.mxu0 0
          %4259 = vmatpush1.bf16.xpose.msra.mxu0 0
          %4260 = vmatprep.subr.bf16.mxu0 0
          %4261 = vmatpush1.bf16.xpose.msra.mxu0 0
          %4262 = vmatprep.subr.bf16.mxu0 0
          %4263 = vmatpush1.bf16.xpose.msra.mxu0 0
          %4264 = vmatprep.subr.bf16.mxu0 0
          %4265 = vmatpush1.bf16.xpose.msra.mxu0 0
          %4266 = vmatprep.subr.bf16.mxu0 0
          %4267 = vmatpush1.bf16.xpose.msra.mxu0 0
          %4268 = vmatprep.subr.bf16.mxu0 0
          %4269 = vmatpush1.bf16.xpose.msra.mxu0 0
          %4270 = vmatprep.subr.bf16.mxu0 0
          %4271 = vmatpush1.bf16.xpose.msra.mxu0 0
          %4272 = vmatprep.mubr.bf16.mxu0 %v4139
          %4273 = vmatmul.mubr.bf16.gmra.mrb[0].mxu0 %v4138
          %v4274 = vpop.f32.mrb[0].mxu0
          %v4275 = vadd.f32 %v4235, %v4274
          %v4276 = vpop.f32.mrb[0].mxu0
          %v4277 = vpop.f32.mrb[0].mxu0
          %v4278 = vpop.f32.mrb[0].mxu0
          %4279 = vdwg.mxu0
          %4280 = vmatprep.subr.bf16.mxu0 %v4183
          %4281 = vmatpush1.bf16.xpose.msra.mxu0 %v4182
          %4282 = vmatprep.subr.bf16.mxu0 0
          %4283 = vmatpush1.bf16.xpose.msra.mxu0 0
          %4284 = vmatprep.subr.bf16.mxu0 0
          %4285 = vmatpush1.bf16.xpose.msra.mxu0 0
          %4286 = vmatprep.subr.bf16.mxu0 0
          %4287 = vmatpush1.bf16.xpose.msra.mxu0 0
          %4288 = vmatprep.subr.bf16.mxu0 0
          %4289 = vmatpush1.bf16.xpose.msra.mxu0 0
          %4290 = vmatprep.subr.bf16.mxu0 0
          %4291 = vmatpush1.bf16.xpose.msra.mxu0 0
          %4292 = vmatprep.subr.bf16.mxu0 0
          %4293 = vmatpush1.bf16.xpose.msra.mxu0 0
          %4294 = vmatprep.subr.bf16.mxu0 0
          %4295 = vmatpush1.bf16.xpose.msra.mxu0 0
          %4296 = vmatprep.subr.bf16.mxu0 0
          %4297 = vmatpush1.bf16.xpose.msra.mxu0 0
          %4298 = vmatprep.subr.bf16.mxu0 0
          %4299 = vmatpush1.bf16.xpose.msra.mxu0 0
          %4300 = vmatprep.subr.bf16.mxu0 0
          %4301 = vmatpush1.bf16.xpose.msra.mxu0 0
          %4302 = vmatprep.subr.bf16.mxu0 0
          %4303 = vmatpush1.bf16.xpose.msra.mxu0 0
          %4304 = vmatprep.subr.bf16.mxu0 0
          %4305 = vmatpush1.bf16.xpose.msra.mxu0 0
          %4306 = vmatprep.subr.bf16.mxu0 0
          %4307 = vmatpush1.bf16.xpose.msra.mxu0 0
          %4308 = vmatprep.subr.bf16.mxu0 0
          %4309 = vmatpush1.bf16.xpose.msra.mxu0 0
          %4310 = vmatprep.subr.bf16.mxu0 0
          %4311 = vmatpush1.bf16.xpose.msra.mxu0 0
          %4312 = vmatprep.mubr.bf16.mxu0 %v4141
          %4313 = vmatmul.mubr.bf16.gmra.mrb[0].mxu0 %v4140
          %v4314 = vpop.f32.mrb[0].mxu0
          %v4315 = vadd.f32 %v4275, %v4314
          %v4316 = vpop.f32.mrb[0].mxu0
          %v4317 = vpop.f32.mrb[0].mxu0
          %v4318 = vpop.f32.mrb[0].mxu0
          %4319 = vdwg.mxu0
          %4320 = vmatprep.subr.bf16.mxu0 %v4198
          %4321 = vmatpush1.bf16.xpose.msra.mxu0 %v4184
          %4322 = vmatprep.subr.bf16.mxu0 0
          %4323 = vmatpush1.bf16.xpose.msra.mxu0 0
          %4324 = vmatprep.subr.bf16.mxu0 0
          %4325 = vmatpush1.bf16.xpose.msra.mxu0 0
          %4326 = vmatprep.subr.bf16.mxu0 0
          %4327 = vmatpush1.bf16.xpose.msra.mxu0 0
          %4328 = vmatprep.subr.bf16.mxu0 0
          %4329 = vmatpush1.bf16.xpose.msra.mxu0 0
          %4330 = vmatprep.subr.bf16.mxu0 0
          %4331 = vmatpush1.bf16.xpose.msra.mxu0 0
          %4332 = vmatprep.subr.bf16.mxu0 0
          %4333 = vmatpush1.bf16.xpose.msra.mxu0 0
          %4334 = vmatprep.subr.bf16.mxu0 0
          %4335 = vmatpush1.bf16.xpose.msra.mxu0 0
          %4336 = vmatprep.subr.bf16.mxu0 0
          %4337 = vmatpush1.bf16.xpose.msra.mxu0 0
          %4338 = vmatprep.subr.bf16.mxu0 0
          %4339 = vmatpush1.bf16.xpose.msra.mxu0 0
          %4340 = vmatprep.subr.bf16.mxu0 0
          %4341 = vmatpush1.bf16.xpose.msra.mxu0 0
          %4342 = vmatprep.subr.bf16.mxu0 0
          %4343 = vmatpush1.bf16.xpose.msra.mxu0 0
          %4344 = vmatprep.subr.bf16.mxu0 0
          %4345 = vmatpush1.bf16.xpose.msra.mxu0 0
          %4346 = vmatprep.subr.bf16.mxu0 0
          %4347 = vmatpush1.bf16.xpose.msra.mxu0 0
          %4348 = vmatprep.subr.bf16.mxu0 0
          %4349 = vmatpush1.bf16.xpose.msra.mxu0 0
          %4350 = vmatprep.subr.bf16.mxu0 0
          %4351 = vmatpush1.bf16.xpose.msra.mxu0 0
          %4352 = vmatprep.mubr.bf16.mxu0 %v4195
          %4353 = vmatmul.mubr.bf16.gmra.mrb[0].mxu0 %v4142
          %v4354 = vpop.f32.mrb[0].mxu0
          %v4355 = vadd.f32 %v4315, %v4354
          %v4356 = vpop.f32.mrb[0].mxu0
          %v4357 = vpop.f32.mrb[0].mxu0
          %v4358 = vpop.f32.mrb[0].mxu0
          %4359 = vdwg.mxu0
          %v4360 = vadd.f32 %v3921, %v4355
        $region45: #{model_forward.1} parent=39 // loop_footer
          %s3920 = sadd.s32 1, %s3916
        $region46: #{model_forward.1} parent=39 // loop_footer_branch
          %3915 = sbr.rel target = $region42
        $region47: #{model_forward.1} parent=39 // loop_exit
          _
        %v4361 = vld [vmem:[%s4] sm:$0x1]
        %v4363 = vlaneseq
        %v4364 = vshrl.u32 %v4363, 7
        %v4365 = vsub.s32 0, %v4364
        %v4366 = vrot.slane %v4361, %v4365
        %v4368 = vadd.f32 %v3921, %v4366
        %vm4369 = vcmask 80896
        %4370 = vst.msk [vmem:[%s220] sm:$0xff] %vm4369, %v4368
        %s4371 = sand.u32 %s137, 1
        %s4372 = scalar_lea.sflag [#allocation4], %s4371
        %s4373 = sand.u32 %s137, 1
        %s4374 = smul.addr %s4373, 8
        %s4375 = scalar_lea.vmem [#allocation3], %s4374
        // Predicated region
        $region48: #{model_forward.1} parent=39 // pred_check
          %p4376 = pneg %p147
        $region49: #{model_forward.1} parent=39 // pred_check_branch
          %4378 = sbr.rel (%p4376) target = $region51
        $region50: #{model_forward.1} parent=39 // pred_region
          %s4380 = ssub.s32 128, 128
          %4381 = vsyncadd %s4372, %s4380
          %s4382 = smul.addr %s19, 128
          %s4383 = scalar_lea.hbm %s5, %s4382
          %s4385 = sshll.u32 %s4375, 4
          %s4386 = int_to_ptr.vmem [resolvable:$true] %s4385
          %4388 = dma.vmem_to_hbm [thread:$0]  %s4386, 128, %s4383, %s4372
        $region51: #{model_forward.1} parent=39 // pred_fallthru
          _
      $region40: #{model_forward.1} parent=5 // pred_fallthru
        _
      %p4389 = scmp.le.s32.totalorder 2, %s14
      // Predicated region
      $region52: #{model_forward.1} parent=5 // pred_check
        %p4390 = pneg %p4389
      $region53: #{model_forward.1} parent=5 // pred_check_branch
        %4392 = sbr.rel (%p4390) target = $region55
      $region54: #{model_forward.1} parent=5 // pred_region
        %s4393 = ssub.s32 %s14, 2
        // Predicated region
        $region56: #{model_forward.1} parent=54 // pred_check
          %p4394 = pneg %p153
        $region57: #{model_forward.1} parent=54 // pred_check_branch
          %4396 = sbr.rel (%p4394) target = $region59
        $region58: #{model_forward.1} parent=54 // pred_region
          %s4397 = sand.u32 %s138, 1
          %s4398 = scalar_lea.sflag [#allocation4], %s4397
          %s4399 = sand.u32 %s138, 1
          %s4400 = smul.addr %s4399, 8
          %s4401 = scalar_lea.vmem [#allocation3], %s4400
          %4402 = dma.done %s4398, 128
        $region59: #{model_forward.1} parent=54 // pred_fallthru
          _
      $region55: #{model_forward.1} parent=5 // pred_fallthru
        _
    $region6: #{model_forward.1} parent=1 // loop_footer
      %s18 = sadd.s32 1, %s14
    $region7: #{model_forward.1} parent=1 // loop_footer_branch
      %13 = sbr.rel target = $region3
    $region8: #{model_forward.1} parent=1 // loop_exit
      _
    %4403 = vsyncpa [#allocation4], 1
    %s4404 = scalar_lea.sflag [#allocation4], 1
    %4405 = vsyncpa %s4404, 1

</llo_original>
